<compile_context>
chip_gen: v7x
topology: tpu7x:2x2x1
jax: 0.10.0
libtpu: 0.0.40
codegen_flags: <defaults>
</compile_context>

<pallas_src>
import math

import jax
import jax.numpy as jnp
from jax import lax
from jax.experimental import pallas as pl
from jax.experimental.pallas import tpu as pltpu


# ----------------------------- kernel helpers ------------------------------ #

def _layernorm(x, gamma, beta, eps=1e-5):
    mu = jnp.mean(x, axis=-1, keepdims=True)
    var = jnp.mean((x - mu) ** 2, axis=-1, keepdims=True)
    return (x - mu) * lax.rsqrt(var + eps) * gamma + beta


def _split_heads(x3, num_heads):
    """(Bt, T, D) bf16 -> (H*Bt, T, dh), batch index ordered head-major.

    Uses only static 16-lane slices, a stack along a new untiled leading dim
    and a major-dim merge -- no sublane relayouts, no minor-dim transposes."""
    Bt, T, D = x3.shape
    dh = D // num_heads
    heads = jnp.stack(
        [x3[:, :, h * dh:(h + 1) * dh] for h in range(num_heads)], axis=0)
    return heads.reshape(num_heads * Bt, T, dh)        # (H*Bt, T, dh)


def _attention(q, k, v, mask_add, resid, wo, bo, gamma, beta, *, H, Bt, Tq, Tk):
    """Scaled-dot-product attention + output projection + residual LayerNorm.

    q      : (Bt*Tq, D) f32   (bias already added)
    k, v   : (Bt*Tk, D) f32
    mask_add : (Bt, Tq, Tk) f32 additive mask (0 keep / -1e9 masked)
    resid  : (Bt*Tq, D) f32
    wo     : (D, D) bf16      bo/gamma/beta : (1, D) f32
    returns y (Bt*Tq, D) f32 and p (H, Bt, Tq, Tk) f32
    """
    D = q.shape[-1]
    dh = D // H

    qh = _split_heads(q.reshape(Bt, Tq, D).astype(jnp.bfloat16), H)   # (H*Bt,Tq,dh)
    kh = _split_heads(k.reshape(Bt, Tk, D).astype(jnp.bfloat16), H)   # (H*Bt,Tk,dh)
    vh = _split_heads(v.reshape(Bt, Tk, D).astype(jnp.bfloat16), H)   # (H*Bt,Tk,dh)

    # scores: batched 'bqd,bkd->bqk' over (head, batch) pairs
    s = lax.dot_general(qh, kh, (((2,), (2,)), ((0,), (0,))),
                        preferred_element_type=jnp.float32)           # (H*Bt,Tq,Tk)
    s = s.reshape(H, Bt, Tq, Tk) * (1.0 / math.sqrt(dh)) + mask_add[None]

    s = s - jnp.max(s, axis=-1, keepdims=True)
    e = jnp.exp(s)
    # Exact normalization: p is a returned output, must match the reference.
    p = e / jnp.sum(e, axis=-1, keepdims=True)                        # (H,Bt,Tq,Tk)

    # context: batched 'bqk,bkd->bqd'
    ctx = lax.dot_general(p.reshape(H * Bt, Tq, Tk).astype(jnp.bfloat16), vh,
                          (((2,), (1,)), ((0,), (0,))),
                          preferred_element_type=jnp.float32)         # (H*Bt,Tq,dh)

    # concat heads along lanes -> one lane-dense (M, D) @ (D, D) projection
    ctx = ctx.reshape(H, Bt, Tq, dh)
    ctx_cat = jnp.concatenate([ctx[h] for h in range(H)], axis=-1)    # (Bt,Tq,D)
    ctx_cat = ctx_cat.reshape(Bt * Tq, D).astype(jnp.bfloat16)
    out = jnp.dot(ctx_cat, wo, preferred_element_type=jnp.float32) + bo

    y = _layernorm(out + resid, gamma, beta)
    return y, p


# ----------------------------- fused kernel -------------------------------- #

def _make_kernel(H, Bt, Tq, Tk, D, F):
    Mq = Bt * Tq
    Mk = Bt * Tk

    def kernel(x_ref, mem_ref, tmask_ref, smask_ref,
               s_wqkv_ref, s_wo_ref, c_wq_ref, c_wkv_ref, c_wo_ref,
               f_w1_ref, f_w2_ref,
               s_bqkv_ref, c_bkv_ref, f_b1_ref, vecs_ref,
               out_ref, pself_ref, pst_ref):
        # ---- load activations, fold batch into the matmul M dimension ----
        x = x_ref[...].reshape(Mq, D)        # (Bt*Tq, D) f32
        mem = mem_ref[...].reshape(Mk, D)    # (Bt*Tk, D) f32

        # raw 0/1 bf16 masks -> additive f32 masks in one fused multiply-add
        tadd = (tmask_ref[...].astype(jnp.float32) - 1.0) * jnp.float32(1e9)
        sadd = (smask_ref[...].astype(jnp.float32) - 1.0) * jnp.float32(1e9)

        # ---- unpack the stacked (1, D)-wide bias / LayerNorm rows ----
        V = vecs_ref[...]                                    # (10, D) f32
        s_bo, s_g, s_be = V[0:1], V[1:2], V[2:3]
        c_bq, c_bo, c_g, c_be = V[3:4], V[4:5], V[5:6], V[6:7]
        f_b2, f_g, f_be = V[7:8], V[8:9], V[9:10]

        # ---- self attention: packed lane-dense QKV projection ----
        qkv = jnp.dot(x.astype(jnp.bfloat16), s_wqkv_ref[...],
                      preferred_element_type=jnp.float32) + s_bqkv_ref[...]
        y1, p_self = _attention(qkv[:, :D], qkv[:, D:2 * D], qkv[:, 2 * D:],
                                tadd, x, s_wo_ref[...], s_bo, s_g, s_be,
                                H=H, Bt=Bt, Tq=Tq, Tk=Tq)

        # ---- source-target (cross) attention ----
        q2 = jnp.dot(y1.astype(jnp.bfloat16), c_wq_ref[...],
                     preferred_element_type=jnp.float32) + c_bq
        kv2 = jnp.dot(mem.astype(jnp.bfloat16), c_wkv_ref[...],
                      preferred_element_type=jnp.float32) + c_bkv_ref[...]
        y2, p_st = _attention(q2, kv2[:, :D], kv2[:, D:],
                              sadd, y1, c_wo_ref[...], c_bo, c_g, c_be,
                              H=H, Bt=Bt, Tq=Tq, Tk=Tk)

        # ---- feed-forward (lane-dense (M,D)@(D,F) and (M,F)@(F,D)) ----
        h1 = jnp.dot(y2.astype(jnp.bfloat16), f_w1_ref[...],
                     preferred_element_type=jnp.float32) + f_b1_ref[...]
        h1 = jnp.maximum(h1, 0.0)
        y3 = jnp.dot(h1.astype(jnp.bfloat16), f_w2_ref[...],
                     preferred_element_type=jnp.float32) + f_b2
        y3 = _layernorm(y3 + y2, f_g, f_be)

        # ---- stores (single full-tile stores; probs written directly in
        #      (Bt, H, Tq, Tk) layout, no extra HBM transpose pass) ----
        out_ref[...] = y3.reshape(Bt, Tq, D)
        pself_ref[...] = jnp.stack([p_self[h] for h in range(H)], axis=1)
        pst_ref[...] = jnp.stack([p_st[h] for h in range(H)], axis=1)

    return kernel


# ----------------------------- wrapper -------------------------------------- #

def _pick_batch_tile(B, Tq, target_rows=256):
    """Largest divisor Bt of B with Bt*Tq <= target_rows (MXU row occupancy);
    at large B prefer leaving the grid length even so v7x's two TCs split it."""
    bt = 1
    for cand in range(1, B + 1):
        if B % cand == 0 and cand * Tq <= target_rows:
            bt = cand
    return bt


def decoder_layer_forward(x, mem, source_mask, target_mask, params):
    """x: (B, Tq, D) f32; mem: (B, Tk, D) f32; masks: (B, Tq, Tq)/(B, Tq, Tk)
    with 1 = attend, 0 = masked.  Returns (out, dec_self_attn, dec_st_attn)."""
    B, Tq, D = x.shape
    Tk = mem.shape[1]
    H = params["num_heads"]
    F = params["ffn"]["w1"].shape[1]
    assert D % H == 0

    Bt = _pick_batch_tile(B, Tq)
    grid = (B // Bt,)

    sa, ca, fp = params["self_attn"], params["st_attn"], params["ffn"]
    bf16 = jnp.bfloat16
    f32 = jnp.float32

    # ---- packed weights (bf16 MXU operands) ----
    s_wqkv = jnp.concatenate([sa["wq"], sa["wk"], sa["wv"]], axis=1).astype(bf16)
    s_wo = sa["wo"].astype(bf16)
    c_wq = ca["wq"].astype(bf16)
    c_wkv = jnp.concatenate([ca["wk"], ca["wv"]], axis=1).astype(bf16)
    c_wo = ca["wo"].astype(bf16)
    f_w1 = fp["w1"].astype(bf16)
    f_w2 = fp["w2"].astype(bf16)

    # ---- packed biases / LayerNorm params ----
    s_bqkv = jnp.concatenate([sa["bq"], sa["bk"], sa["bv"]], axis=1).astype(f32)
    c_bkv = jnp.concatenate([ca["bk"], ca["bv"]], axis=1).astype(f32)
    f_b1 = fp["b1"].astype(f32)
    # row map: [s_bo, s_g, s_be, c_bq, c_bo, c_g, c_be, f_b2, f_g, f_be]
    vecs = jnp.concatenate([sa["bo"], sa["gamma"], sa["beta"],
                            ca["bq"], ca["bo"], ca["gamma"], ca["beta"],
                            fp["b2"], fp["gamma"], fp["beta"]], axis=0).astype(f32)

    # raw 0/1 masks in bf16 (half the HBM bytes); additive form built in-kernel
    tmask = target_mask.astype(bf16)
    smask = source_mask.astype(bf16)

    # ---- block specs ----
    def act3(t, d):
        return pl.BlockSpec((Bt, t, d), lambda b: (b, 0, 0))

    def const2(shape):
        return pl.BlockSpec(shape, lambda b: (0, 0))

    in_specs = [
        act3(Tq, D), act3(Tk, D), act3(Tq, Tq), act3(Tq, Tk),
        const2((D, 3 * D)), const2((D, D)),            # s_wqkv, s_wo
        const2((D, D)), const2((D, 2 * D)), const2((D, D)),   # c_wq, c_wkv, c_wo
        const2((D, F)), const2((F, D)),                # f_w1, f_w2
        const2((1, 3 * D)), const2((1, 2 * D)), const2((1, F)),  # s_bqkv, c_bkv, f_b1
        const2((10, D)),                               # packed (1,D) vectors
    ]
    out_specs = (
        pl.BlockSpec((Bt, Tq, D), lambda b: (b, 0, 0)),
        pl.BlockSpec((Bt, H, Tq, Tq), lambda b: (b, 0, 0, 0)),
        pl.BlockSpec((Bt, H, Tq, Tk), lambda b: (b, 0, 0, 0)),
    )
    out_shape = (
        jax.ShapeDtypeStruct((B, Tq, D), f32),
        jax.ShapeDtypeStruct((B, H, Tq, Tq), f32),
        jax.ShapeDtypeStruct((B, H, Tq, Tk), f32),
    )

    # ---- VMEM budget: computed from the real footprint, not "all of it" ----
    weight_bytes = sum(a.size * a.dtype.itemsize for a in
                       (s_wqkv, s_wo, c_wq, c_wkv, c_wo, f_w1, f_w2,
                        s_bqkv, c_bkv, f_b1, vecs))
    block_io_bytes = (Bt * Tq * D * 4 + Bt * Tk * D * 4           # x, mem
                      + Bt * Tq * Tq * 2 + Bt * Tq * Tk * 2       # masks (bf16)
                      + Bt * Tq * D * 4                            # out
                      + Bt * H * Tq * Tq * 4 + Bt * H * Tq * Tk * 4)  # attn probs
    scratch_bytes = (Bt * Tq * 3 * D + Bt * Tk * 2 * D
                     + 3 * H * Bt * Tq * max(Tq, Tk) + Bt * Tq * F) * 4
    vmem_limit = int(min(2 * block_io_bytes + 2 * weight_bytes
                         + 2 * scratch_bytes + (8 << 20), 48 << 20))
    vmem_limit = max(vmem_limit, 16 << 20)

    kernel = _make_kernel(H, Bt, Tq, Tk, D, F)
    out, p_self, p_st = pl.pallas_call(
        kernel,
        out_shape=out_shape,
        grid=grid,
        in_specs=in_specs,
        out_specs=out_specs,
        compiler_params=pltpu.CompilerParams(
            dimension_semantics=("parallel",),     # v7x: two TCs split the batch
            vmem_limit_bytes=vmem_limit),
    )(x.astype(f32), mem.astype(f32), tmask, smask,
      s_wqkv, s_wo, c_wq, c_wkv, c_wo, f_w1, f_w2,
      s_bqkv, c_bkv, f_b1, vecs)
    return out, p_self, p_st


# ----------------------------- parameters ----------------------------------- #

def init_params(key, model_dim, num_heads, ff_dim):
    def dense(k, din, dout):
        k1, k2 = jax.random.split(k)
        w = jax.random.normal(k1, (din, dout), jnp.float32) / math.sqrt(din)
        b = 0.01 * jax.random.normal(k2, (1, dout), jnp.float32)
        return w, b

    def attn_params(k):
        ks = jax.random.split(k, 4)
        wq, bq = dense(ks[0], model_dim, model_dim)
        wk, bk = dense(ks[1], model_dim, model_dim)
        wv, bv = dense(ks[2], model_dim, model_dim)
        wo, bo = dense(ks[3], model_dim, model_dim)
        return dict(wq=wq, bq=bq, wk=wk, bk=bk, wv=wv, bv=bv, wo=wo, bo=bo,
                    gamma=jnp.ones((1, model_dim), jnp.float32),
                    beta=jnp.zeros((1, model_dim), jnp.float32))

    def ffn_params(k):
        k1, k2 = jax.random.split(k)
        w1, b1 = dense(k1, model_dim, ff_dim)
        w2, b2 = dense(k2, ff_dim, model_dim)
        return dict(w1=w1, b1=b1, w2=w2, b2=b2,
                    gamma=jnp.ones((1, model_dim), jnp.float32),
                    beta=jnp.zeros((1, model_dim), jnp.float32))

    ka, kb, kc = jax.random.split(key, 3)
    return dict(self_attn=attn_params(ka),
                st_attn=attn_params(kb),
                ffn=ffn_params(kc),
                num_heads=num_heads)


# ----------------------------- main ------------------------------------------ #

if __name__ == "__main__":
    key = jax.random.PRNGKey(0)
    B, Tq, Tk = 2, 8, 16          # batch, target seq, source (memory) seq
    D, H, F = 128, 8, 256         # model_dim (lane-dense), heads, ff_dim

    kx, km, kp = jax.random.split(key, 3)
    x = jax.random.normal(kx, (B, Tq, D), jnp.float32)
    mem = jax.random.normal(km, (B, Tk, D), jnp.float32)

    # masks: 1 = attend, 0 = masked
    source_mask = jnp.ones((B, Tq, Tk), jnp.float32)
    target_mask = jnp.tril(jnp.ones((Tq, Tq), jnp.float32))[None].repeat(B, axis=0)

    params = init_params(kp, D, H, F)

    out, dec_self_attn, dec_st_attn = decoder_layer_forward(
        x, mem, source_mask, target_mask, params)
    out, dec_self_attn, dec_st_attn = jax.block_until_ready(
        (out, dec_self_attn, dec_st_attn))

    assert out.shape == (B, Tq, D) and out.dtype == jnp.float32
    assert dec_self_attn.shape == (B, H, Tq, Tq)
    assert dec_st_attn.shape == (B, H, Tq, Tk)
    assert bool(jnp.all(jnp.isfinite(out)))
    assert bool(jnp.all(jnp.isfinite(dec_self_attn)))
    assert bool(jnp.all(jnp.isfinite(dec_st_attn)))
    # attention probabilities are exactly normalized (exact division in-kernel)
    assert bool(jnp.allclose(dec_self_attn.sum(-1), 1.0, atol=1e-3))
    assert bool(jnp.allclose(dec_st_attn.sum(-1), 1.0, atol=1e-3))
    print("KERNEL_OK")
</pallas_src>

<mosaic_0001>
module attributes {stable_mosaic.version = 11 : i64} {
  func.func @kernel(%arg0: i32, %arg1: memref<2x8x128xf32, #tpu.memory_space<vmem>>, %arg2: memref<2x16x128xf32, #tpu.memory_space<vmem>>, %arg3: memref<2x8x8xbf16, #tpu.memory_space<vmem>>, %arg4: memref<2x8x16xbf16, #tpu.memory_space<vmem>>, %arg5: memref<128x384xbf16, #tpu.memory_space<vmem>>, %arg6: memref<128x128xbf16, #tpu.memory_space<vmem>>, %arg7: memref<128x128xbf16, #tpu.memory_space<vmem>>, %arg8: memref<128x256xbf16, #tpu.memory_space<vmem>>, %arg9: memref<128x128xbf16, #tpu.memory_space<vmem>>, %arg10: memref<128x256xbf16, #tpu.memory_space<vmem>>, %arg11: memref<256x128xbf16, #tpu.memory_space<vmem>>, %arg12: memref<1x384xf32, #tpu.memory_space<vmem>>, %arg13: memref<1x256xf32, #tpu.memory_space<vmem>>, %arg14: memref<1x256xf32, #tpu.memory_space<vmem>>, %arg15: memref<10x128xf32, #tpu.memory_space<vmem>>, %arg16: memref<2x8x128xf32, #tpu.memory_space<vmem>>, %arg17: memref<2x8x8x8xf32, #tpu.memory_space<vmem>>, %arg18: memref<2x8x8x16xf32, #tpu.memory_space<vmem>>) attributes {dimension_semantics = [#tpu.dimension_semantics<parallel>], iteration_bounds = array<i64: 1>, scalar_prefetch = 0 : i64, scratch_operands = 0 : i64, tpu.core_type = #tpu.core_type<tc>, window_params = [{transform_indices = @transform_0, window_bounds = array<i64: 2, 8, 128>}, {transform_indices = @transform_1, window_bounds = array<i64: 2, 16, 128>}, {transform_indices = @transform_2, window_bounds = array<i64: 2, 8, 8>}, {transform_indices = @transform_3, window_bounds = array<i64: 2, 8, 16>}, {pipeline_mode = #tpu.pipeline_mode<synchronous>, transform_indices = @transform_4, window_bounds = array<i64: 128, 384>}, {pipeline_mode = #tpu.pipeline_mode<synchronous>, transform_indices = @transform_5, window_bounds = array<i64: 128, 128>}, {pipeline_mode = #tpu.pipeline_mode<synchronous>, transform_indices = @transform_6, window_bounds = array<i64: 128, 128>}, {pipeline_mode = #tpu.pipeline_mode<synchronous>, transform_indices = @transform_7, window_bounds = array<i64: 128, 256>}, {pipeline_mode = #tpu.pipeline_mode<synchronous>, transform_indices = @transform_8, window_bounds = array<i64: 128, 128>}, {pipeline_mode = #tpu.pipeline_mode<synchronous>, transform_indices = @transform_9, window_bounds = array<i64: 128, 256>}, {pipeline_mode = #tpu.pipeline_mode<synchronous>, transform_indices = @transform_10, window_bounds = array<i64: 256, 128>}, {pipeline_mode = #tpu.pipeline_mode<synchronous>, transform_indices = @transform_11, window_bounds = array<i64: 1, 384>}, {pipeline_mode = #tpu.pipeline_mode<synchronous>, transform_indices = @transform_12, window_bounds = array<i64: 1, 256>}, {pipeline_mode = #tpu.pipeline_mode<synchronous>, transform_indices = @transform_13, window_bounds = array<i64: 1, 256>}, {pipeline_mode = #tpu.pipeline_mode<synchronous>, transform_indices = @transform_14, window_bounds = array<i64: 10, 128>}, {transform_indices = @transform_15, window_bounds = array<i64: 2, 8, 128>}, {transform_indices = @transform_16, window_bounds = array<i64: 2, 8, 8, 8>}, {transform_indices = @transform_17, window_bounds = array<i64: 2, 8, 8, 16>}]} {
    %c0 = arith.constant 0 : index
    %c0_0 = arith.constant 0 : index
    %c0_1 = arith.constant 0 : index
    %0 = vector.load %arg1[%c0, %c0_0, %c0_1] : memref<2x8x128xf32, #tpu.memory_space<vmem>>, vector<2x8x128xf32>
    %1 = vector.shape_cast %0 : vector<2x8x128xf32> to vector<16x128xf32>
    %c0_2 = arith.constant 0 : index
    %c0_3 = arith.constant 0 : index
    %c0_4 = arith.constant 0 : index
    %2 = vector.load %arg2[%c0_2, %c0_3, %c0_4] : memref<2x16x128xf32, #tpu.memory_space<vmem>>, vector<2x16x128xf32>
    %3 = vector.shape_cast %2 : vector<2x16x128xf32> to vector<32x128xf32>
    %c0_5 = arith.constant 0 : index
    %c0_6 = arith.constant 0 : index
    %c0_7 = arith.constant 0 : index
    %4 = vector.load %arg3[%c0_5, %c0_6, %c0_7] : memref<2x8x8xbf16, #tpu.memory_space<vmem>>, vector<2x8x8xbf16>
    %5 = arith.extf %4 : vector<2x8x8xbf16> to vector<2x8x8xf32>
    %cst = arith.constant 1.000000e+00 : f32
    %6 = vector.broadcast %cst : f32 to vector<2x8x8xf32>
    %7 = arith.subf %5, %6 : vector<2x8x8xf32>
    %cst_8 = arith.constant 1.000000e+09 : f32
    %8 = vector.broadcast %cst_8 : f32 to vector<2x8x8xf32>
    %9 = arith.mulf %7, %8 : vector<2x8x8xf32>
    %c0_9 = arith.constant 0 : index
    %c0_10 = arith.constant 0 : index
    %c0_11 = arith.constant 0 : index
    %10 = vector.load %arg4[%c0_9, %c0_10, %c0_11] : memref<2x8x16xbf16, #tpu.memory_space<vmem>>, vector<2x8x16xbf16>
    %11 = arith.extf %10 : vector<2x8x16xbf16> to vector<2x8x16xf32>
    %cst_12 = arith.constant 1.000000e+00 : f32
    %12 = vector.broadcast %cst_12 : f32 to vector<2x8x16xf32>
    %13 = arith.subf %11, %12 : vector<2x8x16xf32>
    %cst_13 = arith.constant 1.000000e+09 : f32
    %14 = vector.broadcast %cst_13 : f32 to vector<2x8x16xf32>
    %15 = arith.mulf %13, %14 : vector<2x8x16xf32>
    %c0_14 = arith.constant 0 : index
    %c0_15 = arith.constant 0 : index
    %16 = vector.load %arg15[%c0_14, %c0_15] : memref<10x128xf32, #tpu.memory_space<vmem>>, vector<10x128xf32>
    %17 = vector.extract_strided_slice %16 {offsets = [0, 0], sizes = [1, 128], strides = [1, 1]} : vector<10x128xf32> to vector<1x128xf32>
    %18 = vector.extract_strided_slice %16 {offsets = [1, 0], sizes = [1, 128], strides = [1, 1]} : vector<10x128xf32> to vector<1x128xf32>
    %19 = vector.extract_strided_slice %16 {offsets = [2, 0], sizes = [1, 128], strides = [1, 1]} : vector<10x128xf32> to vector<1x128xf32>
    %20 = vector.extract_strided_slice %16 {offsets = [3, 0], sizes = [1, 128], strides = [1, 1]} : vector<10x128xf32> to vector<1x128xf32>
    %21 = vector.extract_strided_slice %16 {offsets = [4, 0], sizes = [1, 128], strides = [1, 1]} : vector<10x128xf32> to vector<1x128xf32>
    %22 = vector.extract_strided_slice %16 {offsets = [5, 0], sizes = [1, 128], strides = [1, 1]} : vector<10x128xf32> to vector<1x128xf32>
    %23 = vector.extract_strided_slice %16 {offsets = [6, 0], sizes = [1, 128], strides = [1, 1]} : vector<10x128xf32> to vector<1x128xf32>
    %24 = vector.extract_strided_slice %16 {offsets = [7, 0], sizes = [1, 128], strides = [1, 1]} : vector<10x128xf32> to vector<1x128xf32>
    %25 = vector.extract_strided_slice %16 {offsets = [8, 0], sizes = [1, 128], strides = [1, 1]} : vector<10x128xf32> to vector<1x128xf32>
    %26 = vector.extract_strided_slice %16 {offsets = [9, 0], sizes = [1, 128], strides = [1, 1]} : vector<10x128xf32> to vector<1x128xf32>
    %27 = arith.truncf %1 : vector<16x128xf32> to vector<16x128xbf16>
    %c0_16 = arith.constant 0 : index
    %c0_17 = arith.constant 0 : index
    %28 = vector.load %arg5[%c0_16, %c0_17] : memref<128x384xbf16, #tpu.memory_space<vmem>>, vector<128x384xbf16>
    %cst_18 = arith.constant dense<0.000000e+00> : vector<16x384xf32>
    %29 = tpu.matmul %27, %28, %cst_18 {dimension_numbers = #tpu.dot_dimension_numbers<[1], [0], [0], [1], [0, 0, 1, 1], [], []>} : vector<16x128xbf16>, vector<128x384xbf16>, vector<16x384xf32> -> vector<16x384xf32>
    %c0_19 = arith.constant 0 : index
    %c0_20 = arith.constant 0 : index
    %30 = vector.load %arg12[%c0_19, %c0_20] : memref<1x384xf32, #tpu.memory_space<vmem>>, vector<1x384xf32>
    %31 = vector.broadcast %30 : vector<1x384xf32> to vector<16x384xf32>
    %32 = arith.addf %29, %31 : vector<16x384xf32>
    %33 = vector.extract_strided_slice %32 {offsets = [0, 0], sizes = [16, 128], strides = [1, 1]} : vector<16x384xf32> to vector<16x128xf32>
    %34 = vector.extract_strided_slice %32 {offsets = [0, 128], sizes = [16, 128], strides = [1, 1]} : vector<16x384xf32> to vector<16x128xf32>
    %35 = vector.extract_strided_slice %32 {offsets = [0, 256], sizes = [16, 128], strides = [1, 1]} : vector<16x384xf32> to vector<16x128xf32>
    %c0_21 = arith.constant 0 : index
    %c0_22 = arith.constant 0 : index
    %36 = vector.load %arg6[%c0_21, %c0_22] : memref<128x128xbf16, #tpu.memory_space<vmem>>, vector<128x128xbf16>
    %37 = vector.shape_cast %33 : vector<16x128xf32> to vector<2x8x128xf32>
    %38 = arith.truncf %37 : vector<2x8x128xf32> to vector<2x8x128xbf16>
    %39 = vector.extract_strided_slice %38 {offsets = [0, 0, 0], sizes = [2, 8, 16], strides = [1, 1, 1]} : vector<2x8x128xbf16> to vector<2x8x16xbf16>
    %40 = vector.extract_strided_slice %38 {offsets = [0, 0, 16], sizes = [2, 8, 16], strides = [1, 1, 1]} : vector<2x8x128xbf16> to vector<2x8x16xbf16>
    %41 = vector.extract_strided_slice %38 {offsets = [0, 0, 32], sizes = [2, 8, 16], strides = [1, 1, 1]} : vector<2x8x128xbf16> to vector<2x8x16xbf16>
    %42 = vector.extract_strided_slice %38 {offsets = [0, 0, 48], sizes = [2, 8, 16], strides = [1, 1, 1]} : vector<2x8x128xbf16> to vector<2x8x16xbf16>
    %43 = vector.extract_strided_slice %38 {offsets = [0, 0, 64], sizes = [2, 8, 16], strides = [1, 1, 1]} : vector<2x8x128xbf16> to vector<2x8x16xbf16>
    %44 = vector.extract_strided_slice %38 {offsets = [0, 0, 80], sizes = [2, 8, 16], strides = [1, 1, 1]} : vector<2x8x128xbf16> to vector<2x8x16xbf16>
    %45 = vector.extract_strided_slice %38 {offsets = [0, 0, 96], sizes = [2, 8, 16], strides = [1, 1, 1]} : vector<2x8x128xbf16> to vector<2x8x16xbf16>
    %46 = vector.extract_strided_slice %38 {offsets = [0, 0, 112], sizes = [2, 8, 16], strides = [1, 1, 1]} : vector<2x8x128xbf16> to vector<2x8x16xbf16>
    %47 = vector.shape_cast %39 : vector<2x8x16xbf16> to vector<1x2x8x16xbf16>
    %48 = vector.shape_cast %40 : vector<2x8x16xbf16> to vector<1x2x8x16xbf16>
    %49 = vector.shape_cast %41 : vector<2x8x16xbf16> to vector<1x2x8x16xbf16>
    %50 = vector.shape_cast %42 : vector<2x8x16xbf16> to vector<1x2x8x16xbf16>
    %51 = vector.shape_cast %43 : vector<2x8x16xbf16> to vector<1x2x8x16xbf16>
    %52 = vector.shape_cast %44 : vector<2x8x16xbf16> to vector<1x2x8x16xbf16>
    %53 = vector.shape_cast %45 : vector<2x8x16xbf16> to vector<1x2x8x16xbf16>
    %54 = vector.shape_cast %46 : vector<2x8x16xbf16> to vector<1x2x8x16xbf16>
    %55 = tpu.concatenate %47, %48, %49, %50, %51, %52, %53, %54 in 0 : vector<1x2x8x16xbf16>, vector<1x2x8x16xbf16>, vector<1x2x8x16xbf16>, vector<1x2x8x16xbf16>, vector<1x2x8x16xbf16>, vector<1x2x8x16xbf16>, vector<1x2x8x16xbf16>, vector<1x2x8x16xbf16> -> vector<8x2x8x16xbf16>
    %56 = vector.shape_cast %55 : vector<8x2x8x16xbf16> to vector<16x8x16xbf16>
    %57 = vector.shape_cast %34 : vector<16x128xf32> to vector<2x8x128xf32>
    %58 = arith.truncf %57 : vector<2x8x128xf32> to vector<2x8x128xbf16>
    %59 = vector.extract_strided_slice %58 {offsets = [0, 0, 0], sizes = [2, 8, 16], strides = [1, 1, 1]} : vector<2x8x128xbf16> to vector<2x8x16xbf16>
    %60 = vector.extract_strided_slice %58 {offsets = [0, 0, 16], sizes = [2, 8, 16], strides = [1, 1, 1]} : vector<2x8x128xbf16> to vector<2x8x16xbf16>
    %61 = vector.extract_strided_slice %58 {offsets = [0, 0, 32], sizes = [2, 8, 16], strides = [1, 1, 1]} : vector<2x8x128xbf16> to vector<2x8x16xbf16>
    %62 = vector.extract_strided_slice %58 {offsets = [0, 0, 48], sizes = [2, 8, 16], strides = [1, 1, 1]} : vector<2x8x128xbf16> to vector<2x8x16xbf16>
    %63 = vector.extract_strided_slice %58 {offsets = [0, 0, 64], sizes = [2, 8, 16], strides = [1, 1, 1]} : vector<2x8x128xbf16> to vector<2x8x16xbf16>
    %64 = vector.extract_strided_slice %58 {offsets = [0, 0, 80], sizes = [2, 8, 16], strides = [1, 1, 1]} : vector<2x8x128xbf16> to vector<2x8x16xbf16>
    %65 = vector.extract_strided_slice %58 {offsets = [0, 0, 96], sizes = [2, 8, 16], strides = [1, 1, 1]} : vector<2x8x128xbf16> to vector<2x8x16xbf16>
    %66 = vector.extract_strided_slice %58 {offsets = [0, 0, 112], sizes = [2, 8, 16], strides = [1, 1, 1]} : vector<2x8x128xbf16> to vector<2x8x16xbf16>
    %67 = vector.shape_cast %59 : vector<2x8x16xbf16> to vector<1x2x8x16xbf16>
    %68 = vector.shape_cast %60 : vector<2x8x16xbf16> to vector<1x2x8x16xbf16>
    %69 = vector.shape_cast %61 : vector<2x8x16xbf16> to vector<1x2x8x16xbf16>
    %70 = vector.shape_cast %62 : vector<2x8x16xbf16> to vector<1x2x8x16xbf16>
    %71 = vector.shape_cast %63 : vector<2x8x16xbf16> to vector<1x2x8x16xbf16>
    %72 = vector.shape_cast %64 : vector<2x8x16xbf16> to vector<1x2x8x16xbf16>
    %73 = vector.shape_cast %65 : vector<2x8x16xbf16> to vector<1x2x8x16xbf16>
    %74 = vector.shape_cast %66 : vector<2x8x16xbf16> to vector<1x2x8x16xbf16>
    %75 = tpu.concatenate %67, %68, %69, %70, %71, %72, %73, %74 in 0 : vector<1x2x8x16xbf16>, vector<1x2x8x16xbf16>, vector<1x2x8x16xbf16>, vector<1x2x8x16xbf16>, vector<1x2x8x16xbf16>, vector<1x2x8x16xbf16>, vector<1x2x8x16xbf16>, vector<1x2x8x16xbf16> -> vector<8x2x8x16xbf16>
    %76 = vector.shape_cast %75 : vector<8x2x8x16xbf16> to vector<16x8x16xbf16>
    %77 = vector.shape_cast %35 : vector<16x128xf32> to vector<2x8x128xf32>
    %78 = arith.truncf %77 : vector<2x8x128xf32> to vector<2x8x128xbf16>
    %79 = vector.extract_strided_slice %78 {offsets = [0, 0, 0], sizes = [2, 8, 16], strides = [1, 1, 1]} : vector<2x8x128xbf16> to vector<2x8x16xbf16>
    %80 = vector.extract_strided_slice %78 {offsets = [0, 0, 16], sizes = [2, 8, 16], strides = [1, 1, 1]} : vector<2x8x128xbf16> to vector<2x8x16xbf16>
    %81 = vector.extract_strided_slice %78 {offsets = [0, 0, 32], sizes = [2, 8, 16], strides = [1, 1, 1]} : vector<2x8x128xbf16> to vector<2x8x16xbf16>
    %82 = vector.extract_strided_slice %78 {offsets = [0, 0, 48], sizes = [2, 8, 16], strides = [1, 1, 1]} : vector<2x8x128xbf16> to vector<2x8x16xbf16>
    %83 = vector.extract_strided_slice %78 {offsets = [0, 0, 64], sizes = [2, 8, 16], strides = [1, 1, 1]} : vector<2x8x128xbf16> to vector<2x8x16xbf16>
    %84 = vector.extract_strided_slice %78 {offsets = [0, 0, 80], sizes = [2, 8, 16], strides = [1, 1, 1]} : vector<2x8x128xbf16> to vector<2x8x16xbf16>
    %85 = vector.extract_strided_slice %78 {offsets = [0, 0, 96], sizes = [2, 8, 16], strides = [1, 1, 1]} : vector<2x8x128xbf16> to vector<2x8x16xbf16>
    %86 = vector.extract_strided_slice %78 {offsets = [0, 0, 112], sizes = [2, 8, 16], strides = [1, 1, 1]} : vector<2x8x128xbf16> to vector<2x8x16xbf16>
    %87 = vector.shape_cast %79 : vector<2x8x16xbf16> to vector<1x2x8x16xbf16>
    %88 = vector.shape_cast %80 : vector<2x8x16xbf16> to vector<1x2x8x16xbf16>
    %89 = vector.shape_cast %81 : vector<2x8x16xbf16> to vector<1x2x8x16xbf16>
    %90 = vector.shape_cast %82 : vector<2x8x16xbf16> to vector<1x2x8x16xbf16>
    %91 = vector.shape_cast %83 : vector<2x8x16xbf16> to vector<1x2x8x16xbf16>
    %92 = vector.shape_cast %84 : vector<2x8x16xbf16> to vector<1x2x8x16xbf16>
    %93 = vector.shape_cast %85 : vector<2x8x16xbf16> to vector<1x2x8x16xbf16>
    %94 = vector.shape_cast %86 : vector<2x8x16xbf16> to vector<1x2x8x16xbf16>
    %95 = tpu.concatenate %87, %88, %89, %90, %91, %92, %93, %94 in 0 : vector<1x2x8x16xbf16>, vector<1x2x8x16xbf16>, vector<1x2x8x16xbf16>, vector<1x2x8x16xbf16>, vector<1x2x8x16xbf16>, vector<1x2x8x16xbf16>, vector<1x2x8x16xbf16>, vector<1x2x8x16xbf16> -> vector<8x2x8x16xbf16>
    %96 = vector.shape_cast %95 : vector<8x2x8x16xbf16> to vector<16x8x16xbf16>
    %cst_23 = arith.constant dense<0.000000e+00> : vector<16x8x8xf32>
    %97 = tpu.matmul %56, %76, %cst_23 {dimension_numbers = #tpu.dot_dimension_numbers<[2], [2], [1], [1], [0, 0, 0, 1, 1, 1], [0], [0]>} : vector<16x8x16xbf16>, vector<16x8x16xbf16>, vector<16x8x8xf32> -> vector<16x8x8xf32>
    %98 = vector.shape_cast %97 : vector<16x8x8xf32> to vector<8x2x8x8xf32>
    %cst_24 = arith.constant 2.500000e-01 : f32
    %99 = vector.broadcast %cst_24 : f32 to vector<8x2x8x8xf32>
    %100 = arith.mulf %98, %99 : vector<8x2x8x8xf32>
    %101 = vector.shape_cast %9 : vector<2x8x8xf32> to vector<1x2x8x8xf32>
    %102 = vector.broadcast %101 : vector<1x2x8x8xf32> to vector<8x2x8x8xf32>
    %103 = arith.addf %100, %102 : vector<8x2x8x8xf32>
    %cst_25 = arith.constant dense<0xFF800000> : vector<8x2x8xf32>
    %104 = vector.multi_reduction <maximumf>, %103, %cst_25 [3] : vector<8x2x8x8xf32> to vector<8x2x8xf32>
    %105 = vector.shape_cast %104 : vector<8x2x8xf32> to vector<8x2x8x1xf32>
    %106 = vector.broadcast %105 : vector<8x2x8x1xf32> to vector<8x2x8x8xf32>
    %107 = arith.subf %103, %106 : vector<8x2x8x8xf32>
    %108 = math.exp %107 : vector<8x2x8x8xf32>
    %cst_26 = arith.constant dense<0.000000e+00> : vector<8x2x8xf32>
    %109 = vector.multi_reduction <add>, %108, %cst_26 [3] : vector<8x2x8x8xf32> to vector<8x2x8xf32>
    %110 = vector.shape_cast %109 : vector<8x2x8xf32> to vector<8x2x8x1xf32>
    %111 = vector.broadcast %110 : vector<8x2x8x1xf32> to vector<8x2x8x8xf32>
    %112 = arith.divf %108, %111 : vector<8x2x8x8xf32>
    %113 = vector.shape_cast %112 : vector<8x2x8x8xf32> to vector<16x8x8xf32>
    %114 = arith.truncf %113 : vector<16x8x8xf32> to vector<16x8x8xbf16>
    %cst_27 = arith.constant dense<0.000000e+00> : vector<16x8x16xf32>
    %115 = tpu.matmul %114, %96, %cst_27 {dimension_numbers = #tpu.dot_dimension_numbers<[2], [1], [1], [2], [0, 0, 0, 1, 1, 2], [0], [0]>} : vector<16x8x8xbf16>, vector<16x8x16xbf16>, vector<16x8x16xf32> -> vector<16x8x16xf32>
    %116 = vector.shape_cast %115 : vector<16x8x16xf32> to vector<8x2x8x16xf32>
    %117 = vector.extract_strided_slice %116 {offsets = [0, 0, 0, 0], sizes = [1, 2, 8, 16], strides = [1, 1, 1, 1]} : vector<8x2x8x16xf32> to vector<1x2x8x16xf32>
    %118 = vector.shape_cast %117 : vector<1x2x8x16xf32> to vector<2x8x16xf32>
    %119 = vector.extract_strided_slice %116 {offsets = [1, 0, 0, 0], sizes = [1, 2, 8, 16], strides = [1, 1, 1, 1]} : vector<8x2x8x16xf32> to vector<1x2x8x16xf32>
    %120 = vector.shape_cast %119 : vector<1x2x8x16xf32> to vector<2x8x16xf32>
    %121 = vector.extract_strided_slice %116 {offsets = [2, 0, 0, 0], sizes = [1, 2, 8, 16], strides = [1, 1, 1, 1]} : vector<8x2x8x16xf32> to vector<1x2x8x16xf32>
    %122 = vector.shape_cast %121 : vector<1x2x8x16xf32> to vector<2x8x16xf32>
    %123 = vector.extract_strided_slice %116 {offsets = [3, 0, 0, 0], sizes = [1, 2, 8, 16], strides = [1, 1, 1, 1]} : vector<8x2x8x16xf32> to vector<1x2x8x16xf32>
    %124 = vector.shape_cast %123 : vector<1x2x8x16xf32> to vector<2x8x16xf32>
    %125 = vector.extract_strided_slice %116 {offsets = [4, 0, 0, 0], sizes = [1, 2, 8, 16], strides = [1, 1, 1, 1]} : vector<8x2x8x16xf32> to vector<1x2x8x16xf32>
    %126 = vector.shape_cast %125 : vector<1x2x8x16xf32> to vector<2x8x16xf32>
    %127 = vector.extract_strided_slice %116 {offsets = [5, 0, 0, 0], sizes = [1, 2, 8, 16], strides = [1, 1, 1, 1]} : vector<8x2x8x16xf32> to vector<1x2x8x16xf32>
    %128 = vector.shape_cast %127 : vector<1x2x8x16xf32> to vector<2x8x16xf32>
    %129 = vector.extract_strided_slice %116 {offsets = [6, 0, 0, 0], sizes = [1, 2, 8, 16], strides = [1, 1, 1, 1]} : vector<8x2x8x16xf32> to vector<1x2x8x16xf32>
    %130 = vector.shape_cast %129 : vector<1x2x8x16xf32> to vector<2x8x16xf32>
    %131 = vector.extract_strided_slice %116 {offsets = [7, 0, 0, 0], sizes = [1, 2, 8, 16], strides = [1, 1, 1, 1]} : vector<8x2x8x16xf32> to vector<1x2x8x16xf32>
    %132 = vector.shape_cast %131 : vector<1x2x8x16xf32> to vector<2x8x16xf32>
    %133 = tpu.concatenate %118, %120, %122, %124, %126, %128, %130, %132 in 2 : vector<2x8x16xf32>, vector<2x8x16xf32>, vector<2x8x16xf32>, vector<2x8x16xf32>, vector<2x8x16xf32>, vector<2x8x16xf32>, vector<2x8x16xf32>, vector<2x8x16xf32> -> vector<2x8x128xf32>
    %134 = vector.shape_cast %133 : vector<2x8x128xf32> to vector<16x128xf32>
    %135 = arith.truncf %134 : vector<16x128xf32> to vector<16x128xbf16>
    %cst_28 = arith.constant dense<0.000000e+00> : vector<16x128xf32>
    %136 = tpu.matmul %135, %36, %cst_28 {dimension_numbers = #tpu.dot_dimension_numbers<[1], [0], [0], [1], [0, 0, 1, 1], [], []>} : vector<16x128xbf16>, vector<128x128xbf16>, vector<16x128xf32> -> vector<16x128xf32>
    %137 = vector.broadcast %17 : vector<1x128xf32> to vector<16x128xf32>
    %138 = arith.addf %136, %137 : vector<16x128xf32>
    %139 = arith.addf %138, %1 : vector<16x128xf32>
    %cst_29 = arith.constant dense<0.000000e+00> : vector<16xf32>
    %140 = vector.multi_reduction <add>, %139, %cst_29 [1] : vector<16x128xf32> to vector<16xf32>
    %141 = vector.shape_cast %140 : vector<16xf32> to vector<16x1xf32>
    %cst_30 = arith.constant 1.280000e+02 : f32
    %142 = vector.broadcast %cst_30 : f32 to vector<16x1xf32>
    %143 = arith.divf %141, %142 : vector<16x1xf32>
    %144 = vector.broadcast %143 : vector<16x1xf32> to vector<16x128xf32>
    %145 = arith.subf %139, %144 : vector<16x128xf32>
    %146 = arith.mulf %145, %145 : vector<16x128xf32>
    %cst_31 = arith.constant dense<0.000000e+00> : vector<16xf32>
    %147 = vector.multi_reduction <add>, %146, %cst_31 [1] : vector<16x128xf32> to vector<16xf32>
    %148 = vector.shape_cast %147 : vector<16xf32> to vector<16x1xf32>
    %cst_32 = arith.constant 1.280000e+02 : f32
    %149 = vector.broadcast %cst_32 : f32 to vector<16x1xf32>
    %150 = arith.divf %148, %149 : vector<16x1xf32>
    %151 = vector.broadcast %143 : vector<16x1xf32> to vector<16x128xf32>
    %152 = arith.subf %139, %151 : vector<16x128xf32>
    %cst_33 = arith.constant 9.99999974E-6 : f32
    %153 = vector.broadcast %cst_33 : f32 to vector<16x1xf32>
    %154 = arith.addf %150, %153 : vector<16x1xf32>
    %155 = math.rsqrt %154 : vector<16x1xf32>
    %156 = vector.broadcast %155 : vector<16x1xf32> to vector<16x128xf32>
    %157 = arith.mulf %152, %156 : vector<16x128xf32>
    %158 = vector.broadcast %18 : vector<1x128xf32> to vector<16x128xf32>
    %159 = arith.mulf %157, %158 : vector<16x128xf32>
    %160 = vector.broadcast %19 : vector<1x128xf32> to vector<16x128xf32>
    %161 = arith.addf %159, %160 : vector<16x128xf32>
    %162 = arith.truncf %161 : vector<16x128xf32> to vector<16x128xbf16>
    %c0_34 = arith.constant 0 : index
    %c0_35 = arith.constant 0 : index
    %163 = vector.load %arg7[%c0_34, %c0_35] : memref<128x128xbf16, #tpu.memory_space<vmem>>, vector<128x128xbf16>
    %cst_36 = arith.constant dense<0.000000e+00> : vector<16x128xf32>
    %164 = tpu.matmul %162, %163, %cst_36 {dimension_numbers = #tpu.dot_dimension_numbers<[1], [0], [0], [1], [0, 0, 1, 1], [], []>} : vector<16x128xbf16>, vector<128x128xbf16>, vector<16x128xf32> -> vector<16x128xf32>
    %165 = vector.broadcast %20 : vector<1x128xf32> to vector<16x128xf32>
    %166 = arith.addf %164, %165 : vector<16x128xf32>
    %167 = arith.truncf %3 : vector<32x128xf32> to vector<32x128xbf16>
    %c0_37 = arith.constant 0 : index
    %c0_38 = arith.constant 0 : index
    %168 = vector.load %arg8[%c0_37, %c0_38] : memref<128x256xbf16, #tpu.memory_space<vmem>>, vector<128x256xbf16>
    %cst_39 = arith.constant dense<0.000000e+00> : vector<32x256xf32>
    %169 = tpu.matmul %167, %168, %cst_39 {dimension_numbers = #tpu.dot_dimension_numbers<[1], [0], [0], [1], [0, 0, 1, 1], [], []>} : vector<32x128xbf16>, vector<128x256xbf16>, vector<32x256xf32> -> vector<32x256xf32>
    %c0_40 = arith.constant 0 : index
    %c0_41 = arith.constant 0 : index
    %170 = vector.load %arg13[%c0_40, %c0_41] : memref<1x256xf32, #tpu.memory_space<vmem>>, vector<1x256xf32>
    %171 = vector.broadcast %170 : vector<1x256xf32> to vector<32x256xf32>
    %172 = arith.addf %169, %171 : vector<32x256xf32>
    %173 = vector.extract_strided_slice %172 {offsets = [0, 0], sizes = [32, 128], strides = [1, 1]} : vector<32x256xf32> to vector<32x128xf32>
    %174 = vector.extract_strided_slice %172 {offsets = [0, 128], sizes = [32, 128], strides = [1, 1]} : vector<32x256xf32> to vector<32x128xf32>
    %c0_42 = arith.constant 0 : index
    %c0_43 = arith.constant 0 : index
    %175 = vector.load %arg9[%c0_42, %c0_43] : memref<128x128xbf16, #tpu.memory_space<vmem>>, vector<128x128xbf16>
    %176 = vector.shape_cast %166 : vector<16x128xf32> to vector<2x8x128xf32>
    %177 = arith.truncf %176 : vector<2x8x128xf32> to vector<2x8x128xbf16>
    %178 = vector.extract_strided_slice %177 {offsets = [0, 0, 0], sizes = [2, 8, 16], strides = [1, 1, 1]} : vector<2x8x128xbf16> to vector<2x8x16xbf16>
    %179 = vector.extract_strided_slice %177 {offsets = [0, 0, 16], sizes = [2, 8, 16], strides = [1, 1, 1]} : vector<2x8x128xbf16> to vector<2x8x16xbf16>
    %180 = vector.extract_strided_slice %177 {offsets = [0, 0, 32], sizes = [2, 8, 16], strides = [1, 1, 1]} : vector<2x8x128xbf16> to vector<2x8x16xbf16>
    %181 = vector.extract_strided_slice %177 {offsets = [0, 0, 48], sizes = [2, 8, 16], strides = [1, 1, 1]} : vector<2x8x128xbf16> to vector<2x8x16xbf16>
    %182 = vector.extract_strided_slice %177 {offsets = [0, 0, 64], sizes = [2, 8, 16], strides = [1, 1, 1]} : vector<2x8x128xbf16> to vector<2x8x16xbf16>
    %183 = vector.extract_strided_slice %177 {offsets = [0, 0, 80], sizes = [2, 8, 16], strides = [1, 1, 1]} : vector<2x8x128xbf16> to vector<2x8x16xbf16>
    %184 = vector.extract_strided_slice %177 {offsets = [0, 0, 96], sizes = [2, 8, 16], strides = [1, 1, 1]} : vector<2x8x128xbf16> to vector<2x8x16xbf16>
    %185 = vector.extract_strided_slice %177 {offsets = [0, 0, 112], sizes = [2, 8, 16], strides = [1, 1, 1]} : vector<2x8x128xbf16> to vector<2x8x16xbf16>
    %186 = vector.shape_cast %178 : vector<2x8x16xbf16> to vector<1x2x8x16xbf16>
    %187 = vector.shape_cast %179 : vector<2x8x16xbf16> to vector<1x2x8x16xbf16>
    %188 = vector.shape_cast %180 : vector<2x8x16xbf16> to vector<1x2x8x16xbf16>
    %189 = vector.shape_cast %181 : vector<2x8x16xbf16> to vector<1x2x8x16xbf16>
    %190 = vector.shape_cast %182 : vector<2x8x16xbf16> to vector<1x2x8x16xbf16>
    %191 = vector.shape_cast %183 : vector<2x8x16xbf16> to vector<1x2x8x16xbf16>
    %192 = vector.shape_cast %184 : vector<2x8x16xbf16> to vector<1x2x8x16xbf16>
    %193 = vector.shape_cast %185 : vector<2x8x16xbf16> to vector<1x2x8x16xbf16>
    %194 = tpu.concatenate %186, %187, %188, %189, %190, %191, %192, %193 in 0 : vector<1x2x8x16xbf16>, vector<1x2x8x16xbf16>, vector<1x2x8x16xbf16>, vector<1x2x8x16xbf16>, vector<1x2x8x16xbf16>, vector<1x2x8x16xbf16>, vector<1x2x8x16xbf16>, vector<1x2x8x16xbf16> -> vector<8x2x8x16xbf16>
    %195 = vector.shape_cast %194 : vector<8x2x8x16xbf16> to vector<16x8x16xbf16>
    %196 = vector.shape_cast %173 : vector<32x128xf32> to vector<2x16x128xf32>
    %197 = arith.truncf %196 : vector<2x16x128xf32> to vector<2x16x128xbf16>
    %198 = vector.extract_strided_slice %197 {offsets = [0, 0, 0], sizes = [2, 16, 16], strides = [1, 1, 1]} : vector<2x16x128xbf16> to vector<2x16x16xbf16>
    %199 = vector.extract_strided_slice %197 {offsets = [0, 0, 16], sizes = [2, 16, 16], strides = [1, 1, 1]} : vector<2x16x128xbf16> to vector<2x16x16xbf16>
    %200 = vector.extract_strided_slice %197 {offsets = [0, 0, 32], sizes = [2, 16, 16], strides = [1, 1, 1]} : vector<2x16x128xbf16> to vector<2x16x16xbf16>
    %201 = vector.extract_strided_slice %197 {offsets = [0, 0, 48], sizes = [2, 16, 16], strides = [1, 1, 1]} : vector<2x16x128xbf16> to vector<2x16x16xbf16>
    %202 = vector.extract_strided_slice %197 {offsets = [0, 0, 64], sizes = [2, 16, 16], strides = [1, 1, 1]} : vector<2x16x128xbf16> to vector<2x16x16xbf16>
    %203 = vector.extract_strided_slice %197 {offsets = [0, 0, 80], sizes = [2, 16, 16], strides = [1, 1, 1]} : vector<2x16x128xbf16> to vector<2x16x16xbf16>
    %204 = vector.extract_strided_slice %197 {offsets = [0, 0, 96], sizes = [2, 16, 16], strides = [1, 1, 1]} : vector<2x16x128xbf16> to vector<2x16x16xbf16>
    %205 = vector.extract_strided_slice %197 {offsets = [0, 0, 112], sizes = [2, 16, 16], strides = [1, 1, 1]} : vector<2x16x128xbf16> to vector<2x16x16xbf16>
    %206 = vector.shape_cast %198 : vector<2x16x16xbf16> to vector<1x2x16x16xbf16>
    %207 = vector.shape_cast %199 : vector<2x16x16xbf16> to vector<1x2x16x16xbf16>
    %208 = vector.shape_cast %200 : vector<2x16x16xbf16> to vector<1x2x16x16xbf16>
    %209 = vector.shape_cast %201 : vector<2x16x16xbf16> to vector<1x2x16x16xbf16>
    %210 = vector.shape_cast %202 : vector<2x16x16xbf16> to vector<1x2x16x16xbf16>
    %211 = vector.shape_cast %203 : vector<2x16x16xbf16> to vector<1x2x16x16xbf16>
    %212 = vector.shape_cast %204 : vector<2x16x16xbf16> to vector<1x2x16x16xbf16>
    %213 = vector.shape_cast %205 : vector<2x16x16xbf16> to vector<1x2x16x16xbf16>
    %214 = tpu.concatenate %206, %207, %208, %209, %210, %211, %212, %213 in 0 : vector<1x2x16x16xbf16>, vector<1x2x16x16xbf16>, vector<1x2x16x16xbf16>, vector<1x2x16x16xbf16>, vector<1x2x16x16xbf16>, vector<1x2x16x16xbf16>, vector<1x2x16x16xbf16>, vector<1x2x16x16xbf16> -> vector<8x2x16x16xbf16>
    %215 = vector.shape_cast %214 : vector<8x2x16x16xbf16> to vector<16x16x16xbf16>
    %216 = vector.shape_cast %174 : vector<32x128xf32> to vector<2x16x128xf32>
    %217 = arith.truncf %216 : vector<2x16x128xf32> to vector<2x16x128xbf16>
    %218 = vector.extract_strided_slice %217 {offsets = [0, 0, 0], sizes = [2, 16, 16], strides = [1, 1, 1]} : vector<2x16x128xbf16> to vector<2x16x16xbf16>
    %219 = vector.extract_strided_slice %217 {offsets = [0, 0, 16], sizes = [2, 16, 16], strides = [1, 1, 1]} : vector<2x16x128xbf16> to vector<2x16x16xbf16>
    %220 = vector.extract_strided_slice %217 {offsets = [0, 0, 32], sizes = [2, 16, 16], strides = [1, 1, 1]} : vector<2x16x128xbf16> to vector<2x16x16xbf16>
    %221 = vector.extract_strided_slice %217 {offsets = [0, 0, 48], sizes = [2, 16, 16], strides = [1, 1, 1]} : vector<2x16x128xbf16> to vector<2x16x16xbf16>
    %222 = vector.extract_strided_slice %217 {offsets = [0, 0, 64], sizes = [2, 16, 16], strides = [1, 1, 1]} : vector<2x16x128xbf16> to vector<2x16x16xbf16>
    %223 = vector.extract_strided_slice %217 {offsets = [0, 0, 80], sizes = [2, 16, 16], strides = [1, 1, 1]} : vector<2x16x128xbf16> to vector<2x16x16xbf16>
    %224 = vector.extract_strided_slice %217 {offsets = [0, 0, 96], sizes = [2, 16, 16], strides = [1, 1, 1]} : vector<2x16x128xbf16> to vector<2x16x16xbf16>
    %225 = vector.extract_strided_slice %217 {offsets = [0, 0, 112], sizes = [2, 16, 16], strides = [1, 1, 1]} : vector<2x16x128xbf16> to vector<2x16x16xbf16>
    %226 = vector.shape_cast %218 : vector<2x16x16xbf16> to vector<1x2x16x16xbf16>
    %227 = vector.shape_cast %219 : vector<2x16x16xbf16> to vector<1x2x16x16xbf16>
    %228 = vector.shape_cast %220 : vector<2x16x16xbf16> to vector<1x2x16x16xbf16>
    %229 = vector.shape_cast %221 : vector<2x16x16xbf16> to vector<1x2x16x16xbf16>
    %230 = vector.shape_cast %222 : vector<2x16x16xbf16> to vector<1x2x16x16xbf16>
    %231 = vector.shape_cast %223 : vector<2x16x16xbf16> to vector<1x2x16x16xbf16>
    %232 = vector.shape_cast %224 : vector<2x16x16xbf16> to vector<1x2x16x16xbf16>
    %233 = vector.shape_cast %225 : vector<2x16x16xbf16> to vector<1x2x16x16xbf16>
    %234 = tpu.concatenate %226, %227, %228, %229, %230, %231, %232, %233 in 0 : vector<1x2x16x16xbf16>, vector<1x2x16x16xbf16>, vector<1x2x16x16xbf16>, vector<1x2x16x16xbf16>, vector<1x2x16x16xbf16>, vector<1x2x16x16xbf16>, vector<1x2x16x16xbf16>, vector<1x2x16x16xbf16> -> vector<8x2x16x16xbf16>
    %235 = vector.shape_cast %234 : vector<8x2x16x16xbf16> to vector<16x16x16xbf16>
    %cst_44 = arith.constant dense<0.000000e+00> : vector<16x8x16xf32>
    %236 = tpu.matmul %195, %215, %cst_44 {dimension_numbers = #tpu.dot_dimension_numbers<[2], [2], [1], [1], [0, 0, 0, 1, 1, 1], [0], [0]>} : vector<16x8x16xbf16>, vector<16x16x16xbf16>, vector<16x8x16xf32> -> vector<16x8x16xf32>
    %237 = vector.shape_cast %236 : vector<16x8x16xf32> to vector<8x2x8x16xf32>
    %cst_45 = arith.constant 2.500000e-01 : f32
    %238 = vector.broadcast %cst_45 : f32 to vector<8x2x8x16xf32>
    %239 = arith.mulf %237, %238 : vector<8x2x8x16xf32>
    %240 = vector.shape_cast %15 : vector<2x8x16xf32> to vector<1x2x8x16xf32>
    %241 = vector.broadcast %240 : vector<1x2x8x16xf32> to vector<8x2x8x16xf32>
    %242 = arith.addf %239, %241 : vector<8x2x8x16xf32>
    %cst_46 = arith.constant dense<0xFF800000> : vector<8x2x8xf32>
    %243 = vector.multi_reduction <maximumf>, %242, %cst_46 [3] : vector<8x2x8x16xf32> to vector<8x2x8xf32>
    %244 = vector.shape_cast %243 : vector<8x2x8xf32> to vector<8x2x8x1xf32>
    %245 = vector.broadcast %244 : vector<8x2x8x1xf32> to vector<8x2x8x16xf32>
    %246 = arith.subf %242, %245 : vector<8x2x8x16xf32>
    %247 = math.exp %246 : vector<8x2x8x16xf32>
    %cst_47 = arith.constant dense<0.000000e+00> : vector<8x2x8xf32>
    %248 = vector.multi_reduction <add>, %247, %cst_47 [3] : vector<8x2x8x16xf32> to vector<8x2x8xf32>
    %249 = vector.shape_cast %248 : vector<8x2x8xf32> to vector<8x2x8x1xf32>
    %250 = vector.broadcast %249 : vector<8x2x8x1xf32> to vector<8x2x8x16xf32>
    %251 = arith.divf %247, %250 : vector<8x2x8x16xf32>
    %252 = vector.shape_cast %251 : vector<8x2x8x16xf32> to vector<16x8x16xf32>
    %253 = arith.truncf %252 : vector<16x8x16xf32> to vector<16x8x16xbf16>
    %cst_48 = arith.constant dense<0.000000e+00> : vector<16x8x16xf32>
    %254 = tpu.matmul %253, %235, %cst_48 {dimension_numbers = #tpu.dot_dimension_numbers<[2], [1], [1], [2], [0, 0, 0, 1, 1, 2], [0], [0]>} : vector<16x8x16xbf16>, vector<16x16x16xbf16>, vector<16x8x16xf32> -> vector<16x8x16xf32>
    %255 = vector.shape_cast %254 : vector<16x8x16xf32> to vector<8x2x8x16xf32>
    %256 = vector.extract_strided_slice %255 {offsets = [0, 0, 0, 0], sizes = [1, 2, 8, 16], strides = [1, 1, 1, 1]} : vector<8x2x8x16xf32> to vector<1x2x8x16xf32>
    %257 = vector.shape_cast %256 : vector<1x2x8x16xf32> to vector<2x8x16xf32>
    %258 = vector.extract_strided_slice %255 {offsets = [1, 0, 0, 0], sizes = [1, 2, 8, 16], strides = [1, 1, 1, 1]} : vector<8x2x8x16xf32> to vector<1x2x8x16xf32>
    %259 = vector.shape_cast %258 : vector<1x2x8x16xf32> to vector<2x8x16xf32>
    %260 = vector.extract_strided_slice %255 {offsets = [2, 0, 0, 0], sizes = [1, 2, 8, 16], strides = [1, 1, 1, 1]} : vector<8x2x8x16xf32> to vector<1x2x8x16xf32>
    %261 = vector.shape_cast %260 : vector<1x2x8x16xf32> to vector<2x8x16xf32>
    %262 = vector.extract_strided_slice %255 {offsets = [3, 0, 0, 0], sizes = [1, 2, 8, 16], strides = [1, 1, 1, 1]} : vector<8x2x8x16xf32> to vector<1x2x8x16xf32>
    %263 = vector.shape_cast %262 : vector<1x2x8x16xf32> to vector<2x8x16xf32>
    %264 = vector.extract_strided_slice %255 {offsets = [4, 0, 0, 0], sizes = [1, 2, 8, 16], strides = [1, 1, 1, 1]} : vector<8x2x8x16xf32> to vector<1x2x8x16xf32>
    %265 = vector.shape_cast %264 : vector<1x2x8x16xf32> to vector<2x8x16xf32>
    %266 = vector.extract_strided_slice %255 {offsets = [5, 0, 0, 0], sizes = [1, 2, 8, 16], strides = [1, 1, 1, 1]} : vector<8x2x8x16xf32> to vector<1x2x8x16xf32>
    %267 = vector.shape_cast %266 : vector<1x2x8x16xf32> to vector<2x8x16xf32>
    %268 = vector.extract_strided_slice %255 {offsets = [6, 0, 0, 0], sizes = [1, 2, 8, 16], strides = [1, 1, 1, 1]} : vector<8x2x8x16xf32> to vector<1x2x8x16xf32>
    %269 = vector.shape_cast %268 : vector<1x2x8x16xf32> to vector<2x8x16xf32>
    %270 = vector.extract_strided_slice %255 {offsets = [7, 0, 0, 0], sizes = [1, 2, 8, 16], strides = [1, 1, 1, 1]} : vector<8x2x8x16xf32> to vector<1x2x8x16xf32>
    %271 = vector.shape_cast %270 : vector<1x2x8x16xf32> to vector<2x8x16xf32>
    %272 = tpu.concatenate %257, %259, %261, %263, %265, %267, %269, %271 in 2 : vector<2x8x16xf32>, vector<2x8x16xf32>, vector<2x8x16xf32>, vector<2x8x16xf32>, vector<2x8x16xf32>, vector<2x8x16xf32>, vector<2x8x16xf32>, vector<2x8x16xf32> -> vector<2x8x128xf32>
    %273 = vector.shape_cast %272 : vector<2x8x128xf32> to vector<16x128xf32>
    %274 = arith.truncf %273 : vector<16x128xf32> to vector<16x128xbf16>
    %cst_49 = arith.constant dense<0.000000e+00> : vector<16x128xf32>
    %275 = tpu.matmul %274, %175, %cst_49 {dimension_numbers = #tpu.dot_dimension_numbers<[1], [0], [0], [1], [0, 0, 1, 1], [], []>} : vector<16x128xbf16>, vector<128x128xbf16>, vector<16x128xf32> -> vector<16x128xf32>
    %276 = vector.broadcast %21 : vector<1x128xf32> to vector<16x128xf32>
    %277 = arith.addf %275, %276 : vector<16x128xf32>
    %278 = arith.addf %277, %161 : vector<16x128xf32>
    %cst_50 = arith.constant dense<0.000000e+00> : vector<16xf32>
    %279 = vector.multi_reduction <add>, %278, %cst_50 [1] : vector<16x128xf32> to vector<16xf32>
    %280 = vector.shape_cast %279 : vector<16xf32> to vector<16x1xf32>
    %cst_51 = arith.constant 1.280000e+02 : f32
    %281 = vector.broadcast %cst_51 : f32 to vector<16x1xf32>
    %282 = arith.divf %280, %281 : vector<16x1xf32>
    %283 = vector.broadcast %282 : vector<16x1xf32> to vector<16x128xf32>
    %284 = arith.subf %278, %283 : vector<16x128xf32>
    %285 = arith.mulf %284, %284 : vector<16x128xf32>
    %cst_52 = arith.constant dense<0.000000e+00> : vector<16xf32>
    %286 = vector.multi_reduction <add>, %285, %cst_52 [1] : vector<16x128xf32> to vector<16xf32>
    %287 = vector.shape_cast %286 : vector<16xf32> to vector<16x1xf32>
    %cst_53 = arith.constant 1.280000e+02 : f32
    %288 = vector.broadcast %cst_53 : f32 to vector<16x1xf32>
    %289 = arith.divf %287, %288 : vector<16x1xf32>
    %290 = vector.broadcast %282 : vector<16x1xf32> to vector<16x128xf32>
    %291 = arith.subf %278, %290 : vector<16x128xf32>
    %cst_54 = arith.constant 9.99999974E-6 : f32
    %292 = vector.broadcast %cst_54 : f32 to vector<16x1xf32>
    %293 = arith.addf %289, %292 : vector<16x1xf32>
    %294 = math.rsqrt %293 : vector<16x1xf32>
    %295 = vector.broadcast %294 : vector<16x1xf32> to vector<16x128xf32>
    %296 = arith.mulf %291, %295 : vector<16x128xf32>
    %297 = vector.broadcast %22 : vector<1x128xf32> to vector<16x128xf32>
    %298 = arith.mulf %296, %297 : vector<16x128xf32>
    %299 = vector.broadcast %23 : vector<1x128xf32> to vector<16x128xf32>
    %300 = arith.addf %298, %299 : vector<16x128xf32>
    %301 = arith.truncf %300 : vector<16x128xf32> to vector<16x128xbf16>
    %c0_55 = arith.constant 0 : index
    %c0_56 = arith.constant 0 : index
    %302 = vector.load %arg10[%c0_55, %c0_56] : memref<128x256xbf16, #tpu.memory_space<vmem>>, vector<128x256xbf16>
    %cst_57 = arith.constant dense<0.000000e+00> : vector<16x256xf32>
    %303 = tpu.matmul %301, %302, %cst_57 {dimension_numbers = #tpu.dot_dimension_numbers<[1], [0], [0], [1], [0, 0, 1, 1], [], []>} : vector<16x128xbf16>, vector<128x256xbf16>, vector<16x256xf32> -> vector<16x256xf32>
    %c0_58 = arith.constant 0 : index
    %c0_59 = arith.constant 0 : index
    %304 = vector.load %arg14[%c0_58, %c0_59] : memref<1x256xf32, #tpu.memory_space<vmem>>, vector<1x256xf32>
    %305 = vector.broadcast %304 : vector<1x256xf32> to vector<16x256xf32>
    %306 = arith.addf %303, %305 : vector<16x256xf32>
    %cst_60 = arith.constant 0.000000e+00 : f32
    %307 = vector.broadcast %cst_60 : f32 to vector<16x256xf32>
    %308 = arith.maximumf %306, %307 : vector<16x256xf32>
    %309 = arith.truncf %308 : vector<16x256xf32> to vector<16x256xbf16>
    %c0_61 = arith.constant 0 : index
    %c0_62 = arith.constant 0 : index
    %310 = vector.load %arg11[%c0_61, %c0_62] : memref<256x128xbf16, #tpu.memory_space<vmem>>, vector<256x128xbf16>
    %cst_63 = arith.constant dense<0.000000e+00> : vector<16x128xf32>
    %311 = tpu.matmul %309, %310, %cst_63 {dimension_numbers = #tpu.dot_dimension_numbers<[1], [0], [0], [1], [0, 0, 1, 1], [], []>} : vector<16x256xbf16>, vector<256x128xbf16>, vector<16x128xf32> -> vector<16x128xf32>
    %312 = vector.broadcast %24 : vector<1x128xf32> to vector<16x128xf32>
    %313 = arith.addf %311, %312 : vector<16x128xf32>
    %314 = arith.addf %313, %300 : vector<16x128xf32>
    %cst_64 = arith.constant dense<0.000000e+00> : vector<16xf32>
    %315 = vector.multi_reduction <add>, %314, %cst_64 [1] : vector<16x128xf32> to vector<16xf32>
    %316 = vector.shape_cast %315 : vector<16xf32> to vector<16x1xf32>
    %cst_65 = arith.constant 1.280000e+02 : f32
    %317 = vector.broadcast %cst_65 : f32 to vector<16x1xf32>
    %318 = arith.divf %316, %317 : vector<16x1xf32>
    %319 = vector.broadcast %318 : vector<16x1xf32> to vector<16x128xf32>
    %320 = arith.subf %314, %319 : vector<16x128xf32>
    %321 = arith.mulf %320, %320 : vector<16x128xf32>
    %cst_66 = arith.constant dense<0.000000e+00> : vector<16xf32>
    %322 = vector.multi_reduction <add>, %321, %cst_66 [1] : vector<16x128xf32> to vector<16xf32>
    %323 = vector.shape_cast %322 : vector<16xf32> to vector<16x1xf32>
    %cst_67 = arith.constant 1.280000e+02 : f32
    %324 = vector.broadcast %cst_67 : f32 to vector<16x1xf32>
    %325 = arith.divf %323, %324 : vector<16x1xf32>
    %326 = vector.broadcast %318 : vector<16x1xf32> to vector<16x128xf32>
    %327 = arith.subf %314, %326 : vector<16x128xf32>
    %cst_68 = arith.constant 9.99999974E-6 : f32
    %328 = vector.broadcast %cst_68 : f32 to vector<16x1xf32>
    %329 = arith.addf %325, %328 : vector<16x1xf32>
    %330 = math.rsqrt %329 : vector<16x1xf32>
    %331 = vector.broadcast %330 : vector<16x1xf32> to vector<16x128xf32>
    %332 = arith.mulf %327, %331 : vector<16x128xf32>
    %333 = vector.broadcast %25 : vector<1x128xf32> to vector<16x128xf32>
    %334 = arith.mulf %332, %333 : vector<16x128xf32>
    %335 = vector.broadcast %26 : vector<1x128xf32> to vector<16x128xf32>
    %336 = arith.addf %334, %335 : vector<16x128xf32>
    %337 = vector.shape_cast %336 : vector<16x128xf32> to vector<2x8x128xf32>
    %c0_69 = arith.constant 0 : index
    %c0_70 = arith.constant 0 : index
    %c0_71 = arith.constant 0 : index
    %338 = vector.load %arg16[%c0_69, %c0_70, %c0_71] : memref<2x8x128xf32, #tpu.memory_space<vmem>>, vector<2x8x128xf32>
    tpu.vector_store %arg16[%c0_69, %c0_70, %c0_71], %337 {strides = array<i32>} : memref<2x8x128xf32, #tpu.memory_space<vmem>>, vector<2x8x128xf32>,
    %339 = vector.extract_strided_slice %112 {offsets = [0, 0, 0, 0], sizes = [1, 2, 8, 8], strides = [1, 1, 1, 1]} : vector<8x2x8x8xf32> to vector<1x2x8x8xf32>
    %340 = vector.shape_cast %339 : vector<1x2x8x8xf32> to vector<2x8x8xf32>
    %341 = vector.extract_strided_slice %112 {offsets = [1, 0, 0, 0], sizes = [1, 2, 8, 8], strides = [1, 1, 1, 1]} : vector<8x2x8x8xf32> to vector<1x2x8x8xf32>
    %342 = vector.shape_cast %341 : vector<1x2x8x8xf32> to vector<2x8x8xf32>
    %343 = vector.extract_strided_slice %112 {offsets = [2, 0, 0, 0], sizes = [1, 2, 8, 8], strides = [1, 1, 1, 1]} : vector<8x2x8x8xf32> to vector<1x2x8x8xf32>
    %344 = vector.shape_cast %343 : vector<1x2x8x8xf32> to vector<2x8x8xf32>
    %345 = vector.extract_strided_slice %112 {offsets = [3, 0, 0, 0], sizes = [1, 2, 8, 8], strides = [1, 1, 1, 1]} : vector<8x2x8x8xf32> to vector<1x2x8x8xf32>
    %346 = vector.shape_cast %345 : vector<1x2x8x8xf32> to vector<2x8x8xf32>
    %347 = vector.extract_strided_slice %112 {offsets = [4, 0, 0, 0], sizes = [1, 2, 8, 8], strides = [1, 1, 1, 1]} : vector<8x2x8x8xf32> to vector<1x2x8x8xf32>
    %348 = vector.shape_cast %347 : vector<1x2x8x8xf32> to vector<2x8x8xf32>
    %349 = vector.extract_strided_slice %112 {offsets = [5, 0, 0, 0], sizes = [1, 2, 8, 8], strides = [1, 1, 1, 1]} : vector<8x2x8x8xf32> to vector<1x2x8x8xf32>
    %350 = vector.shape_cast %349 : vector<1x2x8x8xf32> to vector<2x8x8xf32>
    %351 = vector.extract_strided_slice %112 {offsets = [6, 0, 0, 0], sizes = [1, 2, 8, 8], strides = [1, 1, 1, 1]} : vector<8x2x8x8xf32> to vector<1x2x8x8xf32>
    %352 = vector.shape_cast %351 : vector<1x2x8x8xf32> to vector<2x8x8xf32>
    %353 = vector.extract_strided_slice %112 {offsets = [7, 0, 0, 0], sizes = [1, 2, 8, 8], strides = [1, 1, 1, 1]} : vector<8x2x8x8xf32> to vector<1x2x8x8xf32>
    %354 = vector.shape_cast %353 : vector<1x2x8x8xf32> to vector<2x8x8xf32>
    %355 = vector.shape_cast %340 : vector<2x8x8xf32> to vector<2x1x8x8xf32>
    %356 = vector.shape_cast %342 : vector<2x8x8xf32> to vector<2x1x8x8xf32>
    %357 = vector.shape_cast %344 : vector<2x8x8xf32> to vector<2x1x8x8xf32>
    %358 = vector.shape_cast %346 : vector<2x8x8xf32> to vector<2x1x8x8xf32>
    %359 = vector.shape_cast %348 : vector<2x8x8xf32> to vector<2x1x8x8xf32>
    %360 = vector.shape_cast %350 : vector<2x8x8xf32> to vector<2x1x8x8xf32>
    %361 = vector.shape_cast %352 : vector<2x8x8xf32> to vector<2x1x8x8xf32>
    %362 = vector.shape_cast %354 : vector<2x8x8xf32> to vector<2x1x8x8xf32>
    %363 = tpu.concatenate %355, %356, %357, %358, %359, %360, %361, %362 in 1 : vector<2x1x8x8xf32>, vector<2x1x8x8xf32>, vector<2x1x8x8xf32>, vector<2x1x8x8xf32>, vector<2x1x8x8xf32>, vector<2x1x8x8xf32>, vector<2x1x8x8xf32>, vector<2x1x8x8xf32> -> vector<2x8x8x8xf32>
    %c0_72 = arith.constant 0 : index
    %c0_73 = arith.constant 0 : index
    %c0_74 = arith.constant 0 : index
    %c0_75 = arith.constant 0 : index
    %364 = vector.load %arg17[%c0_72, %c0_73, %c0_74, %c0_75] : memref<2x8x8x8xf32, #tpu.memory_space<vmem>>, vector<2x8x8x8xf32>
    tpu.vector_store %arg17[%c0_72, %c0_73, %c0_74, %c0_75], %363 {strides = array<i32>} : memref<2x8x8x8xf32, #tpu.memory_space<vmem>>, vector<2x8x8x8xf32>,
    %365 = vector.extract_strided_slice %251 {offsets = [0, 0, 0, 0], sizes = [1, 2, 8, 16], strides = [1, 1, 1, 1]} : vector<8x2x8x16xf32> to vector<1x2x8x16xf32>
    %366 = vector.shape_cast %365 : vector<1x2x8x16xf32> to vector<2x8x16xf32>
    %367 = vector.extract_strided_slice %251 {offsets = [1, 0, 0, 0], sizes = [1, 2, 8, 16], strides = [1, 1, 1, 1]} : vector<8x2x8x16xf32> to vector<1x2x8x16xf32>
    %368 = vector.shape_cast %367 : vector<1x2x8x16xf32> to vector<2x8x16xf32>
    %369 = vector.extract_strided_slice %251 {offsets = [2, 0, 0, 0], sizes = [1, 2, 8, 16], strides = [1, 1, 1, 1]} : vector<8x2x8x16xf32> to vector<1x2x8x16xf32>
    %370 = vector.shape_cast %369 : vector<1x2x8x16xf32> to vector<2x8x16xf32>
    %371 = vector.extract_strided_slice %251 {offsets = [3, 0, 0, 0], sizes = [1, 2, 8, 16], strides = [1, 1, 1, 1]} : vector<8x2x8x16xf32> to vector<1x2x8x16xf32>
    %372 = vector.shape_cast %371 : vector<1x2x8x16xf32> to vector<2x8x16xf32>
    %373 = vector.extract_strided_slice %251 {offsets = [4, 0, 0, 0], sizes = [1, 2, 8, 16], strides = [1, 1, 1, 1]} : vector<8x2x8x16xf32> to vector<1x2x8x16xf32>
    %374 = vector.shape_cast %373 : vector<1x2x8x16xf32> to vector<2x8x16xf32>
    %375 = vector.extract_strided_slice %251 {offsets = [5, 0, 0, 0], sizes = [1, 2, 8, 16], strides = [1, 1, 1, 1]} : vector<8x2x8x16xf32> to vector<1x2x8x16xf32>
    %376 = vector.shape_cast %375 : vector<1x2x8x16xf32> to vector<2x8x16xf32>
    %377 = vector.extract_strided_slice %251 {offsets = [6, 0, 0, 0], sizes = [1, 2, 8, 16], strides = [1, 1, 1, 1]} : vector<8x2x8x16xf32> to vector<1x2x8x16xf32>
    %378 = vector.shape_cast %377 : vector<1x2x8x16xf32> to vector<2x8x16xf32>
    %379 = vector.extract_strided_slice %251 {offsets = [7, 0, 0, 0], sizes = [1, 2, 8, 16], strides = [1, 1, 1, 1]} : vector<8x2x8x16xf32> to vector<1x2x8x16xf32>
    %380 = vector.shape_cast %379 : vector<1x2x8x16xf32> to vector<2x8x16xf32>
    %381 = vector.shape_cast %366 : vector<2x8x16xf32> to vector<2x1x8x16xf32>
    %382 = vector.shape_cast %368 : vector<2x8x16xf32> to vector<2x1x8x16xf32>
    %383 = vector.shape_cast %370 : vector<2x8x16xf32> to vector<2x1x8x16xf32>
    %384 = vector.shape_cast %372 : vector<2x8x16xf32> to vector<2x1x8x16xf32>
    %385 = vector.shape_cast %374 : vector<2x8x16xf32> to vector<2x1x8x16xf32>
    %386 = vector.shape_cast %376 : vector<2x8x16xf32> to vector<2x1x8x16xf32>
    %387 = vector.shape_cast %378 : vector<2x8x16xf32> to vector<2x1x8x16xf32>
    %388 = vector.shape_cast %380 : vector<2x8x16xf32> to vector<2x1x8x16xf32>
    %389 = tpu.concatenate %381, %382, %383, %384, %385, %386, %387, %388 in 1 : vector<2x1x8x16xf32>, vector<2x1x8x16xf32>, vector<2x1x8x16xf32>, vector<2x1x8x16xf32>, vector<2x1x8x16xf32>, vector<2x1x8x16xf32>, vector<2x1x8x16xf32>, vector<2x1x8x16xf32> -> vector<2x8x8x16xf32>
    %c0_76 = arith.constant 0 : index
    %c0_77 = arith.constant 0 : index
    %c0_78 = arith.constant 0 : index
    %c0_79 = arith.constant 0 : index
    %390 = vector.load %arg18[%c0_76, %c0_77, %c0_78, %c0_79] : memref<2x8x8x16xf32, #tpu.memory_space<vmem>>, vector<2x8x8x16xf32>
    tpu.vector_store %arg18[%c0_76, %c0_77, %c0_78, %c0_79], %389 {strides = array<i32>} : memref<2x8x8x16xf32, #tpu.memory_space<vmem>>, vector<2x8x8x16xf32>,
    return
  }
  func.func @transform_0(%arg0: i32) -> (i32, i32, i32) {
    %c0_i32 = arith.constant 0 : i32
    %c0_i32_0 = arith.constant 0 : i32
    %c0_i32_1 = arith.constant 0 : i32
    return %arg0, %c0_i32, %c0_i32_0 : i32, i32, i32
  }
  func.func @transform_1(%arg0: i32) -> (i32, i32, i32) {
    %c0_i32 = arith.constant 0 : i32
    %c0_i32_0 = arith.constant 0 : i32
    %c0_i32_1 = arith.constant 0 : i32
    return %arg0, %c0_i32, %c0_i32_0 : i32, i32, i32
  }
  func.func @transform_2(%arg0: i32) -> (i32, i32, i32) {
    %c0_i32 = arith.constant 0 : i32
    %c0_i32_0 = arith.constant 0 : i32
    %c0_i32_1 = arith.constant 0 : i32
    return %arg0, %c0_i32, %c0_i32_0 : i32, i32, i32
  }
  func.func @transform_3(%arg0: i32) -> (i32, i32, i32) {
    %c0_i32 = arith.constant 0 : i32
    %c0_i32_0 = arith.constant 0 : i32
    %c0_i32_1 = arith.constant 0 : i32
    return %arg0, %c0_i32, %c0_i32_0 : i32, i32, i32
  }
  func.func @transform_4(%arg0: i32) -> (i32, i32) {
    %c0_i32 = arith.constant 0 : i32
    %c0_i32_0 = arith.constant 0 : i32
    %c0_i32_1 = arith.constant 0 : i32
    return %c0_i32, %c0_i32_0 : i32, i32
  }
  func.func @transform_5(%arg0: i32) -> (i32, i32) {
    %c0_i32 = arith.constant 0 : i32
    %c0_i32_0 = arith.constant 0 : i32
    %c0_i32_1 = arith.constant 0 : i32
    return %c0_i32, %c0_i32_0 : i32, i32
  }
  func.func @transform_6(%arg0: i32) -> (i32, i32) {
    %c0_i32 = arith.constant 0 : i32
    %c0_i32_0 = arith.constant 0 : i32
    %c0_i32_1 = arith.constant 0 : i32
    return %c0_i32, %c0_i32_0 : i32, i32
  }
  func.func @transform_7(%arg0: i32) -> (i32, i32) {
    %c0_i32 = arith.constant 0 : i32
    %c0_i32_0 = arith.constant 0 : i32
    %c0_i32_1 = arith.constant 0 : i32
    return %c0_i32, %c0_i32_0 : i32, i32
  }
  func.func @transform_8(%arg0: i32) -> (i32, i32) {
    %c0_i32 = arith.constant 0 : i32
    %c0_i32_0 = arith.constant 0 : i32
    %c0_i32_1 = arith.constant 0 : i32
    return %c0_i32, %c0_i32_0 : i32, i32
  }
  func.func @transform_9(%arg0: i32) -> (i32, i32) {
    %c0_i32 = arith.constant 0 : i32
    %c0_i32_0 = arith.constant 0 : i32
    %c0_i32_1 = arith.constant 0 : i32
    return %c0_i32, %c0_i32_0 : i32, i32
  }
  func.func @transform_10(%arg0: i32) -> (i32, i32) {
    %c0_i32 = arith.constant 0 : i32
    %c0_i32_0 = arith.constant 0 : i32
    %c0_i32_1 = arith.constant 0 : i32
    return %c0_i32, %c0_i32_0 : i32, i32
  }
  func.func @transform_11(%arg0: i32) -> (i32, i32) {
    %c0_i32 = arith.constant 0 : i32
    %c0_i32_0 = arith.constant 0 : i32
    %c0_i32_1 = arith.constant 0 : i32
    return %c0_i32, %c0_i32_0 : i32, i32
  }
  func.func @transform_12(%arg0: i32) -> (i32, i32) {
    %c0_i32 = arith.constant 0 : i32
    %c0_i32_0 = arith.constant 0 : i32
    %c0_i32_1 = arith.constant 0 : i32
    return %c0_i32, %c0_i32_0 : i32, i32
  }
  func.func @transform_13(%arg0: i32) -> (i32, i32) {
    %c0_i32 = arith.constant 0 : i32
    %c0_i32_0 = arith.constant 0 : i32
    %c0_i32_1 = arith.constant 0 : i32
    return %c0_i32, %c0_i32_0 : i32, i32
  }
  func.func @transform_14(%arg0: i32) -> (i32, i32) {
    %c0_i32 = arith.constant 0 : i32
    %c0_i32_0 = arith.constant 0 : i32
    %c0_i32_1 = arith.constant 0 : i32
    return %c0_i32, %c0_i32_0 : i32, i32
  }
  func.func @transform_15(%arg0: i32) -> (i32, i32, i32) {
    %c0_i32 = arith.constant 0 : i32
    %c0_i32_0 = arith.constant 0 : i32
    %c0_i32_1 = arith.constant 0 : i32
    return %arg0, %c0_i32, %c0_i32_0 : i32, i32, i32
  }
  func.func @transform_16(%arg0: i32) -> (i32, i32, i32, i32) {
    %c0_i32 = arith.constant 0 : i32
    %c0_i32_0 = arith.constant 0 : i32
    %c0_i32_1 = arith.constant 0 : i32
    %c0_i32_2 = arith.constant 0 : i32
    return %arg0, %c0_i32, %c0_i32_0, %c0_i32_1 : i32, i32, i32, i32
  }
  func.func @transform_17(%arg0: i32) -> (i32, i32, i32, i32) {
    %c0_i32 = arith.constant 0 : i32
    %c0_i32_0 = arith.constant 0 : i32
    %c0_i32_1 = arith.constant 0 : i32
    %c0_i32_2 = arith.constant 0 : i32
    return %arg0, %c0_i32, %c0_i32_0, %c0_i32_1 : i32, i32, i32, i32
  }
}

</mosaic_0001>

<llo_original>
// kernel: tpu_custom_call.1
$region0: #{tpu_custom_call.1}
  #allocation0 [shape = 'u32[]', space=smem, size = 0x4, offset = 0x4, fixed_abs, tag = 'smem constant byte address 0x4 - core index']
  #allocation1 [shape = 'u32[144,128]{1,0:T(1,128)}', space=vmem, size = 0x12000, scoped, tag = 'internal scratch']
  %s0 = inlined_call_operand.hbm [shape: f32[2,8,128], index: 0, kind: input, shape index: {}]
  %s1 = inlined_call_operand.hbm [shape: f32[2,16,128], index: 1, kind: input, shape index: {}]
  %s2 = inlined_call_operand.hbm [shape: bf16[2,8,8], index: 2, kind: input, shape index: {}]
  %s3 = inlined_call_operand.vmem [shape: bf16[2,8,16], index: 3, kind: input, shape index: {}]
  %s4 = inlined_call_operand.hbm [shape: bf16[128,384], index: 4, kind: input, shape index: {}]
  %s5 = inlined_call_operand.hbm [shape: bf16[128,128], index: 5, kind: input, shape index: {}]
  %s6 = inlined_call_operand.hbm [shape: bf16[128,128], index: 6, kind: input, shape index: {}]
  %s7 = inlined_call_operand.hbm [shape: bf16[128,256], index: 7, kind: input, shape index: {}]
  %s8 = inlined_call_operand.hbm [shape: bf16[128,128], index: 8, kind: input, shape index: {}]
  %s9 = inlined_call_operand.hbm [shape: bf16[128,256], index: 9, kind: input, shape index: {}]
  %s10 = inlined_call_operand.hbm [shape: bf16[256,128], index: 10, kind: input, shape index: {}]
  %s11 = inlined_call_operand.vmem [shape: f32[1,384], index: 11, kind: input, shape index: {}]
  %s12 = inlined_call_operand.vmem [shape: f32[1,256], index: 12, kind: input, shape index: {}]
  %s13 = inlined_call_operand.vmem [shape: f32[1,256], index: 13, kind: input, shape index: {}]
  %s14 = inlined_call_operand.vmem [shape: f32[10,128], index: 14, kind: input, shape index: {}]
  %s15 = inlined_call_operand.hbm [shape: f32[2,8,128], index: 15, kind: output, shape index: {0}]
  %s16 = inlined_call_operand.hbm [shape: f32[2,8,8,8], index: 16, kind: output, shape index: {1}]
  %s17 = inlined_call_operand.hbm [shape: f32[2,8,8,16], index: 17, kind: output, shape index: {2}]
  %18 = xla_tuple %s15, %s16, %s17
  %s19 = sld [smem:[#allocation0]]
  $region126: #{tpu_custom_call.1} parent=0
    _
  %s21 = ssub.s32 1, %s19
  %s22 = scalar_select 0, %s21, %s19
  $region1: #{tpu_custom_call.1} parent=0
    #allocation2 [shape = 'u8[8192]{0}', space=vmem, size = 0x2000, scoped, tag = 'input window, operand 0, single buffered']
    #allocation3 [shape = 's32[1]{0}', space=sflag, size = 0x4, scoped, tag = 'scoped memory for tpu_custom_call.1']
    #allocation4 [shape = 's32[1]{0}', space=sflag, size = 0x4, scoped, tag = 'scoped memory for tpu_custom_call.1']
    #allocation5 [shape = 'u8[16384]{0}', space=vmem, size = 0x4000, scoped, tag = 'input window, operand 1, single buffered']
    #allocation6 [shape = 's32[1]{0}', space=sflag, size = 0x4, scoped, tag = 'scoped memory for tpu_custom_call.1']
    #allocation7 [shape = 'u8[4096]{0}', space=vmem, size = 0x1000, scoped, tag = 'input window, operand 2, single buffered']
    #allocation8 [shape = 'u8[98304]{0}', space=vmem, size = 0x18000, scoped, tag = 'input window, operand 4, single buffered']
    #allocation9 [shape = 's32[1]{0}', space=sflag, size = 0x4, scoped, tag = 'scoped memory for tpu_custom_call.1']
    #allocation10 [shape = 'u8[32768]{0}', space=vmem, size = 0x8000, scoped, tag = 'input window, operand 5, single buffered']
    #allocation11 [shape = 'u8[32768]{0}', space=vmem, size = 0x8000, scoped, tag = 'input window, operand 6, single buffered']
    #allocation12 [shape = 's32[1]{0}', space=sflag, size = 0x4, scoped, tag = 'scoped memory for tpu_custom_call.1']
    #allocation13 [shape = 'u8[65536]{0}', space=vmem, size = 0x10000, scoped, tag = 'input window, operand 7, single buffered']
    #allocation14 [shape = 'u8[32768]{0}', space=vmem, size = 0x8000, scoped, tag = 'input window, operand 8, single buffered']
    #allocation15 [shape = 's32[1]{0}', space=sflag, size = 0x4, scoped, tag = 'scoped memory for tpu_custom_call.1']
    #allocation16 [shape = 'u8[65536]{0}', space=vmem, size = 0x10000, scoped, tag = 'input window, operand 9, single buffered']
    #allocation17 [shape = 'u8[65536]{0}', space=vmem, size = 0x10000, scoped, tag = 'input window, operand 10, single buffered']
    #allocation18 [shape = 's32[1]{0}', space=sflag, size = 0x4, scoped, tag = 'scoped memory for tpu_custom_call.1']
    #allocation19 [shape = 'u8[8192]{0}', space=vmem, size = 0x2000, scoped, tag = 'output window, operand 0, single buffered']
    #allocation20 [shape = 'u8[65536]{0}', space=vmem, size = 0x10000, scoped, tag = 'output window, operand 1, single buffered']
    #allocation21 [shape = 's32[1]{0}', space=sflag, size = 0x4, scoped, tag = 'scoped memory for tpu_custom_call.1']
    #allocation22 [shape = 'u8[65536]{0}', space=vmem, size = 0x10000, scoped, tag = 'output window, operand 2, single buffered']
    %23 = vsyncpa [#allocation3], 0
    %24 = vsyncpa [#allocation6], 0
    %25 = vsyncpa [#allocation9], 0
    %26 = vsyncpa [#allocation12], 0
    %27 = vsyncpa [#allocation15], 0
    %28 = vsyncpa [#allocation18], 0
    %29 = vsyncpa [#allocation4], 0
    %30 = vsyncpa [#allocation21], 0
    // Predicated region
    $region2: #{tpu_custom_call.1} parent=1 // pred_check
      _
    $region3: #{tpu_custom_call.1} parent=1 // pred_check_branch
      %32 = sbr.rel (0) target = $region5
    $region4: #{tpu_custom_call.1} parent=1 // pred_region
      %s34 = ssub.s32 256, 256
      %35 = vsyncadd [#allocation3], %s34
      %s36 = sshll.u32 [#allocation2], 4
      %s37 = int_to_ptr.vmem [resolvable:$true] %s36
      %42 = dma.hbm_to_vmem [thread:$0]  %s0, 256, %s37, [#allocation3], 128, 128, 8
    $region5: #{tpu_custom_call.1} parent=1 // pred_fallthru
      _
    // Predicated region
    $region6: #{tpu_custom_call.1} parent=1 // pred_check
      _
    $region7: #{tpu_custom_call.1} parent=1 // pred_check_branch
      %44 = sbr.rel (0) target = $region9
    $region8: #{tpu_custom_call.1} parent=1 // pred_region
      %s46 = ssub.s32 512, 512
      %47 = vsyncadd [#allocation6], %s46
      %s48 = sshll.u32 [#allocation5], 4
      %s49 = int_to_ptr.vmem [resolvable:$true] %s48
      %54 = dma.hbm_to_vmem [thread:$0]  %s1, 512, %s49, [#allocation6], 128, 128, 8
    $region9: #{tpu_custom_call.1} parent=1 // pred_fallthru
      _
    // Predicated region
    $region10: #{tpu_custom_call.1} parent=1 // pred_check
      _
    $region11: #{tpu_custom_call.1} parent=1 // pred_check_branch
      %56 = sbr.rel (0) target = $region13
    $region12: #{tpu_custom_call.1} parent=1 // pred_region
      %s58 = ssub.s32 128, 128
      %59 = vsyncadd [#allocation6], %s58
      %s60 = sshll.u32 [#allocation7], 4
      %s61 = int_to_ptr.vmem [resolvable:$true] %s60
      %66 = dma.hbm_to_vmem [thread:$0]  %s2, 128, %s61, [#allocation6], 64, 64, 4
    $region13: #{tpu_custom_call.1} parent=1 // pred_fallthru
      _
    // Predicated region
    $region14: #{tpu_custom_call.1} parent=1 // pred_check
      _
    $region15: #{tpu_custom_call.1} parent=1 // pred_check_branch
      %68 = sbr.rel (0) target = $region17
    $region16: #{tpu_custom_call.1} parent=1 // pred_region
      _
    $region17: #{tpu_custom_call.1} parent=1 // pred_fallthru
      _
    // Predicated region
    $region18: #{tpu_custom_call.1} parent=1 // pred_check
      _
    $region19: #{tpu_custom_call.1} parent=1 // pred_check_branch
      %70 = sbr.rel (0) target = $region21
    $region20: #{tpu_custom_call.1} parent=1 // pred_region
      %s72 = ssub.s32 3072, 3072
      %73 = vsyncadd [#allocation9], %s72
      %s74 = sshll.u32 [#allocation8], 4
      %s75 = int_to_ptr.vmem [resolvable:$true] %s74
      %80 = dma.hbm_to_vmem [thread:$0]  %s4, 3072, %s75, [#allocation9], 192, 192, 12
    $region21: #{tpu_custom_call.1} parent=1 // pred_fallthru
      _
    // Predicated region
    $region22: #{tpu_custom_call.1} parent=1 // pred_check
      _
    $region23: #{tpu_custom_call.1} parent=1 // pred_check_branch
      %82 = sbr.rel (0) target = $region25
    $region24: #{tpu_custom_call.1} parent=1 // pred_region
      %s84 = ssub.s32 1024, 1024
      %85 = vsyncadd [#allocation9], %s84
      %s86 = sshll.u32 [#allocation10], 4
      %s87 = int_to_ptr.vmem [resolvable:$true] %s86
      %92 = dma.hbm_to_vmem [thread:$0]  %s5, 1024, %s87, [#allocation9], 64, 64, 4
    $region25: #{tpu_custom_call.1} parent=1 // pred_fallthru
      _
    // Predicated region
    $region26: #{tpu_custom_call.1} parent=1 // pred_check
      _
    $region27: #{tpu_custom_call.1} parent=1 // pred_check_branch
      %94 = sbr.rel (0) target = $region29
    $region28: #{tpu_custom_call.1} parent=1 // pred_region
      %s96 = ssub.s32 1024, 1024
      %97 = vsyncadd [#allocation12], %s96
      %s98 = sshll.u32 [#allocation11], 4
      %s99 = int_to_ptr.vmem [resolvable:$true] %s98
      %104 = dma.hbm_to_vmem [thread:$0]  %s6, 1024, %s99, [#allocation12], 64, 64, 4
    $region29: #{tpu_custom_call.1} parent=1 // pred_fallthru
      _
    // Predicated region
    $region30: #{tpu_custom_call.1} parent=1 // pred_check
      _
    $region31: #{tpu_custom_call.1} parent=1 // pred_check_branch
      %106 = sbr.rel (0) target = $region33
    $region32: #{tpu_custom_call.1} parent=1 // pred_region
      %s108 = ssub.s32 2048, 2048
      %109 = vsyncadd [#allocation12], %s108
      %s110 = sshll.u32 [#allocation13], 4
      %s111 = int_to_ptr.vmem [resolvable:$true] %s110
      %116 = dma.hbm_to_vmem [thread:$0]  %s7, 2048, %s111, [#allocation12], 128, 128, 8
    $region33: #{tpu_custom_call.1} parent=1 // pred_fallthru
      _
    // Predicated region
    $region34: #{tpu_custom_call.1} parent=1 // pred_check
      _
    $region35: #{tpu_custom_call.1} parent=1 // pred_check_branch
      %118 = sbr.rel (0) target = $region37
    $region36: #{tpu_custom_call.1} parent=1 // pred_region
      %s120 = ssub.s32 1024, 1024
      %121 = vsyncadd [#allocation15], %s120
      %s122 = sshll.u32 [#allocation14], 4
      %s123 = int_to_ptr.vmem [resolvable:$true] %s122
      %128 = dma.hbm_to_vmem [thread:$0]  %s8, 1024, %s123, [#allocation15], 64, 64, 4
    $region37: #{tpu_custom_call.1} parent=1 // pred_fallthru
      _
    // Predicated region
    $region38: #{tpu_custom_call.1} parent=1 // pred_check
      _
    $region39: #{tpu_custom_call.1} parent=1 // pred_check_branch
      %130 = sbr.rel (0) target = $region41
    $region40: #{tpu_custom_call.1} parent=1 // pred_region
      %s132 = ssub.s32 2048, 2048
      %133 = vsyncadd [#allocation15], %s132
      %s134 = sshll.u32 [#allocation16], 4
      %s135 = int_to_ptr.vmem [resolvable:$true] %s134
      %140 = dma.hbm_to_vmem [thread:$0]  %s9, 2048, %s135, [#allocation15], 128, 128, 8
    $region41: #{tpu_custom_call.1} parent=1 // pred_fallthru
      _
    // Predicated region
    $region42: #{tpu_custom_call.1} parent=1 // pred_check
      _
    $region43: #{tpu_custom_call.1} parent=1 // pred_check_branch
      %142 = sbr.rel (0) target = $region45
    $region44: #{tpu_custom_call.1} parent=1 // pred_region
      %s144 = ssub.s32 2048, 2048
      %145 = vsyncadd [#allocation18], %s144
      %s146 = sshll.u32 [#allocation17], 4
      %s147 = int_to_ptr.vmem [resolvable:$true] %s146
      %152 = dma.hbm_to_vmem [thread:$0]  %s10, 2048, %s147, [#allocation18], 64, 64, 4
    $region45: #{tpu_custom_call.1} parent=1 // pred_fallthru
      _
    // Predicated region
    $region46: #{tpu_custom_call.1} parent=1 // pred_check
      _
    $region47: #{tpu_custom_call.1} parent=1 // pred_check_branch
      %154 = sbr.rel (0) target = $region49
    $region48: #{tpu_custom_call.1} parent=1 // pred_region
      _
    $region49: #{tpu_custom_call.1} parent=1 // pred_fallthru
      _
    // Predicated region
    $region50: #{tpu_custom_call.1} parent=1 // pred_check
      _
    $region51: #{tpu_custom_call.1} parent=1 // pred_check_branch
      %156 = sbr.rel (0) target = $region53
    $region52: #{tpu_custom_call.1} parent=1 // pred_region
      _
    $region53: #{tpu_custom_call.1} parent=1 // pred_fallthru
      _
    // Predicated region
    $region54: #{tpu_custom_call.1} parent=1 // pred_check
      _
    $region55: #{tpu_custom_call.1} parent=1 // pred_check_branch
      %158 = sbr.rel (0) target = $region57
    $region56: #{tpu_custom_call.1} parent=1 // pred_region
      _
    $region57: #{tpu_custom_call.1} parent=1 // pred_fallthru
      _
    // Predicated region
    $region58: #{tpu_custom_call.1} parent=1 // pred_check
      _
    $region59: #{tpu_custom_call.1} parent=1 // pred_check_branch
      %160 = sbr.rel (0) target = $region61
    $region60: #{tpu_custom_call.1} parent=1 // pred_region
      _
    $region61: #{tpu_custom_call.1} parent=1 // pred_fallthru
      _
    // Predicated region
    $region62: #{tpu_custom_call.1} parent=1 // pred_check
      _
    $region63: #{tpu_custom_call.1} parent=1 // pred_check_branch
      %162 = sbr.rel (0) target = $region65
    $region64: #{tpu_custom_call.1} parent=1 // pred_region
      %163 = dma.done [#allocation3], 256
    $region65: #{tpu_custom_call.1} parent=1 // pred_fallthru
      _
    // Predicated region
    $region66: #{tpu_custom_call.1} parent=1 // pred_check
      _
    $region67: #{tpu_custom_call.1} parent=1 // pred_check_branch
      %165 = sbr.rel (0) target = $region69
    $region68: #{tpu_custom_call.1} parent=1 // pred_region
      %166 = dma.done [#allocation6], 512
    $region69: #{tpu_custom_call.1} parent=1 // pred_fallthru
      _
    // Predicated region
    $region70: #{tpu_custom_call.1} parent=1 // pred_check
      _
    $region71: #{tpu_custom_call.1} parent=1 // pred_check_branch
      %168 = sbr.rel (0) target = $region73
    $region72: #{tpu_custom_call.1} parent=1 // pred_region
      %169 = dma.done [#allocation6], 128
    $region73: #{tpu_custom_call.1} parent=1 // pred_fallthru
      _
    // Predicated region
    $region74: #{tpu_custom_call.1} parent=1 // pred_check
      _
    $region75: #{tpu_custom_call.1} parent=1 // pred_check_branch
      %171 = sbr.rel (0) target = $region77
    $region76: #{tpu_custom_call.1} parent=1 // pred_region
      %172 = dma.done [#allocation9], 3072
    $region77: #{tpu_custom_call.1} parent=1 // pred_fallthru
      _
    // Predicated region
    $region78: #{tpu_custom_call.1} parent=1 // pred_check
      _
    $region79: #{tpu_custom_call.1} parent=1 // pred_check_branch
      %174 = sbr.rel (0) target = $region81
    $region80: #{tpu_custom_call.1} parent=1 // pred_region
      %175 = dma.done [#allocation9], 1024
    $region81: #{tpu_custom_call.1} parent=1 // pred_fallthru
      _
    // Predicated region
    $region82: #{tpu_custom_call.1} parent=1 // pred_check
      _
    $region83: #{tpu_custom_call.1} parent=1 // pred_check_branch
      %177 = sbr.rel (0) target = $region85
    $region84: #{tpu_custom_call.1} parent=1 // pred_region
      %178 = dma.done [#allocation12], 1024
    $region85: #{tpu_custom_call.1} parent=1 // pred_fallthru
      _
    // Predicated region
    $region86: #{tpu_custom_call.1} parent=1 // pred_check
      _
    $region87: #{tpu_custom_call.1} parent=1 // pred_check_branch
      %180 = sbr.rel (0) target = $region89
    $region88: #{tpu_custom_call.1} parent=1 // pred_region
      %181 = dma.done [#allocation12], 2048
    $region89: #{tpu_custom_call.1} parent=1 // pred_fallthru
      _
    // Predicated region
    $region90: #{tpu_custom_call.1} parent=1 // pred_check
      _
    $region91: #{tpu_custom_call.1} parent=1 // pred_check_branch
      %183 = sbr.rel (0) target = $region93
    $region92: #{tpu_custom_call.1} parent=1 // pred_region
      %184 = dma.done [#allocation15], 1024
    $region93: #{tpu_custom_call.1} parent=1 // pred_fallthru
      _
    // Predicated region
    $region94: #{tpu_custom_call.1} parent=1 // pred_check
      _
    $region95: #{tpu_custom_call.1} parent=1 // pred_check_branch
      %186 = sbr.rel (0) target = $region97
    $region96: #{tpu_custom_call.1} parent=1 // pred_region
      %187 = dma.done [#allocation15], 2048
    $region97: #{tpu_custom_call.1} parent=1 // pred_fallthru
      _
    // Predicated region
    $region98: #{tpu_custom_call.1} parent=1 // pred_check
      _
    $region99: #{tpu_custom_call.1} parent=1 // pred_check_branch
      %189 = sbr.rel (0) target = $region101
    $region100: #{tpu_custom_call.1} parent=1 // pred_region
      %190 = dma.done [#allocation18], 2048
    $region101: #{tpu_custom_call.1} parent=1 // pred_fallthru
      _
    %v192 = vld [vmem:[#allocation2] sm:$0xff]
    %v193 = vld [vmem:[#allocation2 + $0x8] sm:$0xff]
    %v194 = vld [vmem:[#allocation5] sm:$0xff]
    %v195 = vld [vmem:[#allocation5 + $0x8] sm:$0xff]
    %v196 = vld [vmem:[#allocation5 + $0x10] sm:$0xff]
    %v197 = vld [vmem:[#allocation5 + $0x18] sm:$0xff]
    %v198 = vld [vmem:[#allocation7] sm:$0xf]
    %v199 = vld [vmem:[#allocation7 + $0x4] sm:$0xf]
    %v200 = vunpack.c.l.bf16 %v198
    %v201 = vunpack.c.l.bf16 %v199
    %v202 = vsub.f32 %v200, 1.0
    %v203 = vsub.f32 %v201, 1.0
    %v204 = vmul.f32 %v202, 1e+09
    %v205 = vmul.f32 %v203, 1e+09
    %v206 = vld [vmem:[%s3] sm:$0xf]
    %v207 = vld [vmem:[%s3 + $0x4] sm:$0xf]
    %v208 = vunpack.c.l.bf16 %v206
    %v209 = vunpack.c.l.bf16 %v207
    %v210 = vsub.f32 %v208, 1.0
    %v211 = vsub.f32 %v209, 1.0
    %v212 = vmul.f32 %v210, 1e+09
    %v213 = vmul.f32 %v211, 1e+09
    %v214 = vld [vmem:[%s14] sm:$0xff]
    %v215 = vld [vmem:[%s14 + $0x8] sm:$0x3]
    %v216 = vpack.c.bf16 %v193, %v192
    %v217 = vld [vmem:[#allocation8] sm:$0xff]
    %v218 = vld [vmem:[#allocation8 + $0x8] sm:$0xf]
    %v219 = vld [vmem:[#allocation8 + $0xc] sm:$0xff]
    %v220 = vld [vmem:[#allocation8 + $0x14] sm:$0xf]
    %v221 = vld [vmem:[#allocation8 + $0x18] sm:$0xff]
    %v222 = vld [vmem:[#allocation8 + $0x20] sm:$0xf]
    %v223 = vld [vmem:[#allocation8 + $0x24] sm:$0xff]
    %v224 = vld [vmem:[#allocation8 + $0x2c] sm:$0xf]
    %v225 = vld [vmem:[#allocation8 + $0x30] sm:$0xff]
    %v226 = vld [vmem:[#allocation8 + $0x38] sm:$0xf]
    %v227 = vld [vmem:[#allocation8 + $0x3c] sm:$0xff]
    %v228 = vld [vmem:[#allocation8 + $0x44] sm:$0xf]
    %v229 = vld [vmem:[#allocation8 + $0x48] sm:$0xff]
    %v230 = vld [vmem:[#allocation8 + $0x50] sm:$0xf]
    %v231 = vld [vmem:[#allocation8 + $0x54] sm:$0xff]
    %v232 = vld [vmem:[#allocation8 + $0x5c] sm:$0xf]
    %v233 = vld [vmem:[#allocation8 + $0x60] sm:$0xff]
    %v234 = vld [vmem:[#allocation8 + $0x68] sm:$0xf]
    %v235 = vld [vmem:[#allocation8 + $0x6c] sm:$0xff]
    %v236 = vld [vmem:[#allocation8 + $0x74] sm:$0xf]
    %v237 = vld [vmem:[#allocation8 + $0x78] sm:$0xff]
    %v238 = vld [vmem:[#allocation8 + $0x80] sm:$0xf]
    %v239 = vld [vmem:[#allocation8 + $0x84] sm:$0xff]
    %v240 = vld [vmem:[#allocation8 + $0x8c] sm:$0xf]
    %v241 = vld [vmem:[#allocation8 + $0x90] sm:$0xff]
    %v242 = vld [vmem:[#allocation8 + $0x98] sm:$0xf]
    %v243 = vld [vmem:[#allocation8 + $0x9c] sm:$0xff]
    %v244 = vld [vmem:[#allocation8 + $0xa4] sm:$0xf]
    %v245 = vld [vmem:[#allocation8 + $0xa8] sm:$0xff]
    %v246 = vld [vmem:[#allocation8 + $0xb0] sm:$0xf]
    %v247 = vld [vmem:[#allocation8 + $0xb4] sm:$0xff]
    %v248 = vld [vmem:[#allocation8 + $0xbc] sm:$0xf]
    %v249 = vld [vmem:[%s11] sm:$0x7]
    %v251 = vlaneseq
    %v252 = vshrl.u32 %v251, 7
    %v253 = vsub.s32 0, %v252
    %v254 = vrot.slane %v249, %v253
    %v255 = vlaneseq
    %v256 = vshrl.u32 %v255, 7
    %v257 = vsub.s32 1, %v256
    %v258 = vrot.slane %v249, %v257
    %v259 = vlaneseq
    %v260 = vshrl.u32 %v259, 7
    %v261 = vsub.s32 2, %v260
    %v262 = vrot.slane %v249, %v261
    %v298 = vunpack.c.l.b16 %v217
    %v299 = vunpack.c.h.b16 %v217
    %v300 = vunpack.c.l.b16 %v218
    %v301 = vunpack.c.l.b16 %v219
    %v302 = vunpack.c.h.b16 %v219
    %v303 = vunpack.c.l.b16 %v220
    %v304 = vunpack.c.l.b16 %v221
    %v305 = vunpack.c.h.b16 %v221
    %v306 = vunpack.c.l.b16 %v222
    %v307 = vunpack.c.l.b16 %v223
    %v308 = vunpack.c.h.b16 %v223
    %v309 = vunpack.c.l.b16 %v224
    %v310 = vunpack.c.l.b16 %v225
    %v311 = vunpack.c.h.b16 %v225
    %v312 = vunpack.c.l.b16 %v226
    %v313 = vunpack.c.l.b16 %v227
    %v314 = vunpack.c.h.b16 %v227
    %v315 = vunpack.c.l.b16 %v228
    %v316 = vunpack.c.l.b16 %v229
    %v317 = vunpack.c.h.b16 %v229
    %v318 = vunpack.c.l.b16 %v230
    %v319 = vunpack.c.l.b16 %v231
    %v320 = vunpack.c.h.b16 %v231
    %v321 = vunpack.c.l.b16 %v232
    %v322 = vunpack.c.l.b16 %v233
    %v323 = vunpack.c.h.b16 %v233
    %v324 = vunpack.c.l.b16 %v234
    %v325 = vunpack.c.l.b16 %v235
    %v326 = vunpack.c.h.b16 %v235
    %v327 = vunpack.c.l.b16 %v236
    %v328 = vunpack.c.l.b16 %v237
    %v329 = vunpack.c.h.b16 %v237
    %v330 = vunpack.c.l.b16 %v238
    %v331 = vunpack.c.l.b16 %v239
    %v332 = vunpack.c.h.b16 %v239
    %v333 = vunpack.c.l.b16 %v240
    %v334 = vunpack.c.l.b16 %v241
    %v335 = vunpack.c.h.b16 %v241
    %v336 = vunpack.c.l.b16 %v242
    %v337 = vunpack.c.l.b16 %v243
    %v338 = vunpack.c.h.b16 %v243
    %v339 = vunpack.c.l.b16 %v244
    %v340 = vunpack.c.l.b16 %v245
    %v341 = vunpack.c.h.b16 %v245
    %v342 = vunpack.c.l.b16 %v246
    %v343 = vunpack.c.l.b16 %v247
    %v344 = vunpack.c.h.b16 %v247
    %v345 = vunpack.c.l.b16 %v248
    %v346 = vpack.c.b16 %v301, %v298
    %v347 = vpack.c.b16 %v302, %v299
    %v348 = vpack.c.b16 %v303, %v300
    %v349 = vpack.c.b16 %v307, %v304
    %v350 = vpack.c.b16 %v308, %v305
    %v351 = vpack.c.b16 %v309, %v306
    %v352 = vpack.c.b16 %v313, %v310
    %v353 = vpack.c.b16 %v314, %v311
    %v354 = vpack.c.b16 %v315, %v312
    %v355 = vpack.c.b16 %v319, %v316
    %v356 = vpack.c.b16 %v320, %v317
    %v357 = vpack.c.b16 %v321, %v318
    %v358 = vpack.c.b16 %v325, %v322
    %v359 = vpack.c.b16 %v326, %v323
    %v360 = vpack.c.b16 %v327, %v324
    %v361 = vpack.c.b16 %v331, %v328
    %v362 = vpack.c.b16 %v332, %v329
    %v363 = vpack.c.b16 %v333, %v330
    %v364 = vpack.c.b16 %v337, %v334
    %v365 = vpack.c.b16 %v338, %v335
    %v366 = vpack.c.b16 %v339, %v336
    %v367 = vpack.c.b16 %v343, %v340
    %v368 = vpack.c.b16 %v344, %v341
    %v369 = vpack.c.b16 %v345, %v342
    %394 = vmatprep.subr.bf16.mxu0 %v347
    %395 = vmatpush1.bf16.msra.mxu0 %v346
    %396 = vmatprep.subr.bf16.mxu0 %v350
    %397 = vmatpush1.bf16.msra.mxu0 %v349
    %398 = vmatprep.subr.bf16.mxu0 %v353
    %399 = vmatpush1.bf16.msra.mxu0 %v352
    %400 = vmatprep.subr.bf16.mxu0 %v356
    %401 = vmatpush1.bf16.msra.mxu0 %v355
    %402 = vmatprep.subr.bf16.mxu0 %v359
    %403 = vmatpush1.bf16.msra.mxu0 %v358
    %404 = vmatprep.subr.bf16.mxu0 %v362
    %405 = vmatpush1.bf16.msra.mxu0 %v361
    %406 = vmatprep.subr.bf16.mxu0 %v365
    %407 = vmatpush1.bf16.msra.mxu0 %v364
    %408 = vmatprep.subr.bf16.mxu0 %v368
    %409 = vmatpush1.bf16.msra.mxu0 %v367
    %410 = vmatprep.subr.bf16.mxu0 0
    %411 = vmatpush1.bf16.msra.mxu0 0
    %412 = vmatprep.subr.bf16.mxu0 0
    %413 = vmatpush1.bf16.msra.mxu0 0
    %414 = vmatprep.subr.bf16.mxu0 0
    %415 = vmatpush1.bf16.msra.mxu0 0
    %416 = vmatprep.subr.bf16.mxu0 0
    %417 = vmatpush1.bf16.msra.mxu0 0
    %418 = vmatprep.subr.bf16.mxu0 0
    %419 = vmatpush1.bf16.msra.mxu0 0
    %420 = vmatprep.subr.bf16.mxu0 0
    %421 = vmatpush1.bf16.msra.mxu0 0
    %422 = vmatprep.subr.bf16.mxu0 0
    %423 = vmatpush1.bf16.msra.mxu0 0
    %424 = vmatprep.subr.bf16.mxu0 0
    %425 = vmatpush1.bf16.msra.mxu0 0
    %426 = vmatprep.mubr.bf16.mxu0 0
    %427 = vmatmul.mubr.bf16.gmra.mrb[0].mxu0 %v216
    %v428 = vpop.f32.mrb[0].mxu0
    %v429 = vadd.f32 %v254, %v428
    %v430 = vpop.f32.mrb[0].mxu0
    %v431 = vadd.f32 %v258, %v430
    %v432 = vpop.f32.mrb[0].mxu0
    %v433 = vadd.f32 %v254, %v432
    %v434 = vpop.f32.mrb[0].mxu0
    %v435 = vadd.f32 %v258, %v434
    %436 = vdwg.mxu0
    %437 = vmatprep.subr.bf16.mxu0 0
    %438 = vmatpush1.bf16.msra.mxu0 %v348
    %439 = vmatprep.subr.bf16.mxu0 0
    %440 = vmatpush1.bf16.msra.mxu0 %v351
    %441 = vmatprep.subr.bf16.mxu0 0
    %442 = vmatpush1.bf16.msra.mxu0 %v354
    %443 = vmatprep.subr.bf16.mxu0 0
    %444 = vmatpush1.bf16.msra.mxu0 %v357
    %445 = vmatprep.subr.bf16.mxu0 0
    %446 = vmatpush1.bf16.msra.mxu0 %v360
    %447 = vmatprep.subr.bf16.mxu0 0
    %448 = vmatpush1.bf16.msra.mxu0 %v363
    %449 = vmatprep.subr.bf16.mxu0 0
    %450 = vmatpush1.bf16.msra.mxu0 %v366
    %451 = vmatprep.subr.bf16.mxu0 0
    %452 = vmatpush1.bf16.msra.mxu0 %v369
    %453 = vmatprep.subr.bf16.mxu0 0
    %454 = vmatpush1.bf16.msra.mxu0 0
    %455 = vmatprep.subr.bf16.mxu0 0
    %456 = vmatpush1.bf16.msra.mxu0 0
    %457 = vmatprep.subr.bf16.mxu0 0
    %458 = vmatpush1.bf16.msra.mxu0 0
    %459 = vmatprep.subr.bf16.mxu0 0
    %460 = vmatpush1.bf16.msra.mxu0 0
    %461 = vmatprep.subr.bf16.mxu0 0
    %462 = vmatpush1.bf16.msra.mxu0 0
    %463 = vmatprep.subr.bf16.mxu0 0
    %464 = vmatpush1.bf16.msra.mxu0 0
    %465 = vmatprep.subr.bf16.mxu0 0
    %466 = vmatpush1.bf16.msra.mxu0 0
    %467 = vmatprep.subr.bf16.mxu0 0
    %468 = vmatpush1.bf16.msra.mxu0 0
    %469 = vmatprep.mubr.bf16.mxu0 0
    %470 = vmatmul.mubr.bf16.gmra.mrb[0].mxu0 %v216
    %v471 = vpop.f32.mrb[0].mxu0
    %v472 = vadd.f32 %v262, %v471
    %v473 = vpop.f32.mrb[0].mxu0
    %v474 = vpop.f32.mrb[0].mxu0
    %v475 = vadd.f32 %v262, %v474
    %v476 = vpop.f32.mrb[0].mxu0
    %477 = vdwg.mxu0
    %v478 = vld [vmem:[#allocation10] sm:$0xf]
    %v479 = vld [vmem:[#allocation10 + $0x4] sm:$0xf]
    %v480 = vld [vmem:[#allocation10 + $0x8] sm:$0xf]
    %v481 = vld [vmem:[#allocation10 + $0xc] sm:$0xf]
    %v482 = vld [vmem:[#allocation10 + $0x10] sm:$0xf]
    %v483 = vld [vmem:[#allocation10 + $0x14] sm:$0xf]
    %v484 = vld [vmem:[#allocation10 + $0x18] sm:$0xf]
    %v485 = vld [vmem:[#allocation10 + $0x1c] sm:$0xf]
    %v486 = vld [vmem:[#allocation10 + $0x20] sm:$0xf]
    %v487 = vld [vmem:[#allocation10 + $0x24] sm:$0xf]
    %v488 = vld [vmem:[#allocation10 + $0x28] sm:$0xf]
    %v489 = vld [vmem:[#allocation10 + $0x2c] sm:$0xf]
    %v490 = vld [vmem:[#allocation10 + $0x30] sm:$0xf]
    %v491 = vld [vmem:[#allocation10 + $0x34] sm:$0xf]
    %v492 = vld [vmem:[#allocation10 + $0x38] sm:$0xf]
    %v493 = vld [vmem:[#allocation10 + $0x3c] sm:$0xf]
    %v494 = vpack.c.bf16 %v429, %v429
    %v495 = vpack.c.bf16 %v433, %v433
    %498 = vrot.lane.b32.xlu0 %v494, 112
    %v499 = vpop.permute.xlu0 %498
    %500 = vrot.lane.b32.xlu0 %v495, 112
    %v501 = vpop.permute.xlu0 %500
    %502 = vrot.lane.b32.xlu0 %v494, 96
    %v503 = vpop.permute.xlu0 %502
    %504 = vrot.lane.b32.xlu0 %v495, 96
    %v505 = vpop.permute.xlu0 %504
    %506 = vrot.lane.b32.xlu0 %v494, 80
    %v507 = vpop.permute.xlu0 %506
    %508 = vrot.lane.b32.xlu0 %v495, 80
    %v509 = vpop.permute.xlu0 %508
    %510 = vrot.lane.b32.xlu0 %v494, 64
    %v511 = vpop.permute.xlu0 %510
    %512 = vrot.lane.b32.xlu0 %v495, 64
    %v513 = vpop.permute.xlu0 %512
    %514 = vrot.lane.b32.xlu0 %v494, 48
    %v515 = vpop.permute.xlu0 %514
    %516 = vrot.lane.b32.xlu0 %v495, 48
    %v517 = vpop.permute.xlu0 %516
    %518 = vrot.lane.b32.xlu0 %v494, 32
    %v519 = vpop.permute.xlu0 %518
    %520 = vrot.lane.b32.xlu0 %v495, 32
    %v521 = vpop.permute.xlu0 %520
    %522 = vrot.lane.b32.xlu0 %v494, 16
    %v523 = vpop.permute.xlu0 %522
    %524 = vrot.lane.b32.xlu0 %v495, 16
    %v525 = vpop.permute.xlu0 %524
    %v526 = vpack.c.bf16 %v431, %v431
    %v527 = vpack.c.bf16 %v435, %v435
    %530 = vrot.lane.b32.xlu0 %v526, 112
    %v531 = vpop.permute.xlu0 %530
    %532 = vrot.lane.b32.xlu0 %v527, 112
    %v533 = vpop.permute.xlu0 %532
    %534 = vrot.lane.b32.xlu0 %v526, 96
    %v535 = vpop.permute.xlu0 %534
    %536 = vrot.lane.b32.xlu0 %v527, 96
    %v537 = vpop.permute.xlu0 %536
    %538 = vrot.lane.b32.xlu0 %v526, 80
    %v539 = vpop.permute.xlu0 %538
    %540 = vrot.lane.b32.xlu0 %v527, 80
    %v541 = vpop.permute.xlu0 %540
    %542 = vrot.lane.b32.xlu0 %v526, 64
    %v543 = vpop.permute.xlu0 %542
    %544 = vrot.lane.b32.xlu0 %v527, 64
    %v545 = vpop.permute.xlu0 %544
    %546 = vrot.lane.b32.xlu0 %v526, 48
    %v547 = vpop.permute.xlu0 %546
    %548 = vrot.lane.b32.xlu0 %v527, 48
    %v549 = vpop.permute.xlu0 %548
    %550 = vrot.lane.b32.xlu0 %v526, 32
    %v551 = vpop.permute.xlu0 %550
    %552 = vrot.lane.b32.xlu0 %v527, 32
    %v553 = vpop.permute.xlu0 %552
    %554 = vrot.lane.b32.xlu0 %v526, 16
    %v555 = vpop.permute.xlu0 %554
    %556 = vrot.lane.b32.xlu0 %v527, 16
    %v557 = vpop.permute.xlu0 %556
    %v558 = vpack.c.bf16 %v472, %v472
    %v559 = vpack.c.bf16 %v475, %v475
    %562 = vrot.lane.b32.xlu0 %v558, 112
    %v563 = vpop.permute.xlu0 %562
    %564 = vrot.lane.b32.xlu0 %v559, 112
    %v565 = vpop.permute.xlu0 %564
    %566 = vrot.lane.b32.xlu0 %v558, 96
    %v567 = vpop.permute.xlu0 %566
    %568 = vrot.lane.b32.xlu0 %v559, 96
    %v569 = vpop.permute.xlu0 %568
    %570 = vrot.lane.b32.xlu0 %v558, 80
    %v571 = vpop.permute.xlu0 %570
    %572 = vrot.lane.b32.xlu0 %v559, 80
    %v573 = vpop.permute.xlu0 %572
    %574 = vrot.lane.b32.xlu0 %v558, 64
    %v575 = vpop.permute.xlu0 %574
    %576 = vrot.lane.b32.xlu0 %v559, 64
    %v577 = vpop.permute.xlu0 %576
    %578 = vrot.lane.b32.xlu0 %v558, 48
    %v579 = vpop.permute.xlu0 %578
    %580 = vrot.lane.b32.xlu0 %v559, 48
    %v581 = vpop.permute.xlu0 %580
    %582 = vrot.lane.b32.xlu0 %v558, 32
    %v583 = vpop.permute.xlu0 %582
    %584 = vrot.lane.b32.xlu0 %v559, 32
    %v585 = vpop.permute.xlu0 %584
    %586 = vrot.lane.b32.xlu0 %v558, 16
    %v587 = vpop.permute.xlu0 %586
    %588 = vrot.lane.b32.xlu0 %v559, 16
    %v589 = vpop.permute.xlu0 %588
    %vm590 = vcmask 130048
    %v592 = vsel %vm590, %v494, 0
    %v595 = vsel %vm590, %v526, 0
    %597 = vmatprep.subr.bf16.mxu0 0
    %598 = vmatpush1.bf16.xpose.msra.mxu0 %v595
    %599 = vmatprep.subr.bf16.mxu0 0
    %600 = vmatpush1.bf16.xpose.msra.mxu0 0
    %601 = vmatprep.subr.bf16.mxu0 0
    %602 = vmatpush1.bf16.xpose.msra.mxu0 0
    %603 = vmatprep.subr.bf16.mxu0 0
    %604 = vmatpush1.bf16.xpose.msra.mxu0 0
    %605 = vmatprep.subr.bf16.mxu0 0
    %606 = vmatpush1.bf16.xpose.msra.mxu0 0
    %607 = vmatprep.subr.bf16.mxu0 0
    %608 = vmatpush1.bf16.xpose.msra.mxu0 0
    %609 = vmatprep.subr.bf16.mxu0 0
    %610 = vmatpush1.bf16.xpose.msra.mxu0 0
    %611 = vmatprep.subr.bf16.mxu0 0
    %612 = vmatpush1.bf16.xpose.msra.mxu0 0
    %613 = vmatprep.subr.bf16.mxu0 0
    %614 = vmatpush1.bf16.xpose.msra.mxu0 0
    %615 = vmatprep.subr.bf16.mxu0 0
    %616 = vmatpush1.bf16.xpose.msra.mxu0 0
    %617 = vmatprep.subr.bf16.mxu0 0
    %618 = vmatpush1.bf16.xpose.msra.mxu0 0
    %619 = vmatprep.subr.bf16.mxu0 0
    %620 = vmatpush1.bf16.xpose.msra.mxu0 0
    %621 = vmatprep.subr.bf16.mxu0 0
    %622 = vmatpush1.bf16.xpose.msra.mxu0 0
    %623 = vmatprep.subr.bf16.mxu0 0
    %624 = vmatpush1.bf16.xpose.msra.mxu0 0
    %625 = vmatprep.subr.bf16.mxu0 0
    %626 = vmatpush1.bf16.xpose.msra.mxu0 0
    %627 = vmatprep.subr.bf16.mxu0 0
    %628 = vmatpush1.bf16.xpose.msra.mxu0 0
    %629 = vmatprep.mubr.bf16.mxu0 0
    %630 = vmatmul.mubr.bf16.gmra.mrb[0].mxu0 %v592
    %v631 = vpop.f32.mrb[0].mxu0
    %v632 = vadd.f32 0.0, %v631
    %v633 = vpop.f32.mrb[0].mxu0
    %v634 = vpop.f32.mrb[0].mxu0
    %v635 = vpop.f32.mrb[0].mxu0
    %636 = vdwg.mxu0
    %v638 = vsel %vm590, %v495, 0
    %v641 = vsel %vm590, %v527, 0
    %643 = vmatprep.subr.bf16.mxu0 0
    %644 = vmatpush1.bf16.xpose.msra.mxu0 %v641
    %645 = vmatprep.subr.bf16.mxu0 0
    %646 = vmatpush1.bf16.xpose.msra.mxu0 0
    %647 = vmatprep.subr.bf16.mxu0 0
    %648 = vmatpush1.bf16.xpose.msra.mxu0 0
    %649 = vmatprep.subr.bf16.mxu0 0
    %650 = vmatpush1.bf16.xpose.msra.mxu0 0
    %651 = vmatprep.subr.bf16.mxu0 0
    %652 = vmatpush1.bf16.xpose.msra.mxu0 0
    %653 = vmatprep.subr.bf16.mxu0 0
    %654 = vmatpush1.bf16.xpose.msra.mxu0 0
    %655 = vmatprep.subr.bf16.mxu0 0
    %656 = vmatpush1.bf16.xpose.msra.mxu0 0
    %657 = vmatprep.subr.bf16.mxu0 0
    %658 = vmatpush1.bf16.xpose.msra.mxu0 0
    %659 = vmatprep.subr.bf16.mxu0 0
    %660 = vmatpush1.bf16.xpose.msra.mxu0 0
    %661 = vmatprep.subr.bf16.mxu0 0
    %662 = vmatpush1.bf16.xpose.msra.mxu0 0
    %663 = vmatprep.subr.bf16.mxu0 0
    %664 = vmatpush1.bf16.xpose.msra.mxu0 0
    %665 = vmatprep.subr.bf16.mxu0 0
    %666 = vmatpush1.bf16.xpose.msra.mxu0 0
    %667 = vmatprep.subr.bf16.mxu0 0
    %668 = vmatpush1.bf16.xpose.msra.mxu0 0
    %669 = vmatprep.subr.bf16.mxu0 0
    %670 = vmatpush1.bf16.xpose.msra.mxu0 0
    %671 = vmatprep.subr.bf16.mxu0 0
    %672 = vmatpush1.bf16.xpose.msra.mxu0 0
    %673 = vmatprep.subr.bf16.mxu0 0
    %674 = vmatpush1.bf16.xpose.msra.mxu0 0
    %675 = vmatprep.mubr.bf16.mxu0 0
    %676 = vmatmul.mubr.bf16.gmra.mrb[0].mxu0 %v638
    %v677 = vpop.f32.mrb[0].mxu0
    %v678 = vadd.f32 0.0, %v677
    %v679 = vpop.f32.mrb[0].mxu0
    %v680 = vpop.f32.mrb[0].mxu0
    %v681 = vpop.f32.mrb[0].mxu0
    %682 = vdwg.mxu0
    %v684 = vsel %vm590, %v499, 0
    %v687 = vsel %vm590, %v531, 0
    %689 = vmatprep.subr.bf16.mxu0 0
    %690 = vmatpush1.bf16.xpose.msra.mxu0 %v687
    %691 = vmatprep.subr.bf16.mxu0 0
    %692 = vmatpush1.bf16.xpose.msra.mxu0 0
    %693 = vmatprep.subr.bf16.mxu0 0
    %694 = vmatpush1.bf16.xpose.msra.mxu0 0
    %695 = vmatprep.subr.bf16.mxu0 0
    %696 = vmatpush1.bf16.xpose.msra.mxu0 0
    %697 = vmatprep.subr.bf16.mxu0 0
    %698 = vmatpush1.bf16.xpose.msra.mxu0 0
    %699 = vmatprep.subr.bf16.mxu0 0
    %700 = vmatpush1.bf16.xpose.msra.mxu0 0
    %701 = vmatprep.subr.bf16.mxu0 0
    %702 = vmatpush1.bf16.xpose.msra.mxu0 0
    %703 = vmatprep.subr.bf16.mxu0 0
    %704 = vmatpush1.bf16.xpose.msra.mxu0 0
    %705 = vmatprep.subr.bf16.mxu0 0
    %706 = vmatpush1.bf16.xpose.msra.mxu0 0
    %707 = vmatprep.subr.bf16.mxu0 0
    %708 = vmatpush1.bf16.xpose.msra.mxu0 0
    %709 = vmatprep.subr.bf16.mxu0 0
    %710 = vmatpush1.bf16.xpose.msra.mxu0 0
    %711 = vmatprep.subr.bf16.mxu0 0
    %712 = vmatpush1.bf16.xpose.msra.mxu0 0
    %713 = vmatprep.subr.bf16.mxu0 0
    %714 = vmatpush1.bf16.xpose.msra.mxu0 0
    %715 = vmatprep.subr.bf16.mxu0 0
    %716 = vmatpush1.bf16.xpose.msra.mxu0 0
    %717 = vmatprep.subr.bf16.mxu0 0
    %718 = vmatpush1.bf16.xpose.msra.mxu0 0
    %719 = vmatprep.subr.bf16.mxu0 0
    %720 = vmatpush1.bf16.xpose.msra.mxu0 0
    %721 = vmatprep.mubr.bf16.mxu0 0
    %722 = vmatmul.mubr.bf16.gmra.mrb[0].mxu0 %v684
    %v723 = vpop.f32.mrb[0].mxu0
    %v724 = vadd.f32 0.0, %v723
    %v725 = vpop.f32.mrb[0].mxu0
    %v726 = vpop.f32.mrb[0].mxu0
    %v727 = vpop.f32.mrb[0].mxu0
    %728 = vdwg.mxu0
    %v730 = vsel %vm590, %v501, 0
    %v733 = vsel %vm590, %v533, 0
    %735 = vmatprep.subr.bf16.mxu0 0
    %736 = vmatpush1.bf16.xpose.msra.mxu0 %v733
    %737 = vmatprep.subr.bf16.mxu0 0
    %738 = vmatpush1.bf16.xpose.msra.mxu0 0
    %739 = vmatprep.subr.bf16.mxu0 0
    %740 = vmatpush1.bf16.xpose.msra.mxu0 0
    %741 = vmatprep.subr.bf16.mxu0 0
    %742 = vmatpush1.bf16.xpose.msra.mxu0 0
    %743 = vmatprep.subr.bf16.mxu0 0
    %744 = vmatpush1.bf16.xpose.msra.mxu0 0
    %745 = vmatprep.subr.bf16.mxu0 0
    %746 = vmatpush1.bf16.xpose.msra.mxu0 0
    %747 = vmatprep.subr.bf16.mxu0 0
    %748 = vmatpush1.bf16.xpose.msra.mxu0 0
    %749 = vmatprep.subr.bf16.mxu0 0
    %750 = vmatpush1.bf16.xpose.msra.mxu0 0
    %751 = vmatprep.subr.bf16.mxu0 0
    %752 = vmatpush1.bf16.xpose.msra.mxu0 0
    %753 = vmatprep.subr.bf16.mxu0 0
    %754 = vmatpush1.bf16.xpose.msra.mxu0 0
    %755 = vmatprep.subr.bf16.mxu0 0
    %756 = vmatpush1.bf16.xpose.msra.mxu0 0
    %757 = vmatprep.subr.bf16.mxu0 0
    %758 = vmatpush1.bf16.xpose.msra.mxu0 0
    %759 = vmatprep.subr.bf16.mxu0 0
    %760 = vmatpush1.bf16.xpose.msra.mxu0 0
    %761 = vmatprep.subr.bf16.mxu0 0
    %762 = vmatpush1.bf16.xpose.msra.mxu0 0
    %763 = vmatprep.subr.bf16.mxu0 0
    %764 = vmatpush1.bf16.xpose.msra.mxu0 0
    %765 = vmatprep.subr.bf16.mxu0 0
    %766 = vmatpush1.bf16.xpose.msra.mxu0 0
    %767 = vmatprep.mubr.bf16.mxu0 0
    %768 = vmatmul.mubr.bf16.gmra.mrb[0].mxu0 %v730
    %v769 = vpop.f32.mrb[0].mxu0
    %v770 = vadd.f32 0.0, %v769
    %v771 = vpop.f32.mrb[0].mxu0
    %v772 = vpop.f32.mrb[0].mxu0
    %v773 = vpop.f32.mrb[0].mxu0
    %774 = vdwg.mxu0
    %v776 = vsel %vm590, %v503, 0
    %v779 = vsel %vm590, %v535, 0
    %781 = vmatprep.subr.bf16.mxu0 0
    %782 = vmatpush1.bf16.xpose.msra.mxu0 %v779
    %783 = vmatprep.subr.bf16.mxu0 0
    %784 = vmatpush1.bf16.xpose.msra.mxu0 0
    %785 = vmatprep.subr.bf16.mxu0 0
    %786 = vmatpush1.bf16.xpose.msra.mxu0 0
    %787 = vmatprep.subr.bf16.mxu0 0
    %788 = vmatpush1.bf16.xpose.msra.mxu0 0
    %789 = vmatprep.subr.bf16.mxu0 0
    %790 = vmatpush1.bf16.xpose.msra.mxu0 0
    %791 = vmatprep.subr.bf16.mxu0 0
    %792 = vmatpush1.bf16.xpose.msra.mxu0 0
    %793 = vmatprep.subr.bf16.mxu0 0
    %794 = vmatpush1.bf16.xpose.msra.mxu0 0
    %795 = vmatprep.subr.bf16.mxu0 0
    %796 = vmatpush1.bf16.xpose.msra.mxu0 0
    %797 = vmatprep.subr.bf16.mxu0 0
    %798 = vmatpush1.bf16.xpose.msra.mxu0 0
    %799 = vmatprep.subr.bf16.mxu0 0
    %800 = vmatpush1.bf16.xpose.msra.mxu0 0
    %801 = vmatprep.subr.bf16.mxu0 0
    %802 = vmatpush1.bf16.xpose.msra.mxu0 0
    %803 = vmatprep.subr.bf16.mxu0 0
    %804 = vmatpush1.bf16.xpose.msra.mxu0 0
    %805 = vmatprep.subr.bf16.mxu0 0
    %806 = vmatpush1.bf16.xpose.msra.mxu0 0
    %807 = vmatprep.subr.bf16.mxu0 0
    %808 = vmatpush1.bf16.xpose.msra.mxu0 0
    %809 = vmatprep.subr.bf16.mxu0 0
    %810 = vmatpush1.bf16.xpose.msra.mxu0 0
    %811 = vmatprep.subr.bf16.mxu0 0
    %812 = vmatpush1.bf16.xpose.msra.mxu0 0
    %813 = vmatprep.mubr.bf16.mxu0 0
    %814 = vmatmul.mubr.bf16.gmra.mrb[0].mxu0 %v776
    %v815 = vpop.f32.mrb[0].mxu0
    %v816 = vadd.f32 0.0, %v815
    %v817 = vpop.f32.mrb[0].mxu0
    %v818 = vpop.f32.mrb[0].mxu0
    %v819 = vpop.f32.mrb[0].mxu0
    %820 = vdwg.mxu0
    %v822 = vsel %vm590, %v505, 0
    %v825 = vsel %vm590, %v537, 0
    %827 = vmatprep.subr.bf16.mxu0 0
    %828 = vmatpush1.bf16.xpose.msra.mxu0 %v825
    %829 = vmatprep.subr.bf16.mxu0 0
    %830 = vmatpush1.bf16.xpose.msra.mxu0 0
    %831 = vmatprep.subr.bf16.mxu0 0
    %832 = vmatpush1.bf16.xpose.msra.mxu0 0
    %833 = vmatprep.subr.bf16.mxu0 0
    %834 = vmatpush1.bf16.xpose.msra.mxu0 0
    %835 = vmatprep.subr.bf16.mxu0 0
    %836 = vmatpush1.bf16.xpose.msra.mxu0 0
    %837 = vmatprep.subr.bf16.mxu0 0
    %838 = vmatpush1.bf16.xpose.msra.mxu0 0
    %839 = vmatprep.subr.bf16.mxu0 0
    %840 = vmatpush1.bf16.xpose.msra.mxu0 0
    %841 = vmatprep.subr.bf16.mxu0 0
    %842 = vmatpush1.bf16.xpose.msra.mxu0 0
    %843 = vmatprep.subr.bf16.mxu0 0
    %844 = vmatpush1.bf16.xpose.msra.mxu0 0
    %845 = vmatprep.subr.bf16.mxu0 0
    %846 = vmatpush1.bf16.xpose.msra.mxu0 0
    %847 = vmatprep.subr.bf16.mxu0 0
    %848 = vmatpush1.bf16.xpose.msra.mxu0 0
    %849 = vmatprep.subr.bf16.mxu0 0
    %850 = vmatpush1.bf16.xpose.msra.mxu0 0
    %851 = vmatprep.subr.bf16.mxu0 0
    %852 = vmatpush1.bf16.xpose.msra.mxu0 0
    %853 = vmatprep.subr.bf16.mxu0 0
    %854 = vmatpush1.bf16.xpose.msra.mxu0 0
    %855 = vmatprep.subr.bf16.mxu0 0
    %856 = vmatpush1.bf16.xpose.msra.mxu0 0
    %857 = vmatprep.subr.bf16.mxu0 0
    %858 = vmatpush1.bf16.xpose.msra.mxu0 0
    %859 = vmatprep.mubr.bf16.mxu0 0
    %860 = vmatmul.mubr.bf16.gmra.mrb[0].mxu0 %v822
    %v861 = vpop.f32.mrb[0].mxu0
    %v862 = vadd.f32 0.0, %v861
    %v863 = vpop.f32.mrb[0].mxu0
    %v864 = vpop.f32.mrb[0].mxu0
    %v865 = vpop.f32.mrb[0].mxu0
    %866 = vdwg.mxu0
    %v868 = vsel %vm590, %v507, 0
    %v871 = vsel %vm590, %v539, 0
    %873 = vmatprep.subr.bf16.mxu0 0
    %874 = vmatpush1.bf16.xpose.msra.mxu0 %v871
    %875 = vmatprep.subr.bf16.mxu0 0
    %876 = vmatpush1.bf16.xpose.msra.mxu0 0
    %877 = vmatprep.subr.bf16.mxu0 0
    %878 = vmatpush1.bf16.xpose.msra.mxu0 0
    %879 = vmatprep.subr.bf16.mxu0 0
    %880 = vmatpush1.bf16.xpose.msra.mxu0 0
    %881 = vmatprep.subr.bf16.mxu0 0
    %882 = vmatpush1.bf16.xpose.msra.mxu0 0
    %883 = vmatprep.subr.bf16.mxu0 0
    %884 = vmatpush1.bf16.xpose.msra.mxu0 0
    %885 = vmatprep.subr.bf16.mxu0 0
    %886 = vmatpush1.bf16.xpose.msra.mxu0 0
    %887 = vmatprep.subr.bf16.mxu0 0
    %888 = vmatpush1.bf16.xpose.msra.mxu0 0
    %889 = vmatprep.subr.bf16.mxu0 0
    %890 = vmatpush1.bf16.xpose.msra.mxu0 0
    %891 = vmatprep.subr.bf16.mxu0 0
    %892 = vmatpush1.bf16.xpose.msra.mxu0 0
    %893 = vmatprep.subr.bf16.mxu0 0
    %894 = vmatpush1.bf16.xpose.msra.mxu0 0
    %895 = vmatprep.subr.bf16.mxu0 0
    %896 = vmatpush1.bf16.xpose.msra.mxu0 0
    %897 = vmatprep.subr.bf16.mxu0 0
    %898 = vmatpush1.bf16.xpose.msra.mxu0 0
    %899 = vmatprep.subr.bf16.mxu0 0
    %900 = vmatpush1.bf16.xpose.msra.mxu0 0
    %901 = vmatprep.subr.bf16.mxu0 0
    %902 = vmatpush1.bf16.xpose.msra.mxu0 0
    %903 = vmatprep.subr.bf16.mxu0 0
    %904 = vmatpush1.bf16.xpose.msra.mxu0 0
    %905 = vmatprep.mubr.bf16.mxu0 0
    %906 = vmatmul.mubr.bf16.gmra.mrb[0].mxu0 %v868
    %v907 = vpop.f32.mrb[0].mxu0
    %v908 = vadd.f32 0.0, %v907
    %v909 = vpop.f32.mrb[0].mxu0
    %v910 = vpop.f32.mrb[0].mxu0
    %v911 = vpop.f32.mrb[0].mxu0
    %912 = vdwg.mxu0
    %v914 = vsel %vm590, %v509, 0
    %v917 = vsel %vm590, %v541, 0
    %919 = vmatprep.subr.bf16.mxu0 0
    %920 = vmatpush1.bf16.xpose.msra.mxu0 %v917
    %921 = vmatprep.subr.bf16.mxu0 0
    %922 = vmatpush1.bf16.xpose.msra.mxu0 0
    %923 = vmatprep.subr.bf16.mxu0 0
    %924 = vmatpush1.bf16.xpose.msra.mxu0 0
    %925 = vmatprep.subr.bf16.mxu0 0
    %926 = vmatpush1.bf16.xpose.msra.mxu0 0
    %927 = vmatprep.subr.bf16.mxu0 0
    %928 = vmatpush1.bf16.xpose.msra.mxu0 0
    %929 = vmatprep.subr.bf16.mxu0 0
    %930 = vmatpush1.bf16.xpose.msra.mxu0 0
    %931 = vmatprep.subr.bf16.mxu0 0
    %932 = vmatpush1.bf16.xpose.msra.mxu0 0
    %933 = vmatprep.subr.bf16.mxu0 0
    %934 = vmatpush1.bf16.xpose.msra.mxu0 0
    %935 = vmatprep.subr.bf16.mxu0 0
    %936 = vmatpush1.bf16.xpose.msra.mxu0 0
    %937 = vmatprep.subr.bf16.mxu0 0
    %938 = vmatpush1.bf16.xpose.msra.mxu0 0
    %939 = vmatprep.subr.bf16.mxu0 0
    %940 = vmatpush1.bf16.xpose.msra.mxu0 0
    %941 = vmatprep.subr.bf16.mxu0 0
    %942 = vmatpush1.bf16.xpose.msra.mxu0 0
    %943 = vmatprep.subr.bf16.mxu0 0
    %944 = vmatpush1.bf16.xpose.msra.mxu0 0
    %945 = vmatprep.subr.bf16.mxu0 0
    %946 = vmatpush1.bf16.xpose.msra.mxu0 0
    %947 = vmatprep.subr.bf16.mxu0 0
    %948 = vmatpush1.bf16.xpose.msra.mxu0 0
    %949 = vmatprep.subr.bf16.mxu0 0
    %950 = vmatpush1.bf16.xpose.msra.mxu0 0
    %951 = vmatprep.mubr.bf16.mxu0 0
    %952 = vmatmul.mubr.bf16.gmra.mrb[0].mxu0 %v914
    %v953 = vpop.f32.mrb[0].mxu0
    %v954 = vadd.f32 0.0, %v953
    %v955 = vpop.f32.mrb[0].mxu0
    %v956 = vpop.f32.mrb[0].mxu0
    %v957 = vpop.f32.mrb[0].mxu0
    %958 = vdwg.mxu0
    %v960 = vsel %vm590, %v511, 0
    %v963 = vsel %vm590, %v543, 0
    %965 = vmatprep.subr.bf16.mxu0 0
    %966 = vmatpush1.bf16.xpose.msra.mxu0 %v963
    %967 = vmatprep.subr.bf16.mxu0 0
    %968 = vmatpush1.bf16.xpose.msra.mxu0 0
    %969 = vmatprep.subr.bf16.mxu0 0
    %970 = vmatpush1.bf16.xpose.msra.mxu0 0
    %971 = vmatprep.subr.bf16.mxu0 0
    %972 = vmatpush1.bf16.xpose.msra.mxu0 0
    %973 = vmatprep.subr.bf16.mxu0 0
    %974 = vmatpush1.bf16.xpose.msra.mxu0 0
    %975 = vmatprep.subr.bf16.mxu0 0
    %976 = vmatpush1.bf16.xpose.msra.mxu0 0
    %977 = vmatprep.subr.bf16.mxu0 0
    %978 = vmatpush1.bf16.xpose.msra.mxu0 0
    %979 = vmatprep.subr.bf16.mxu0 0
    %980 = vmatpush1.bf16.xpose.msra.mxu0 0
    %981 = vmatprep.subr.bf16.mxu0 0
    %982 = vmatpush1.bf16.xpose.msra.mxu0 0
    %983 = vmatprep.subr.bf16.mxu0 0
    %984 = vmatpush1.bf16.xpose.msra.mxu0 0
    %985 = vmatprep.subr.bf16.mxu0 0
    %986 = vmatpush1.bf16.xpose.msra.mxu0 0
    %987 = vmatprep.subr.bf16.mxu0 0
    %988 = vmatpush1.bf16.xpose.msra.mxu0 0
    %989 = vmatprep.subr.bf16.mxu0 0
    %990 = vmatpush1.bf16.xpose.msra.mxu0 0
    %991 = vmatprep.subr.bf16.mxu0 0
    %992 = vmatpush1.bf16.xpose.msra.mxu0 0
    %993 = vmatprep.subr.bf16.mxu0 0
    %994 = vmatpush1.bf16.xpose.msra.mxu0 0
    %995 = vmatprep.subr.bf16.mxu0 0
    %996 = vmatpush1.bf16.xpose.msra.mxu0 0
    %997 = vmatprep.mubr.bf16.mxu0 0
    %998 = vmatmul.mubr.bf16.gmra.mrb[0].mxu0 %v960
    %v999 = vpop.f32.mrb[0].mxu0
    %v1000 = vadd.f32 0.0, %v999
    %v1001 = vpop.f32.mrb[0].mxu0
    %v1002 = vpop.f32.mrb[0].mxu0
    %v1003 = vpop.f32.mrb[0].mxu0
    %1004 = vdwg.mxu0
    %v1006 = vsel %vm590, %v513, 0
    %v1009 = vsel %vm590, %v545, 0
    %1011 = vmatprep.subr.bf16.mxu0 0
    %1012 = vmatpush1.bf16.xpose.msra.mxu0 %v1009
    %1013 = vmatprep.subr.bf16.mxu0 0
    %1014 = vmatpush1.bf16.xpose.msra.mxu0 0
    %1015 = vmatprep.subr.bf16.mxu0 0
    %1016 = vmatpush1.bf16.xpose.msra.mxu0 0
    %1017 = vmatprep.subr.bf16.mxu0 0
    %1018 = vmatpush1.bf16.xpose.msra.mxu0 0
    %1019 = vmatprep.subr.bf16.mxu0 0
    %1020 = vmatpush1.bf16.xpose.msra.mxu0 0
    %1021 = vmatprep.subr.bf16.mxu0 0
    %1022 = vmatpush1.bf16.xpose.msra.mxu0 0
    %1023 = vmatprep.subr.bf16.mxu0 0
    %1024 = vmatpush1.bf16.xpose.msra.mxu0 0
    %1025 = vmatprep.subr.bf16.mxu0 0
    %1026 = vmatpush1.bf16.xpose.msra.mxu0 0
    %1027 = vmatprep.subr.bf16.mxu0 0
    %1028 = vmatpush1.bf16.xpose.msra.mxu0 0
    %1029 = vmatprep.subr.bf16.mxu0 0
    %1030 = vmatpush1.bf16.xpose.msra.mxu0 0
    %1031 = vmatprep.subr.bf16.mxu0 0
    %1032 = vmatpush1.bf16.xpose.msra.mxu0 0
    %1033 = vmatprep.subr.bf16.mxu0 0
    %1034 = vmatpush1.bf16.xpose.msra.mxu0 0
    %1035 = vmatprep.subr.bf16.mxu0 0
    %1036 = vmatpush1.bf16.xpose.msra.mxu0 0
    %1037 = vmatprep.subr.bf16.mxu0 0
    %1038 = vmatpush1.bf16.xpose.msra.mxu0 0
    %1039 = vmatprep.subr.bf16.mxu0 0
    %1040 = vmatpush1.bf16.xpose.msra.mxu0 0
    %1041 = vmatprep.subr.bf16.mxu0 0
    %1042 = vmatpush1.bf16.xpose.msra.mxu0 0
    %1043 = vmatprep.mubr.bf16.mxu0 0
    %1044 = vmatmul.mubr.bf16.gmra.mrb[0].mxu0 %v1006
    %v1045 = vpop.f32.mrb[0].mxu0
    %v1046 = vadd.f32 0.0, %v1045
    %v1047 = vpop.f32.mrb[0].mxu0
    %v1048 = vpop.f32.mrb[0].mxu0
    %v1049 = vpop.f32.mrb[0].mxu0
    %1050 = vdwg.mxu0
    %v1052 = vsel %vm590, %v515, 0
    %v1055 = vsel %vm590, %v547, 0
    %1057 = vmatprep.subr.bf16.mxu0 0
    %1058 = vmatpush1.bf16.xpose.msra.mxu0 %v1055
    %1059 = vmatprep.subr.bf16.mxu0 0
    %1060 = vmatpush1.bf16.xpose.msra.mxu0 0
    %1061 = vmatprep.subr.bf16.mxu0 0
    %1062 = vmatpush1.bf16.xpose.msra.mxu0 0
    %1063 = vmatprep.subr.bf16.mxu0 0
    %1064 = vmatpush1.bf16.xpose.msra.mxu0 0
    %1065 = vmatprep.subr.bf16.mxu0 0
    %1066 = vmatpush1.bf16.xpose.msra.mxu0 0
    %1067 = vmatprep.subr.bf16.mxu0 0
    %1068 = vmatpush1.bf16.xpose.msra.mxu0 0
    %1069 = vmatprep.subr.bf16.mxu0 0
    %1070 = vmatpush1.bf16.xpose.msra.mxu0 0
    %1071 = vmatprep.subr.bf16.mxu0 0
    %1072 = vmatpush1.bf16.xpose.msra.mxu0 0
    %1073 = vmatprep.subr.bf16.mxu0 0
    %1074 = vmatpush1.bf16.xpose.msra.mxu0 0
    %1075 = vmatprep.subr.bf16.mxu0 0
    %1076 = vmatpush1.bf16.xpose.msra.mxu0 0
    %1077 = vmatprep.subr.bf16.mxu0 0
    %1078 = vmatpush1.bf16.xpose.msra.mxu0 0
    %1079 = vmatprep.subr.bf16.mxu0 0
    %1080 = vmatpush1.bf16.xpose.msra.mxu0 0
    %1081 = vmatprep.subr.bf16.mxu0 0
    %1082 = vmatpush1.bf16.xpose.msra.mxu0 0
    %1083 = vmatprep.subr.bf16.mxu0 0
    %1084 = vmatpush1.bf16.xpose.msra.mxu0 0
    %1085 = vmatprep.subr.bf16.mxu0 0
    %1086 = vmatpush1.bf16.xpose.msra.mxu0 0
    %1087 = vmatprep.subr.bf16.mxu0 0
    %1088 = vmatpush1.bf16.xpose.msra.mxu0 0
    %1089 = vmatprep.mubr.bf16.mxu0 0
    %1090 = vmatmul.mubr.bf16.gmra.mrb[0].mxu0 %v1052
    %v1091 = vpop.f32.mrb[0].mxu0
    %v1092 = vadd.f32 0.0, %v1091
    %v1093 = vpop.f32.mrb[0].mxu0
    %v1094 = vpop.f32.mrb[0].mxu0
    %v1095 = vpop.f32.mrb[0].mxu0
    %1096 = vdwg.mxu0
    %v1098 = vsel %vm590, %v517, 0
    %v1101 = vsel %vm590, %v549, 0
    %1103 = vmatprep.subr.bf16.mxu0 0
    %1104 = vmatpush1.bf16.xpose.msra.mxu0 %v1101
    %1105 = vmatprep.subr.bf16.mxu0 0
    %1106 = vmatpush1.bf16.xpose.msra.mxu0 0
    %1107 = vmatprep.subr.bf16.mxu0 0
    %1108 = vmatpush1.bf16.xpose.msra.mxu0 0
    %1109 = vmatprep.subr.bf16.mxu0 0
    %1110 = vmatpush1.bf16.xpose.msra.mxu0 0
    %1111 = vmatprep.subr.bf16.mxu0 0
    %1112 = vmatpush1.bf16.xpose.msra.mxu0 0
    %1113 = vmatprep.subr.bf16.mxu0 0
    %1114 = vmatpush1.bf16.xpose.msra.mxu0 0
    %1115 = vmatprep.subr.bf16.mxu0 0
    %1116 = vmatpush1.bf16.xpose.msra.mxu0 0
    %1117 = vmatprep.subr.bf16.mxu0 0
    %1118 = vmatpush1.bf16.xpose.msra.mxu0 0
    %1119 = vmatprep.subr.bf16.mxu0 0
    %1120 = vmatpush1.bf16.xpose.msra.mxu0 0
    %1121 = vmatprep.subr.bf16.mxu0 0
    %1122 = vmatpush1.bf16.xpose.msra.mxu0 0
    %1123 = vmatprep.subr.bf16.mxu0 0
    %1124 = vmatpush1.bf16.xpose.msra.mxu0 0
    %1125 = vmatprep.subr.bf16.mxu0 0
    %1126 = vmatpush1.bf16.xpose.msra.mxu0 0
    %1127 = vmatprep.subr.bf16.mxu0 0
    %1128 = vmatpush1.bf16.xpose.msra.mxu0 0
    %1129 = vmatprep.subr.bf16.mxu0 0
    %1130 = vmatpush1.bf16.xpose.msra.mxu0 0
    %1131 = vmatprep.subr.bf16.mxu0 0
    %1132 = vmatpush1.bf16.xpose.msra.mxu0 0
    %1133 = vmatprep.subr.bf16.mxu0 0
    %1134 = vmatpush1.bf16.xpose.msra.mxu0 0
    %1135 = vmatprep.mubr.bf16.mxu0 0
    %1136 = vmatmul.mubr.bf16.gmra.mrb[0].mxu0 %v1098
    %v1137 = vpop.f32.mrb[0].mxu0
    %v1138 = vadd.f32 0.0, %v1137
    %v1139 = vpop.f32.mrb[0].mxu0
    %v1140 = vpop.f32.mrb[0].mxu0
    %v1141 = vpop.f32.mrb[0].mxu0
    %1142 = vdwg.mxu0
    %v1144 = vsel %vm590, %v519, 0
    %v1147 = vsel %vm590, %v551, 0
    %1149 = vmatprep.subr.bf16.mxu0 0
    %1150 = vmatpush1.bf16.xpose.msra.mxu0 %v1147
    %1151 = vmatprep.subr.bf16.mxu0 0
    %1152 = vmatpush1.bf16.xpose.msra.mxu0 0
    %1153 = vmatprep.subr.bf16.mxu0 0
    %1154 = vmatpush1.bf16.xpose.msra.mxu0 0
    %1155 = vmatprep.subr.bf16.mxu0 0
    %1156 = vmatpush1.bf16.xpose.msra.mxu0 0
    %1157 = vmatprep.subr.bf16.mxu0 0
    %1158 = vmatpush1.bf16.xpose.msra.mxu0 0
    %1159 = vmatprep.subr.bf16.mxu0 0
    %1160 = vmatpush1.bf16.xpose.msra.mxu0 0
    %1161 = vmatprep.subr.bf16.mxu0 0
    %1162 = vmatpush1.bf16.xpose.msra.mxu0 0
    %1163 = vmatprep.subr.bf16.mxu0 0
    %1164 = vmatpush1.bf16.xpose.msra.mxu0 0
    %1165 = vmatprep.subr.bf16.mxu0 0
    %1166 = vmatpush1.bf16.xpose.msra.mxu0 0
    %1167 = vmatprep.subr.bf16.mxu0 0
    %1168 = vmatpush1.bf16.xpose.msra.mxu0 0
    %1169 = vmatprep.subr.bf16.mxu0 0
    %1170 = vmatpush1.bf16.xpose.msra.mxu0 0
    %1171 = vmatprep.subr.bf16.mxu0 0
    %1172 = vmatpush1.bf16.xpose.msra.mxu0 0
    %1173 = vmatprep.subr.bf16.mxu0 0
    %1174 = vmatpush1.bf16.xpose.msra.mxu0 0
    %1175 = vmatprep.subr.bf16.mxu0 0
    %1176 = vmatpush1.bf16.xpose.msra.mxu0 0
    %1177 = vmatprep.subr.bf16.mxu0 0
    %1178 = vmatpush1.bf16.xpose.msra.mxu0 0
    %1179 = vmatprep.subr.bf16.mxu0 0
    %1180 = vmatpush1.bf16.xpose.msra.mxu0 0
    %1181 = vmatprep.mubr.bf16.mxu0 0
    %1182 = vmatmul.mubr.bf16.gmra.mrb[0].mxu0 %v1144
    %v1183 = vpop.f32.mrb[0].mxu0
    %v1184 = vadd.f32 0.0, %v1183
    %v1185 = vpop.f32.mrb[0].mxu0
    %v1186 = vpop.f32.mrb[0].mxu0
    %v1187 = vpop.f32.mrb[0].mxu0
    %1188 = vdwg.mxu0
    %v1190 = vsel %vm590, %v521, 0
    %v1193 = vsel %vm590, %v553, 0
    %1195 = vmatprep.subr.bf16.mxu0 0
    %1196 = vmatpush1.bf16.xpose.msra.mxu0 %v1193
    %1197 = vmatprep.subr.bf16.mxu0 0
    %1198 = vmatpush1.bf16.xpose.msra.mxu0 0
    %1199 = vmatprep.subr.bf16.mxu0 0
    %1200 = vmatpush1.bf16.xpose.msra.mxu0 0
    %1201 = vmatprep.subr.bf16.mxu0 0
    %1202 = vmatpush1.bf16.xpose.msra.mxu0 0
    %1203 = vmatprep.subr.bf16.mxu0 0
    %1204 = vmatpush1.bf16.xpose.msra.mxu0 0
    %1205 = vmatprep.subr.bf16.mxu0 0
    %1206 = vmatpush1.bf16.xpose.msra.mxu0 0
    %1207 = vmatprep.subr.bf16.mxu0 0
    %1208 = vmatpush1.bf16.xpose.msra.mxu0 0
    %1209 = vmatprep.subr.bf16.mxu0 0
    %1210 = vmatpush1.bf16.xpose.msra.mxu0 0
    %1211 = vmatprep.subr.bf16.mxu0 0
    %1212 = vmatpush1.bf16.xpose.msra.mxu0 0
    %1213 = vmatprep.subr.bf16.mxu0 0
    %1214 = vmatpush1.bf16.xpose.msra.mxu0 0
    %1215 = vmatprep.subr.bf16.mxu0 0
    %1216 = vmatpush1.bf16.xpose.msra.mxu0 0
    %1217 = vmatprep.subr.bf16.mxu0 0
    %1218 = vmatpush1.bf16.xpose.msra.mxu0 0
    %1219 = vmatprep.subr.bf16.mxu0 0
    %1220 = vmatpush1.bf16.xpose.msra.mxu0 0
    %1221 = vmatprep.subr.bf16.mxu0 0
    %1222 = vmatpush1.bf16.xpose.msra.mxu0 0
    %1223 = vmatprep.subr.bf16.mxu0 0
    %1224 = vmatpush1.bf16.xpose.msra.mxu0 0
    %1225 = vmatprep.subr.bf16.mxu0 0
    %1226 = vmatpush1.bf16.xpose.msra.mxu0 0
    %1227 = vmatprep.mubr.bf16.mxu0 0
    %1228 = vmatmul.mubr.bf16.gmra.mrb[0].mxu0 %v1190
    %v1229 = vpop.f32.mrb[0].mxu0
    %v1230 = vadd.f32 0.0, %v1229
    %v1231 = vpop.f32.mrb[0].mxu0
    %v1232 = vpop.f32.mrb[0].mxu0
    %v1233 = vpop.f32.mrb[0].mxu0
    %1234 = vdwg.mxu0
    %v1236 = vsel %vm590, %v523, 0
    %v1239 = vsel %vm590, %v555, 0
    %1241 = vmatprep.subr.bf16.mxu0 0
    %1242 = vmatpush1.bf16.xpose.msra.mxu0 %v1239
    %1243 = vmatprep.subr.bf16.mxu0 0
    %1244 = vmatpush1.bf16.xpose.msra.mxu0 0
    %1245 = vmatprep.subr.bf16.mxu0 0
    %1246 = vmatpush1.bf16.xpose.msra.mxu0 0
    %1247 = vmatprep.subr.bf16.mxu0 0
    %1248 = vmatpush1.bf16.xpose.msra.mxu0 0
    %1249 = vmatprep.subr.bf16.mxu0 0
    %1250 = vmatpush1.bf16.xpose.msra.mxu0 0
    %1251 = vmatprep.subr.bf16.mxu0 0
    %1252 = vmatpush1.bf16.xpose.msra.mxu0 0
    %1253 = vmatprep.subr.bf16.mxu0 0
    %1254 = vmatpush1.bf16.xpose.msra.mxu0 0
    %1255 = vmatprep.subr.bf16.mxu0 0
    %1256 = vmatpush1.bf16.xpose.msra.mxu0 0
    %1257 = vmatprep.subr.bf16.mxu0 0
    %1258 = vmatpush1.bf16.xpose.msra.mxu0 0
    %1259 = vmatprep.subr.bf16.mxu0 0
    %1260 = vmatpush1.bf16.xpose.msra.mxu0 0
    %1261 = vmatprep.subr.bf16.mxu0 0
    %1262 = vmatpush1.bf16.xpose.msra.mxu0 0
    %1263 = vmatprep.subr.bf16.mxu0 0
    %1264 = vmatpush1.bf16.xpose.msra.mxu0 0
    %1265 = vmatprep.subr.bf16.mxu0 0
    %1266 = vmatpush1.bf16.xpose.msra.mxu0 0
    %1267 = vmatprep.subr.bf16.mxu0 0
    %1268 = vmatpush1.bf16.xpose.msra.mxu0 0
    %1269 = vmatprep.subr.bf16.mxu0 0
    %1270 = vmatpush1.bf16.xpose.msra.mxu0 0
    %1271 = vmatprep.subr.bf16.mxu0 0
    %1272 = vmatpush1.bf16.xpose.msra.mxu0 0
    %1273 = vmatprep.mubr.bf16.mxu0 0
    %1274 = vmatmul.mubr.bf16.gmra.mrb[0].mxu0 %v1236
    %v1275 = vpop.f32.mrb[0].mxu0
    %v1276 = vadd.f32 0.0, %v1275
    %v1277 = vpop.f32.mrb[0].mxu0
    %v1278 = vpop.f32.mrb[0].mxu0
    %v1279 = vpop.f32.mrb[0].mxu0
    %1280 = vdwg.mxu0
    %v1282 = vsel %vm590, %v525, 0
    %v1285 = vsel %vm590, %v557, 0
    %1287 = vmatprep.subr.bf16.mxu0 0
    %1288 = vmatpush1.bf16.xpose.msra.mxu0 %v1285
    %1289 = vmatprep.subr.bf16.mxu0 0
    %1290 = vmatpush1.bf16.xpose.msra.mxu0 0
    %1291 = vmatprep.subr.bf16.mxu0 0
    %1292 = vmatpush1.bf16.xpose.msra.mxu0 0
    %1293 = vmatprep.subr.bf16.mxu0 0
    %1294 = vmatpush1.bf16.xpose.msra.mxu0 0
    %1295 = vmatprep.subr.bf16.mxu0 0
    %1296 = vmatpush1.bf16.xpose.msra.mxu0 0
    %1297 = vmatprep.subr.bf16.mxu0 0
    %1298 = vmatpush1.bf16.xpose.msra.mxu0 0
    %1299 = vmatprep.subr.bf16.mxu0 0
    %1300 = vmatpush1.bf16.xpose.msra.mxu0 0
    %1301 = vmatprep.subr.bf16.mxu0 0
    %1302 = vmatpush1.bf16.xpose.msra.mxu0 0
    %1303 = vmatprep.subr.bf16.mxu0 0
    %1304 = vmatpush1.bf16.xpose.msra.mxu0 0
    %1305 = vmatprep.subr.bf16.mxu0 0
    %1306 = vmatpush1.bf16.xpose.msra.mxu0 0
    %1307 = vmatprep.subr.bf16.mxu0 0
    %1308 = vmatpush1.bf16.xpose.msra.mxu0 0
    %1309 = vmatprep.subr.bf16.mxu0 0
    %1310 = vmatpush1.bf16.xpose.msra.mxu0 0
    %1311 = vmatprep.subr.bf16.mxu0 0
    %1312 = vmatpush1.bf16.xpose.msra.mxu0 0
    %1313 = vmatprep.subr.bf16.mxu0 0
    %1314 = vmatpush1.bf16.xpose.msra.mxu0 0
    %1315 = vmatprep.subr.bf16.mxu0 0
    %1316 = vmatpush1.bf16.xpose.msra.mxu0 0
    %1317 = vmatprep.subr.bf16.mxu0 0
    %1318 = vmatpush1.bf16.xpose.msra.mxu0 0
    %1319 = vmatprep.mubr.bf16.mxu0 0
    %1320 = vmatmul.mubr.bf16.gmra.mrb[0].mxu0 %v1282
    %v1321 = vpop.f32.mrb[0].mxu0
    %v1322 = vadd.f32 0.0, %v1321
    %v1323 = vpop.f32.mrb[0].mxu0
    %v1324 = vpop.f32.mrb[0].mxu0
    %v1325 = vpop.f32.mrb[0].mxu0
    %1326 = vdwg.mxu0
    %v1327 = vmul.f32 %v632, 0.25
    %v1328 = vmul.f32 %v678, 0.25
    %v1329 = vmul.f32 %v724, 0.25
    %v1330 = vmul.f32 %v770, 0.25
    %v1331 = vmul.f32 %v816, 0.25
    %v1332 = vmul.f32 %v862, 0.25
    %v1333 = vmul.f32 %v908, 0.25
    %v1334 = vmul.f32 %v954, 0.25
    %v1335 = vmul.f32 %v1000, 0.25
    %v1336 = vmul.f32 %v1046, 0.25
    %v1337 = vmul.f32 %v1092, 0.25
    %v1338 = vmul.f32 %v1138, 0.25
    %v1339 = vmul.f32 %v1184, 0.25
    %v1340 = vmul.f32 %v1230, 0.25
    %v1341 = vmul.f32 %v1276, 0.25
    %v1342 = vmul.f32 %v1322, 0.25
    %v1343 = vadd.f32 %v1327, %v204
    %v1344 = vadd.f32 %v1328, %v205
    %v1345 = vadd.f32 %v1329, %v204
    %v1346 = vadd.f32 %v1330, %v205
    %v1347 = vadd.f32 %v1331, %v204
    %v1348 = vadd.f32 %v1332, %v205
    %v1349 = vadd.f32 %v1333, %v204
    %v1350 = vadd.f32 %v1334, %v205
    %v1351 = vadd.f32 %v1335, %v204
    %v1352 = vadd.f32 %v1336, %v205
    %v1353 = vadd.f32 %v1337, %v204
    %v1354 = vadd.f32 %v1338, %v205
    %v1355 = vadd.f32 %v1339, %v204
    %v1356 = vadd.f32 %v1340, %v205
    %v1357 = vadd.f32 %v1341, %v204
    %v1358 = vadd.f32 %v1342, %v205
    %vm1359 = vcmask 64512
    %v1360 = vsel %vm1359, %v1343, -inf
    %1361 = vmax.xlane.f32.xlu0 %v1360
    %v1362 = vpop.xlane.xlu0 %1361
    %v1363 = vsel %vm1359, %v1344, -inf
    %1364 = vmax.xlane.f32.xlu0 %v1363
    %v1365 = vpop.xlane.xlu0 %1364
    %v1366 = vsel %vm1359, %v1345, -inf
    %1367 = vmax.xlane.f32.xlu0 %v1366
    %v1368 = vpop.xlane.xlu0 %1367
    %v1369 = vsel %vm1359, %v1346, -inf
    %1370 = vmax.xlane.f32.xlu0 %v1369
    %v1371 = vpop.xlane.xlu0 %1370
    %v1372 = vsel %vm1359, %v1347, -inf
    %1373 = vmax.xlane.f32.xlu0 %v1372
    %v1374 = vpop.xlane.xlu0 %1373
    %v1375 = vsel %vm1359, %v1348, -inf
    %1376 = vmax.xlane.f32.xlu0 %v1375
    %v1377 = vpop.xlane.xlu0 %1376
    %v1378 = vsel %vm1359, %v1349, -inf
    %1379 = vmax.xlane.f32.xlu0 %v1378
    %v1380 = vpop.xlane.xlu0 %1379
    %v1381 = vsel %vm1359, %v1350, -inf
    %1382 = vmax.xlane.f32.xlu0 %v1381
    %v1383 = vpop.xlane.xlu0 %1382
    %v1384 = vsel %vm1359, %v1351, -inf
    %1385 = vmax.xlane.f32.xlu0 %v1384
    %v1386 = vpop.xlane.xlu0 %1385
    %v1387 = vsel %vm1359, %v1352, -inf
    %1388 = vmax.xlane.f32.xlu0 %v1387
    %v1389 = vpop.xlane.xlu0 %1388
    %v1390 = vsel %vm1359, %v1353, -inf
    %1391 = vmax.xlane.f32.xlu0 %v1390
    %v1392 = vpop.xlane.xlu0 %1391
    %v1393 = vsel %vm1359, %v1354, -inf
    %1394 = vmax.xlane.f32.xlu0 %v1393
    %v1395 = vpop.xlane.xlu0 %1394
    %v1396 = vsel %vm1359, %v1355, -inf
    %1397 = vmax.xlane.f32.xlu0 %v1396
    %v1398 = vpop.xlane.xlu0 %1397
    %v1399 = vsel %vm1359, %v1356, -inf
    %1400 = vmax.xlane.f32.xlu0 %v1399
    %v1401 = vpop.xlane.xlu0 %1400
    %v1402 = vsel %vm1359, %v1357, -inf
    %1403 = vmax.xlane.f32.xlu0 %v1402
    %v1404 = vpop.xlane.xlu0 %1403
    %v1405 = vsel %vm1359, %v1358, -inf
    %1406 = vmax.xlane.f32.xlu0 %v1405
    %v1407 = vpop.xlane.xlu0 %1406
    %v1408 = vsub.f32 %v1343, %v1362
    %v1409 = vsub.f32 %v1344, %v1365
    %v1410 = vsub.f32 %v1345, %v1368
    %v1411 = vsub.f32 %v1346, %v1371
    %v1412 = vsub.f32 %v1347, %v1374
    %v1413 = vsub.f32 %v1348, %v1377
    %v1414 = vsub.f32 %v1349, %v1380
    %v1415 = vsub.f32 %v1350, %v1383
    %v1416 = vsub.f32 %v1351, %v1386
    %v1417 = vsub.f32 %v1352, %v1389
    %v1418 = vsub.f32 %v1353, %v1392
    %v1419 = vsub.f32 %v1354, %v1395
    %v1420 = vsub.f32 %v1355, %v1398
    %v1421 = vsub.f32 %v1356, %v1401
    %v1422 = vsub.f32 %v1357, %v1404
    %v1423 = vsub.f32 %v1358, %v1407
    %v1424 = vmul.f32 %v1408, 1.442695
    %v1425 = vpow.pop %v1424
    %v1426 = vmul.f32 %v1409, 1.442695
    %v1427 = vpow.pop %v1426
    %v1428 = vmul.f32 %v1410, 1.442695
    %v1429 = vpow.pop %v1428
    %v1430 = vmul.f32 %v1411, 1.442695
    %v1431 = vpow.pop %v1430
    %v1432 = vmul.f32 %v1412, 1.442695
    %v1433 = vpow.pop %v1432
    %v1434 = vmul.f32 %v1413, 1.442695
    %v1435 = vpow.pop %v1434
    %v1436 = vmul.f32 %v1414, 1.442695
    %v1437 = vpow.pop %v1436
    %v1438 = vmul.f32 %v1415, 1.442695
    %v1439 = vpow.pop %v1438
    %v1440 = vmul.f32 %v1416, 1.442695
    %v1441 = vpow.pop %v1440
    %v1442 = vmul.f32 %v1417, 1.442695
    %v1443 = vpow.pop %v1442
    %v1444 = vmul.f32 %v1418, 1.442695
    %v1445 = vpow.pop %v1444
    %v1446 = vmul.f32 %v1419, 1.442695
    %v1447 = vpow.pop %v1446
    %v1448 = vmul.f32 %v1420, 1.442695
    %v1449 = vpow.pop %v1448
    %v1450 = vmul.f32 %v1421, 1.442695
    %v1451 = vpow.pop %v1450
    %v1452 = vmul.f32 %v1422, 1.442695
    %v1453 = vpow.pop %v1452
    %v1454 = vmul.f32 %v1423, 1.442695
    %v1455 = vpow.pop %v1454
    %v1456 = vsel %vm1359, %v1425, 0.0
    %1457 = vadd.xlane.f32.xlu0 %v1456
    %v1458 = vpop.xlane.xlu0 %1457
    %v1459 = vsel %vm1359, %v1427, 0.0
    %1460 = vadd.xlane.f32.xlu0 %v1459
    %v1461 = vpop.xlane.xlu0 %1460
    %v1462 = vsel %vm1359, %v1429, 0.0
    %1463 = vadd.xlane.f32.xlu0 %v1462
    %v1464 = vpop.xlane.xlu0 %1463
    %v1465 = vsel %vm1359, %v1431, 0.0
    %1466 = vadd.xlane.f32.xlu0 %v1465
    %v1467 = vpop.xlane.xlu0 %1466
    %v1468 = vsel %vm1359, %v1433, 0.0
    %1469 = vadd.xlane.f32.xlu0 %v1468
    %v1470 = vpop.xlane.xlu0 %1469
    %v1471 = vsel %vm1359, %v1435, 0.0
    %1472 = vadd.xlane.f32.xlu0 %v1471
    %v1473 = vpop.xlane.xlu0 %1472
    %v1474 = vsel %vm1359, %v1437, 0.0
    %1475 = vadd.xlane.f32.xlu0 %v1474
    %v1476 = vpop.xlane.xlu0 %1475
    %v1477 = vsel %vm1359, %v1439, 0.0
    %1478 = vadd.xlane.f32.xlu0 %v1477
    %v1479 = vpop.xlane.xlu0 %1478
    %v1480 = vsel %vm1359, %v1441, 0.0
    %1481 = vadd.xlane.f32.xlu0 %v1480
    %v1482 = vpop.xlane.xlu0 %1481
    %v1483 = vsel %vm1359, %v1443, 0.0
    %1484 = vadd.xlane.f32.xlu0 %v1483
    %v1485 = vpop.xlane.xlu0 %1484
    %v1486 = vsel %vm1359, %v1445, 0.0
    %1487 = vadd.xlane.f32.xlu0 %v1486
    %v1488 = vpop.xlane.xlu0 %1487
    %v1489 = vsel %vm1359, %v1447, 0.0
    %1490 = vadd.xlane.f32.xlu0 %v1489
    %v1491 = vpop.xlane.xlu0 %1490
    %v1492 = vsel %vm1359, %v1449, 0.0
    %1493 = vadd.xlane.f32.xlu0 %v1492
    %v1494 = vpop.xlane.xlu0 %1493
    %v1495 = vsel %vm1359, %v1451, 0.0
    %1496 = vadd.xlane.f32.xlu0 %v1495
    %v1497 = vpop.xlane.xlu0 %1496
    %v1498 = vsel %vm1359, %v1453, 0.0
    %1499 = vadd.xlane.f32.xlu0 %v1498
    %v1500 = vpop.xlane.xlu0 %1499
    %v1501 = vsel %vm1359, %v1455, 0.0
    %1502 = vadd.xlane.f32.xlu0 %v1501
    %v1503 = vpop.xlane.xlu0 %1502
    %v1504 = vrcp.pop %v1458
    %v1505 = vmul.f32 %v1425, %v1504
    %v1506 = vrcp.pop %v1461
    %v1507 = vmul.f32 %v1427, %v1506
    %v1508 = vrcp.pop %v1464
    %v1509 = vmul.f32 %v1429, %v1508
    %v1510 = vrcp.pop %v1467
    %v1511 = vmul.f32 %v1431, %v1510
    %v1512 = vrcp.pop %v1470
    %v1513 = vmul.f32 %v1433, %v1512
    %v1514 = vrcp.pop %v1473
    %v1515 = vmul.f32 %v1435, %v1514
    %v1516 = vrcp.pop %v1476
    %v1517 = vmul.f32 %v1437, %v1516
    %v1518 = vrcp.pop %v1479
    %v1519 = vmul.f32 %v1439, %v1518
    %v1520 = vrcp.pop %v1482
    %v1521 = vmul.f32 %v1441, %v1520
    %v1522 = vrcp.pop %v1485
    %v1523 = vmul.f32 %v1443, %v1522
    %v1524 = vrcp.pop %v1488
    %v1525 = vmul.f32 %v1445, %v1524
    %v1526 = vrcp.pop %v1491
    %v1527 = vmul.f32 %v1447, %v1526
    %v1528 = vrcp.pop %v1494
    %v1529 = vmul.f32 %v1449, %v1528
    %v1530 = vrcp.pop %v1497
    %v1531 = vmul.f32 %v1451, %v1530
    %v1532 = vrcp.pop %v1500
    %v1533 = vmul.f32 %v1453, %v1532
    %v1534 = vrcp.pop %v1503
    %v1535 = vmul.f32 %v1455, %v1534
    %v1536 = vpack.c.bf16 %v1505, %v1505
    %v1537 = vpack.c.bf16 %v1507, %v1507
    %v1538 = vpack.c.bf16 %v1509, %v1509
    %v1539 = vpack.c.bf16 %v1511, %v1511
    %v1540 = vpack.c.bf16 %v1513, %v1513
    %v1541 = vpack.c.bf16 %v1515, %v1515
    %v1542 = vpack.c.bf16 %v1517, %v1517
    %v1543 = vpack.c.bf16 %v1519, %v1519
    %v1544 = vpack.c.bf16 %v1521, %v1521
    %v1545 = vpack.c.bf16 %v1523, %v1523
    %v1546 = vpack.c.bf16 %v1525, %v1525
    %v1547 = vpack.c.bf16 %v1527, %v1527
    %v1548 = vpack.c.bf16 %v1529, %v1529
    %v1549 = vpack.c.bf16 %v1531, %v1531
    %v1550 = vpack.c.bf16 %v1533, %v1533
    %v1551 = vpack.c.bf16 %v1535, %v1535
    %v1553 = vsel %vm1359, %v1536, 0
    %vm1555 = vcmask 1043456
    %v1557 = vsel %vm1555, %v558, 0
    %1559 = vmatprep.subr.bf16.mxu0 0
    %1560 = vmatpush1.bf16.msra.mxu0 %v1557
    %1561 = vmatprep.subr.bf16.mxu0 0
    %1562 = vmatpush1.bf16.msra.mxu0 0
    %1563 = vmatprep.subr.bf16.mxu0 0
    %1564 = vmatpush1.bf16.msra.mxu0 0
    %1565 = vmatprep.subr.bf16.mxu0 0
    %1566 = vmatpush1.bf16.msra.mxu0 0
    %1567 = vmatprep.subr.bf16.mxu0 0
    %1568 = vmatpush1.bf16.msra.mxu0 0
    %1569 = vmatprep.subr.bf16.mxu0 0
    %1570 = vmatpush1.bf16.msra.mxu0 0
    %1571 = vmatprep.subr.bf16.mxu0 0
    %1572 = vmatpush1.bf16.msra.mxu0 0
    %1573 = vmatprep.subr.bf16.mxu0 0
    %1574 = vmatpush1.bf16.msra.mxu0 0
    %1575 = vmatprep.subr.bf16.mxu0 0
    %1576 = vmatpush1.bf16.msra.mxu0 0
    %1577 = vmatprep.subr.bf16.mxu0 0
    %1578 = vmatpush1.bf16.msra.mxu0 0
    %1579 = vmatprep.subr.bf16.mxu0 0
    %1580 = vmatpush1.bf16.msra.mxu0 0
    %1581 = vmatprep.subr.bf16.mxu0 0
    %1582 = vmatpush1.bf16.msra.mxu0 0
    %1583 = vmatprep.subr.bf16.mxu0 0
    %1584 = vmatpush1.bf16.msra.mxu0 0
    %1585 = vmatprep.subr.bf16.mxu0 0
    %1586 = vmatpush1.bf16.msra.mxu0 0
    %1587 = vmatprep.subr.bf16.mxu0 0
    %1588 = vmatpush1.bf16.msra.mxu0 0
    %1589 = vmatprep.subr.bf16.mxu0 0
    %1590 = vmatpush1.bf16.msra.mxu0 0
    %1591 = vmatprep.mubr.bf16.mxu0 0
    %1592 = vmatmul.mubr.bf16.gmra.mrb[0].mxu0 %v1553
    %v1593 = vpop.f32.mrb[0].mxu0
    %v1594 = vadd.f32 0.0, %v1593
    %v1595 = vpop.f32.mrb[0].mxu0
    %v1596 = vpop.f32.mrb[0].mxu0
    %v1597 = vpop.f32.mrb[0].mxu0
    %1598 = vdwg.mxu0
    %v1600 = vsel %vm1359, %v1537, 0
    %v1603 = vsel %vm1555, %v559, 0
    %1605 = vmatprep.subr.bf16.mxu0 0
    %1606 = vmatpush1.bf16.msra.mxu0 %v1603
    %1607 = vmatprep.subr.bf16.mxu0 0
    %1608 = vmatpush1.bf16.msra.mxu0 0
    %1609 = vmatprep.subr.bf16.mxu0 0
    %1610 = vmatpush1.bf16.msra.mxu0 0
    %1611 = vmatprep.subr.bf16.mxu0 0
    %1612 = vmatpush1.bf16.msra.mxu0 0
    %1613 = vmatprep.subr.bf16.mxu0 0
    %1614 = vmatpush1.bf16.msra.mxu0 0
    %1615 = vmatprep.subr.bf16.mxu0 0
    %1616 = vmatpush1.bf16.msra.mxu0 0
    %1617 = vmatprep.subr.bf16.mxu0 0
    %1618 = vmatpush1.bf16.msra.mxu0 0
    %1619 = vmatprep.subr.bf16.mxu0 0
    %1620 = vmatpush1.bf16.msra.mxu0 0
    %1621 = vmatprep.subr.bf16.mxu0 0
    %1622 = vmatpush1.bf16.msra.mxu0 0
    %1623 = vmatprep.subr.bf16.mxu0 0
    %1624 = vmatpush1.bf16.msra.mxu0 0
    %1625 = vmatprep.subr.bf16.mxu0 0
    %1626 = vmatpush1.bf16.msra.mxu0 0
    %1627 = vmatprep.subr.bf16.mxu0 0
    %1628 = vmatpush1.bf16.msra.mxu0 0
    %1629 = vmatprep.subr.bf16.mxu0 0
    %1630 = vmatpush1.bf16.msra.mxu0 0
    %1631 = vmatprep.subr.bf16.mxu0 0
    %1632 = vmatpush1.bf16.msra.mxu0 0
    %1633 = vmatprep.subr.bf16.mxu0 0
    %1634 = vmatpush1.bf16.msra.mxu0 0
    %1635 = vmatprep.subr.bf16.mxu0 0
    %1636 = vmatpush1.bf16.msra.mxu0 0
    %1637 = vmatprep.mubr.bf16.mxu0 0
    %1638 = vmatmul.mubr.bf16.gmra.mrb[0].mxu0 %v1600
    %v1639 = vpop.f32.mrb[0].mxu0
    %v1640 = vadd.f32 0.0, %v1639
    %v1641 = vpop.f32.mrb[0].mxu0
    %v1642 = vpop.f32.mrb[0].mxu0
    %v1643 = vpop.f32.mrb[0].mxu0
    %1644 = vdwg.mxu0
    %v1646 = vsel %vm1359, %v1538, 0
    %v1649 = vsel %vm1555, %v563, 0
    %1651 = vmatprep.subr.bf16.mxu0 0
    %1652 = vmatpush1.bf16.msra.mxu0 %v1649
    %1653 = vmatprep.subr.bf16.mxu0 0
    %1654 = vmatpush1.bf16.msra.mxu0 0
    %1655 = vmatprep.subr.bf16.mxu0 0
    %1656 = vmatpush1.bf16.msra.mxu0 0
    %1657 = vmatprep.subr.bf16.mxu0 0
    %1658 = vmatpush1.bf16.msra.mxu0 0
    %1659 = vmatprep.subr.bf16.mxu0 0
    %1660 = vmatpush1.bf16.msra.mxu0 0
    %1661 = vmatprep.subr.bf16.mxu0 0
    %1662 = vmatpush1.bf16.msra.mxu0 0
    %1663 = vmatprep.subr.bf16.mxu0 0
    %1664 = vmatpush1.bf16.msra.mxu0 0
    %1665 = vmatprep.subr.bf16.mxu0 0
    %1666 = vmatpush1.bf16.msra.mxu0 0
    %1667 = vmatprep.subr.bf16.mxu0 0
    %1668 = vmatpush1.bf16.msra.mxu0 0
    %1669 = vmatprep.subr.bf16.mxu0 0
    %1670 = vmatpush1.bf16.msra.mxu0 0
    %1671 = vmatprep.subr.bf16.mxu0 0
    %1672 = vmatpush1.bf16.msra.mxu0 0
    %1673 = vmatprep.subr.bf16.mxu0 0
    %1674 = vmatpush1.bf16.msra.mxu0 0
    %1675 = vmatprep.subr.bf16.mxu0 0
    %1676 = vmatpush1.bf16.msra.mxu0 0
    %1677 = vmatprep.subr.bf16.mxu0 0
    %1678 = vmatpush1.bf16.msra.mxu0 0
    %1679 = vmatprep.subr.bf16.mxu0 0
    %1680 = vmatpush1.bf16.msra.mxu0 0
    %1681 = vmatprep.subr.bf16.mxu0 0
    %1682 = vmatpush1.bf16.msra.mxu0 0
    %1683 = vmatprep.mubr.bf16.mxu0 0
    %1684 = vmatmul.mubr.bf16.gmra.mrb[0].mxu0 %v1646
    %v1685 = vpop.f32.mrb[0].mxu0
    %v1686 = vadd.f32 0.0, %v1685
    %v1687 = vpop.f32.mrb[0].mxu0
    %v1688 = vpop.f32.mrb[0].mxu0
    %v1689 = vpop.f32.mrb[0].mxu0
    %1690 = vdwg.mxu0
    %v1692 = vsel %vm1359, %v1539, 0
    %v1695 = vsel %vm1555, %v565, 0
    %1697 = vmatprep.subr.bf16.mxu0 0
    %1698 = vmatpush1.bf16.msra.mxu0 %v1695
    %1699 = vmatprep.subr.bf16.mxu0 0
    %1700 = vmatpush1.bf16.msra.mxu0 0
    %1701 = vmatprep.subr.bf16.mxu0 0
    %1702 = vmatpush1.bf16.msra.mxu0 0
    %1703 = vmatprep.subr.bf16.mxu0 0
    %1704 = vmatpush1.bf16.msra.mxu0 0
    %1705 = vmatprep.subr.bf16.mxu0 0
    %1706 = vmatpush1.bf16.msra.mxu0 0
    %1707 = vmatprep.subr.bf16.mxu0 0
    %1708 = vmatpush1.bf16.msra.mxu0 0
    %1709 = vmatprep.subr.bf16.mxu0 0
    %1710 = vmatpush1.bf16.msra.mxu0 0
    %1711 = vmatprep.subr.bf16.mxu0 0
    %1712 = vmatpush1.bf16.msra.mxu0 0
    %1713 = vmatprep.subr.bf16.mxu0 0
    %1714 = vmatpush1.bf16.msra.mxu0 0
    %1715 = vmatprep.subr.bf16.mxu0 0
    %1716 = vmatpush1.bf16.msra.mxu0 0
    %1717 = vmatprep.subr.bf16.mxu0 0
    %1718 = vmatpush1.bf16.msra.mxu0 0
    %1719 = vmatprep.subr.bf16.mxu0 0
    %1720 = vmatpush1.bf16.msra.mxu0 0
    %1721 = vmatprep.subr.bf16.mxu0 0
    %1722 = vmatpush1.bf16.msra.mxu0 0
    %1723 = vmatprep.subr.bf16.mxu0 0
    %1724 = vmatpush1.bf16.msra.mxu0 0
    %1725 = vmatprep.subr.bf16.mxu0 0
    %1726 = vmatpush1.bf16.msra.mxu0 0
    %1727 = vmatprep.subr.bf16.mxu0 0
    %1728 = vmatpush1.bf16.msra.mxu0 0
    %1729 = vmatprep.mubr.bf16.mxu0 0
    %1730 = vmatmul.mubr.bf16.gmra.mrb[0].mxu0 %v1692
    %v1731 = vpop.f32.mrb[0].mxu0
    %v1732 = vadd.f32 0.0, %v1731
    %v1733 = vpop.f32.mrb[0].mxu0
    %v1734 = vpop.f32.mrb[0].mxu0
    %v1735 = vpop.f32.mrb[0].mxu0
    %1736 = vdwg.mxu0
    %v1738 = vsel %vm1359, %v1540, 0
    %v1741 = vsel %vm1555, %v567, 0
    %1743 = vmatprep.subr.bf16.mxu0 0
    %1744 = vmatpush1.bf16.msra.mxu0 %v1741
    %1745 = vmatprep.subr.bf16.mxu0 0
    %1746 = vmatpush1.bf16.msra.mxu0 0
    %1747 = vmatprep.subr.bf16.mxu0 0
    %1748 = vmatpush1.bf16.msra.mxu0 0
    %1749 = vmatprep.subr.bf16.mxu0 0
    %1750 = vmatpush1.bf16.msra.mxu0 0
    %1751 = vmatprep.subr.bf16.mxu0 0
    %1752 = vmatpush1.bf16.msra.mxu0 0
    %1753 = vmatprep.subr.bf16.mxu0 0
    %1754 = vmatpush1.bf16.msra.mxu0 0
    %1755 = vmatprep.subr.bf16.mxu0 0
    %1756 = vmatpush1.bf16.msra.mxu0 0
    %1757 = vmatprep.subr.bf16.mxu0 0
    %1758 = vmatpush1.bf16.msra.mxu0 0
    %1759 = vmatprep.subr.bf16.mxu0 0
    %1760 = vmatpush1.bf16.msra.mxu0 0
    %1761 = vmatprep.subr.bf16.mxu0 0
    %1762 = vmatpush1.bf16.msra.mxu0 0
    %1763 = vmatprep.subr.bf16.mxu0 0
    %1764 = vmatpush1.bf16.msra.mxu0 0
    %1765 = vmatprep.subr.bf16.mxu0 0
    %1766 = vmatpush1.bf16.msra.mxu0 0
    %1767 = vmatprep.subr.bf16.mxu0 0
    %1768 = vmatpush1.bf16.msra.mxu0 0
    %1769 = vmatprep.subr.bf16.mxu0 0
    %1770 = vmatpush1.bf16.msra.mxu0 0
    %1771 = vmatprep.subr.bf16.mxu0 0
    %1772 = vmatpush1.bf16.msra.mxu0 0
    %1773 = vmatprep.subr.bf16.mxu0 0
    %1774 = vmatpush1.bf16.msra.mxu0 0
    %1775 = vmatprep.mubr.bf16.mxu0 0
    %1776 = vmatmul.mubr.bf16.gmra.mrb[0].mxu0 %v1738
    %v1777 = vpop.f32.mrb[0].mxu0
    %v1778 = vadd.f32 0.0, %v1777
    %v1779 = vpop.f32.mrb[0].mxu0
    %v1780 = vpop.f32.mrb[0].mxu0
    %v1781 = vpop.f32.mrb[0].mxu0
    %1782 = vdwg.mxu0
    %v1784 = vsel %vm1359, %v1541, 0
    %v1787 = vsel %vm1555, %v569, 0
    %1789 = vmatprep.subr.bf16.mxu0 0
    %1790 = vmatpush1.bf16.msra.mxu0 %v1787
    %1791 = vmatprep.subr.bf16.mxu0 0
    %1792 = vmatpush1.bf16.msra.mxu0 0
    %1793 = vmatprep.subr.bf16.mxu0 0
    %1794 = vmatpush1.bf16.msra.mxu0 0
    %1795 = vmatprep.subr.bf16.mxu0 0
    %1796 = vmatpush1.bf16.msra.mxu0 0
    %1797 = vmatprep.subr.bf16.mxu0 0
    %1798 = vmatpush1.bf16.msra.mxu0 0
    %1799 = vmatprep.subr.bf16.mxu0 0
    %1800 = vmatpush1.bf16.msra.mxu0 0
    %1801 = vmatprep.subr.bf16.mxu0 0
    %1802 = vmatpush1.bf16.msra.mxu0 0
    %1803 = vmatprep.subr.bf16.mxu0 0
    %1804 = vmatpush1.bf16.msra.mxu0 0
    %1805 = vmatprep.subr.bf16.mxu0 0
    %1806 = vmatpush1.bf16.msra.mxu0 0
    %1807 = vmatprep.subr.bf16.mxu0 0
    %1808 = vmatpush1.bf16.msra.mxu0 0
    %1809 = vmatprep.subr.bf16.mxu0 0
    %1810 = vmatpush1.bf16.msra.mxu0 0
    %1811 = vmatprep.subr.bf16.mxu0 0
    %1812 = vmatpush1.bf16.msra.mxu0 0
    %1813 = vmatprep.subr.bf16.mxu0 0
    %1814 = vmatpush1.bf16.msra.mxu0 0
    %1815 = vmatprep.subr.bf16.mxu0 0
    %1816 = vmatpush1.bf16.msra.mxu0 0
    %1817 = vmatprep.subr.bf16.mxu0 0
    %1818 = vmatpush1.bf16.msra.mxu0 0
    %1819 = vmatprep.subr.bf16.mxu0 0
    %1820 = vmatpush1.bf16.msra.mxu0 0
    %1821 = vmatprep.mubr.bf16.mxu0 0
    %1822 = vmatmul.mubr.bf16.gmra.mrb[0].mxu0 %v1784
    %v1823 = vpop.f32.mrb[0].mxu0
    %v1824 = vadd.f32 0.0, %v1823
    %v1825 = vpop.f32.mrb[0].mxu0
    %v1826 = vpop.f32.mrb[0].mxu0
    %v1827 = vpop.f32.mrb[0].mxu0
    %1828 = vdwg.mxu0
    %v1830 = vsel %vm1359, %v1542, 0
    %v1833 = vsel %vm1555, %v571, 0
    %1835 = vmatprep.subr.bf16.mxu0 0
    %1836 = vmatpush1.bf16.msra.mxu0 %v1833
    %1837 = vmatprep.subr.bf16.mxu0 0
    %1838 = vmatpush1.bf16.msra.mxu0 0
    %1839 = vmatprep.subr.bf16.mxu0 0
    %1840 = vmatpush1.bf16.msra.mxu0 0
    %1841 = vmatprep.subr.bf16.mxu0 0
    %1842 = vmatpush1.bf16.msra.mxu0 0
    %1843 = vmatprep.subr.bf16.mxu0 0
    %1844 = vmatpush1.bf16.msra.mxu0 0
    %1845 = vmatprep.subr.bf16.mxu0 0
    %1846 = vmatpush1.bf16.msra.mxu0 0
    %1847 = vmatprep.subr.bf16.mxu0 0
    %1848 = vmatpush1.bf16.msra.mxu0 0
    %1849 = vmatprep.subr.bf16.mxu0 0
    %1850 = vmatpush1.bf16.msra.mxu0 0
    %1851 = vmatprep.subr.bf16.mxu0 0
    %1852 = vmatpush1.bf16.msra.mxu0 0
    %1853 = vmatprep.subr.bf16.mxu0 0
    %1854 = vmatpush1.bf16.msra.mxu0 0
    %1855 = vmatprep.subr.bf16.mxu0 0
    %1856 = vmatpush1.bf16.msra.mxu0 0
    %1857 = vmatprep.subr.bf16.mxu0 0
    %1858 = vmatpush1.bf16.msra.mxu0 0
    %1859 = vmatprep.subr.bf16.mxu0 0
    %1860 = vmatpush1.bf16.msra.mxu0 0
    %1861 = vmatprep.subr.bf16.mxu0 0
    %1862 = vmatpush1.bf16.msra.mxu0 0
    %1863 = vmatprep.subr.bf16.mxu0 0
    %1864 = vmatpush1.bf16.msra.mxu0 0
    %1865 = vmatprep.subr.bf16.mxu0 0
    %1866 = vmatpush1.bf16.msra.mxu0 0
    %1867 = vmatprep.mubr.bf16.mxu0 0
    %1868 = vmatmul.mubr.bf16.gmra.mrb[0].mxu0 %v1830
    %v1869 = vpop.f32.mrb[0].mxu0
    %v1870 = vadd.f32 0.0, %v1869
    %v1871 = vpop.f32.mrb[0].mxu0
    %v1872 = vpop.f32.mrb[0].mxu0
    %v1873 = vpop.f32.mrb[0].mxu0
    %1874 = vdwg.mxu0
    %v1876 = vsel %vm1359, %v1543, 0
    %v1879 = vsel %vm1555, %v573, 0
    %1881 = vmatprep.subr.bf16.mxu0 0
    %1882 = vmatpush1.bf16.msra.mxu0 %v1879
    %1883 = vmatprep.subr.bf16.mxu0 0
    %1884 = vmatpush1.bf16.msra.mxu0 0
    %1885 = vmatprep.subr.bf16.mxu0 0
    %1886 = vmatpush1.bf16.msra.mxu0 0
    %1887 = vmatprep.subr.bf16.mxu0 0
    %1888 = vmatpush1.bf16.msra.mxu0 0
    %1889 = vmatprep.subr.bf16.mxu0 0
    %1890 = vmatpush1.bf16.msra.mxu0 0
    %1891 = vmatprep.subr.bf16.mxu0 0
    %1892 = vmatpush1.bf16.msra.mxu0 0
    %1893 = vmatprep.subr.bf16.mxu0 0
    %1894 = vmatpush1.bf16.msra.mxu0 0
    %1895 = vmatprep.subr.bf16.mxu0 0
    %1896 = vmatpush1.bf16.msra.mxu0 0
    %1897 = vmatprep.subr.bf16.mxu0 0
    %1898 = vmatpush1.bf16.msra.mxu0 0
    %1899 = vmatprep.subr.bf16.mxu0 0
    %1900 = vmatpush1.bf16.msra.mxu0 0
    %1901 = vmatprep.subr.bf16.mxu0 0
    %1902 = vmatpush1.bf16.msra.mxu0 0
    %1903 = vmatprep.subr.bf16.mxu0 0
    %1904 = vmatpush1.bf16.msra.mxu0 0
    %1905 = vmatprep.subr.bf16.mxu0 0
    %1906 = vmatpush1.bf16.msra.mxu0 0
    %1907 = vmatprep.subr.bf16.mxu0 0
    %1908 = vmatpush1.bf16.msra.mxu0 0
    %1909 = vmatprep.subr.bf16.mxu0 0
    %1910 = vmatpush1.bf16.msra.mxu0 0
    %1911 = vmatprep.subr.bf16.mxu0 0
    %1912 = vmatpush1.bf16.msra.mxu0 0
    %1913 = vmatprep.mubr.bf16.mxu0 0
    %1914 = vmatmul.mubr.bf16.gmra.mrb[0].mxu0 %v1876
    %v1915 = vpop.f32.mrb[0].mxu0
    %v1916 = vadd.f32 0.0, %v1915
    %v1917 = vpop.f32.mrb[0].mxu0
    %v1918 = vpop.f32.mrb[0].mxu0
    %v1919 = vpop.f32.mrb[0].mxu0
    %1920 = vdwg.mxu0
    %v1922 = vsel %vm1359, %v1544, 0
    %v1925 = vsel %vm1555, %v575, 0
    %1927 = vmatprep.subr.bf16.mxu0 0
    %1928 = vmatpush1.bf16.msra.mxu0 %v1925
    %1929 = vmatprep.subr.bf16.mxu0 0
    %1930 = vmatpush1.bf16.msra.mxu0 0
    %1931 = vmatprep.subr.bf16.mxu0 0
    %1932 = vmatpush1.bf16.msra.mxu0 0
    %1933 = vmatprep.subr.bf16.mxu0 0
    %1934 = vmatpush1.bf16.msra.mxu0 0
    %1935 = vmatprep.subr.bf16.mxu0 0
    %1936 = vmatpush1.bf16.msra.mxu0 0
    %1937 = vmatprep.subr.bf16.mxu0 0
    %1938 = vmatpush1.bf16.msra.mxu0 0
    %1939 = vmatprep.subr.bf16.mxu0 0
    %1940 = vmatpush1.bf16.msra.mxu0 0
    %1941 = vmatprep.subr.bf16.mxu0 0
    %1942 = vmatpush1.bf16.msra.mxu0 0
    %1943 = vmatprep.subr.bf16.mxu0 0
    %1944 = vmatpush1.bf16.msra.mxu0 0
    %1945 = vmatprep.subr.bf16.mxu0 0
    %1946 = vmatpush1.bf16.msra.mxu0 0
    %1947 = vmatprep.subr.bf16.mxu0 0
    %1948 = vmatpush1.bf16.msra.mxu0 0
    %1949 = vmatprep.subr.bf16.mxu0 0
    %1950 = vmatpush1.bf16.msra.mxu0 0
    %1951 = vmatprep.subr.bf16.mxu0 0
    %1952 = vmatpush1.bf16.msra.mxu0 0
    %1953 = vmatprep.subr.bf16.mxu0 0
    %1954 = vmatpush1.bf16.msra.mxu0 0
    %1955 = vmatprep.subr.bf16.mxu0 0
    %1956 = vmatpush1.bf16.msra.mxu0 0
    %1957 = vmatprep.subr.bf16.mxu0 0
    %1958 = vmatpush1.bf16.msra.mxu0 0
    %1959 = vmatprep.mubr.bf16.mxu0 0
    %1960 = vmatmul.mubr.bf16.gmra.mrb[0].mxu0 %v1922
    %v1961 = vpop.f32.mrb[0].mxu0
    %v1962 = vadd.f32 0.0, %v1961
    %v1963 = vpop.f32.mrb[0].mxu0
    %v1964 = vpop.f32.mrb[0].mxu0
    %v1965 = vpop.f32.mrb[0].mxu0
    %1966 = vdwg.mxu0
    %v1968 = vsel %vm1359, %v1545, 0
    %v1971 = vsel %vm1555, %v577, 0
    %1973 = vmatprep.subr.bf16.mxu0 0
    %1974 = vmatpush1.bf16.msra.mxu0 %v1971
    %1975 = vmatprep.subr.bf16.mxu0 0
    %1976 = vmatpush1.bf16.msra.mxu0 0
    %1977 = vmatprep.subr.bf16.mxu0 0
    %1978 = vmatpush1.bf16.msra.mxu0 0
    %1979 = vmatprep.subr.bf16.mxu0 0
    %1980 = vmatpush1.bf16.msra.mxu0 0
    %1981 = vmatprep.subr.bf16.mxu0 0
    %1982 = vmatpush1.bf16.msra.mxu0 0
    %1983 = vmatprep.subr.bf16.mxu0 0
    %1984 = vmatpush1.bf16.msra.mxu0 0
    %1985 = vmatprep.subr.bf16.mxu0 0
    %1986 = vmatpush1.bf16.msra.mxu0 0
    %1987 = vmatprep.subr.bf16.mxu0 0
    %1988 = vmatpush1.bf16.msra.mxu0 0
    %1989 = vmatprep.subr.bf16.mxu0 0
    %1990 = vmatpush1.bf16.msra.mxu0 0
    %1991 = vmatprep.subr.bf16.mxu0 0
    %1992 = vmatpush1.bf16.msra.mxu0 0
    %1993 = vmatprep.subr.bf16.mxu0 0
    %1994 = vmatpush1.bf16.msra.mxu0 0
    %1995 = vmatprep.subr.bf16.mxu0 0
    %1996 = vmatpush1.bf16.msra.mxu0 0
    %1997 = vmatprep.subr.bf16.mxu0 0
    %1998 = vmatpush1.bf16.msra.mxu0 0
    %1999 = vmatprep.subr.bf16.mxu0 0
    %2000 = vmatpush1.bf16.msra.mxu0 0
    %2001 = vmatprep.subr.bf16.mxu0 0
    %2002 = vmatpush1.bf16.msra.mxu0 0
    %2003 = vmatprep.subr.bf16.mxu0 0
    %2004 = vmatpush1.bf16.msra.mxu0 0
    %2005 = vmatprep.mubr.bf16.mxu0 0
    %2006 = vmatmul.mubr.bf16.gmra.mrb[0].mxu0 %v1968
    %v2007 = vpop.f32.mrb[0].mxu0
    %v2008 = vadd.f32 0.0, %v2007
    %v2009 = vpop.f32.mrb[0].mxu0
    %v2010 = vpop.f32.mrb[0].mxu0
    %v2011 = vpop.f32.mrb[0].mxu0
    %2012 = vdwg.mxu0
    %v2014 = vsel %vm1359, %v1546, 0
    %v2017 = vsel %vm1555, %v579, 0
    %2019 = vmatprep.subr.bf16.mxu0 0
    %2020 = vmatpush1.bf16.msra.mxu0 %v2017
    %2021 = vmatprep.subr.bf16.mxu0 0
    %2022 = vmatpush1.bf16.msra.mxu0 0
    %2023 = vmatprep.subr.bf16.mxu0 0
    %2024 = vmatpush1.bf16.msra.mxu0 0
    %2025 = vmatprep.subr.bf16.mxu0 0
    %2026 = vmatpush1.bf16.msra.mxu0 0
    %2027 = vmatprep.subr.bf16.mxu0 0
    %2028 = vmatpush1.bf16.msra.mxu0 0
    %2029 = vmatprep.subr.bf16.mxu0 0
    %2030 = vmatpush1.bf16.msra.mxu0 0
    %2031 = vmatprep.subr.bf16.mxu0 0
    %2032 = vmatpush1.bf16.msra.mxu0 0
    %2033 = vmatprep.subr.bf16.mxu0 0
    %2034 = vmatpush1.bf16.msra.mxu0 0
    %2035 = vmatprep.subr.bf16.mxu0 0
    %2036 = vmatpush1.bf16.msra.mxu0 0
    %2037 = vmatprep.subr.bf16.mxu0 0
    %2038 = vmatpush1.bf16.msra.mxu0 0
    %2039 = vmatprep.subr.bf16.mxu0 0
    %2040 = vmatpush1.bf16.msra.mxu0 0
    %2041 = vmatprep.subr.bf16.mxu0 0
    %2042 = vmatpush1.bf16.msra.mxu0 0
    %2043 = vmatprep.subr.bf16.mxu0 0
    %2044 = vmatpush1.bf16.msra.mxu0 0
    %2045 = vmatprep.subr.bf16.mxu0 0
    %2046 = vmatpush1.bf16.msra.mxu0 0
    %2047 = vmatprep.subr.bf16.mxu0 0
    %2048 = vmatpush1.bf16.msra.mxu0 0
    %2049 = vmatprep.subr.bf16.mxu0 0
    %2050 = vmatpush1.bf16.msra.mxu0 0
    %2051 = vmatprep.mubr.bf16.mxu0 0
    %2052 = vmatmul.mubr.bf16.gmra.mrb[0].mxu0 %v2014
    %v2053 = vpop.f32.mrb[0].mxu0
    %v2054 = vadd.f32 0.0, %v2053
    %v2055 = vpop.f32.mrb[0].mxu0
    %v2056 = vpop.f32.mrb[0].mxu0
    %v2057 = vpop.f32.mrb[0].mxu0
    %2058 = vdwg.mxu0
    %v2060 = vsel %vm1359, %v1547, 0
    %v2063 = vsel %vm1555, %v581, 0
    %2065 = vmatprep.subr.bf16.mxu0 0
    %2066 = vmatpush1.bf16.msra.mxu0 %v2063
    %2067 = vmatprep.subr.bf16.mxu0 0
    %2068 = vmatpush1.bf16.msra.mxu0 0
    %2069 = vmatprep.subr.bf16.mxu0 0
    %2070 = vmatpush1.bf16.msra.mxu0 0
    %2071 = vmatprep.subr.bf16.mxu0 0
    %2072 = vmatpush1.bf16.msra.mxu0 0
    %2073 = vmatprep.subr.bf16.mxu0 0
    %2074 = vmatpush1.bf16.msra.mxu0 0
    %2075 = vmatprep.subr.bf16.mxu0 0
    %2076 = vmatpush1.bf16.msra.mxu0 0
    %2077 = vmatprep.subr.bf16.mxu0 0
    %2078 = vmatpush1.bf16.msra.mxu0 0
    %2079 = vmatprep.subr.bf16.mxu0 0
    %2080 = vmatpush1.bf16.msra.mxu0 0
    %2081 = vmatprep.subr.bf16.mxu0 0
    %2082 = vmatpush1.bf16.msra.mxu0 0
    %2083 = vmatprep.subr.bf16.mxu0 0
    %2084 = vmatpush1.bf16.msra.mxu0 0
    %2085 = vmatprep.subr.bf16.mxu0 0
    %2086 = vmatpush1.bf16.msra.mxu0 0
    %2087 = vmatprep.subr.bf16.mxu0 0
    %2088 = vmatpush1.bf16.msra.mxu0 0
    %2089 = vmatprep.subr.bf16.mxu0 0
    %2090 = vmatpush1.bf16.msra.mxu0 0
    %2091 = vmatprep.subr.bf16.mxu0 0
    %2092 = vmatpush1.bf16.msra.mxu0 0
    %2093 = vmatprep.subr.bf16.mxu0 0
    %2094 = vmatpush1.bf16.msra.mxu0 0
    %2095 = vmatprep.subr.bf16.mxu0 0
    %2096 = vmatpush1.bf16.msra.mxu0 0
    %2097 = vmatprep.mubr.bf16.mxu0 0
    %2098 = vmatmul.mubr.bf16.gmra.mrb[0].mxu0 %v2060
    %v2099 = vpop.f32.mrb[0].mxu0
    %v2100 = vadd.f32 0.0, %v2099
    %v2101 = vpop.f32.mrb[0].mxu0
    %v2102 = vpop.f32.mrb[0].mxu0
    %v2103 = vpop.f32.mrb[0].mxu0
    %2104 = vdwg.mxu0
    %v2106 = vsel %vm1359, %v1548, 0
    %v2109 = vsel %vm1555, %v583, 0
    %2111 = vmatprep.subr.bf16.mxu0 0
    %2112 = vmatpush1.bf16.msra.mxu0 %v2109
    %2113 = vmatprep.subr.bf16.mxu0 0
    %2114 = vmatpush1.bf16.msra.mxu0 0
    %2115 = vmatprep.subr.bf16.mxu0 0
    %2116 = vmatpush1.bf16.msra.mxu0 0
    %2117 = vmatprep.subr.bf16.mxu0 0
    %2118 = vmatpush1.bf16.msra.mxu0 0
    %2119 = vmatprep.subr.bf16.mxu0 0
    %2120 = vmatpush1.bf16.msra.mxu0 0
    %2121 = vmatprep.subr.bf16.mxu0 0
    %2122 = vmatpush1.bf16.msra.mxu0 0
    %2123 = vmatprep.subr.bf16.mxu0 0
    %2124 = vmatpush1.bf16.msra.mxu0 0
    %2125 = vmatprep.subr.bf16.mxu0 0
    %2126 = vmatpush1.bf16.msra.mxu0 0
    %2127 = vmatprep.subr.bf16.mxu0 0
    %2128 = vmatpush1.bf16.msra.mxu0 0
    %2129 = vmatprep.subr.bf16.mxu0 0
    %2130 = vmatpush1.bf16.msra.mxu0 0
    %2131 = vmatprep.subr.bf16.mxu0 0
    %2132 = vmatpush1.bf16.msra.mxu0 0
    %2133 = vmatprep.subr.bf16.mxu0 0
    %2134 = vmatpush1.bf16.msra.mxu0 0
    %2135 = vmatprep.subr.bf16.mxu0 0
    %2136 = vmatpush1.bf16.msra.mxu0 0
    %2137 = vmatprep.subr.bf16.mxu0 0
    %2138 = vmatpush1.bf16.msra.mxu0 0
    %2139 = vmatprep.subr.bf16.mxu0 0
    %2140 = vmatpush1.bf16.msra.mxu0 0
    %2141 = vmatprep.subr.bf16.mxu0 0
    %2142 = vmatpush1.bf16.msra.mxu0 0
    %2143 = vmatprep.mubr.bf16.mxu0 0
    %2144 = vmatmul.mubr.bf16.gmra.mrb[0].mxu0 %v2106
    %v2145 = vpop.f32.mrb[0].mxu0
    %v2146 = vadd.f32 0.0, %v2145
    %v2147 = vpop.f32.mrb[0].mxu0
    %v2148 = vpop.f32.mrb[0].mxu0
    %v2149 = vpop.f32.mrb[0].mxu0
    %2150 = vdwg.mxu0
    %v2152 = vsel %vm1359, %v1549, 0
    %v2155 = vsel %vm1555, %v585, 0
    %2157 = vmatprep.subr.bf16.mxu0 0
    %2158 = vmatpush1.bf16.msra.mxu0 %v2155
    %2159 = vmatprep.subr.bf16.mxu0 0
    %2160 = vmatpush1.bf16.msra.mxu0 0
    %2161 = vmatprep.subr.bf16.mxu0 0
    %2162 = vmatpush1.bf16.msra.mxu0 0
    %2163 = vmatprep.subr.bf16.mxu0 0
    %2164 = vmatpush1.bf16.msra.mxu0 0
    %2165 = vmatprep.subr.bf16.mxu0 0
    %2166 = vmatpush1.bf16.msra.mxu0 0
    %2167 = vmatprep.subr.bf16.mxu0 0
    %2168 = vmatpush1.bf16.msra.mxu0 0
    %2169 = vmatprep.subr.bf16.mxu0 0
    %2170 = vmatpush1.bf16.msra.mxu0 0
    %2171 = vmatprep.subr.bf16.mxu0 0
    %2172 = vmatpush1.bf16.msra.mxu0 0
    %2173 = vmatprep.subr.bf16.mxu0 0
    %2174 = vmatpush1.bf16.msra.mxu0 0
    %2175 = vmatprep.subr.bf16.mxu0 0
    %2176 = vmatpush1.bf16.msra.mxu0 0
    %2177 = vmatprep.subr.bf16.mxu0 0
    %2178 = vmatpush1.bf16.msra.mxu0 0
    %2179 = vmatprep.subr.bf16.mxu0 0
    %2180 = vmatpush1.bf16.msra.mxu0 0
    %2181 = vmatprep.subr.bf16.mxu0 0
    %2182 = vmatpush1.bf16.msra.mxu0 0
    %2183 = vmatprep.subr.bf16.mxu0 0
    %2184 = vmatpush1.bf16.msra.mxu0 0
    %2185 = vmatprep.subr.bf16.mxu0 0
    %2186 = vmatpush1.bf16.msra.mxu0 0
    %2187 = vmatprep.subr.bf16.mxu0 0
    %2188 = vmatpush1.bf16.msra.mxu0 0
    %2189 = vmatprep.mubr.bf16.mxu0 0
    %2190 = vmatmul.mubr.bf16.gmra.mrb[0].mxu0 %v2152
    %v2191 = vpop.f32.mrb[0].mxu0
    %v2192 = vadd.f32 0.0, %v2191
    %v2193 = vpop.f32.mrb[0].mxu0
    %v2194 = vpop.f32.mrb[0].mxu0
    %v2195 = vpop.f32.mrb[0].mxu0
    %2196 = vdwg.mxu0
    %v2198 = vsel %vm1359, %v1550, 0
    %v2201 = vsel %vm1555, %v587, 0
    %2203 = vmatprep.subr.bf16.mxu0 0
    %2204 = vmatpush1.bf16.msra.mxu0 %v2201
    %2205 = vmatprep.subr.bf16.mxu0 0
    %2206 = vmatpush1.bf16.msra.mxu0 0
    %2207 = vmatprep.subr.bf16.mxu0 0
    %2208 = vmatpush1.bf16.msra.mxu0 0
    %2209 = vmatprep.subr.bf16.mxu0 0
    %2210 = vmatpush1.bf16.msra.mxu0 0
    %2211 = vmatprep.subr.bf16.mxu0 0
    %2212 = vmatpush1.bf16.msra.mxu0 0
    %2213 = vmatprep.subr.bf16.mxu0 0
    %2214 = vmatpush1.bf16.msra.mxu0 0
    %2215 = vmatprep.subr.bf16.mxu0 0
    %2216 = vmatpush1.bf16.msra.mxu0 0
    %2217 = vmatprep.subr.bf16.mxu0 0
    %2218 = vmatpush1.bf16.msra.mxu0 0
    %2219 = vmatprep.subr.bf16.mxu0 0
    %2220 = vmatpush1.bf16.msra.mxu0 0
    %2221 = vmatprep.subr.bf16.mxu0 0
    %2222 = vmatpush1.bf16.msra.mxu0 0
    %2223 = vmatprep.subr.bf16.mxu0 0
    %2224 = vmatpush1.bf16.msra.mxu0 0
    %2225 = vmatprep.subr.bf16.mxu0 0
    %2226 = vmatpush1.bf16.msra.mxu0 0
    %2227 = vmatprep.subr.bf16.mxu0 0
    %2228 = vmatpush1.bf16.msra.mxu0 0
    %2229 = vmatprep.subr.bf16.mxu0 0
    %2230 = vmatpush1.bf16.msra.mxu0 0
    %2231 = vmatprep.subr.bf16.mxu0 0
    %2232 = vmatpush1.bf16.msra.mxu0 0
    %2233 = vmatprep.subr.bf16.mxu0 0
    %2234 = vmatpush1.bf16.msra.mxu0 0
    %2235 = vmatprep.mubr.bf16.mxu0 0
    %2236 = vmatmul.mubr.bf16.gmra.mrb[0].mxu0 %v2198
    %v2237 = vpop.f32.mrb[0].mxu0
    %v2238 = vadd.f32 0.0, %v2237
    %v2239 = vpop.f32.mrb[0].mxu0
    %v2240 = vpop.f32.mrb[0].mxu0
    %v2241 = vpop.f32.mrb[0].mxu0
    %2242 = vdwg.mxu0
    %v2244 = vsel %vm1359, %v1551, 0
    %v2247 = vsel %vm1555, %v589, 0
    %2249 = vmatprep.subr.bf16.mxu0 0
    %2250 = vmatpush1.bf16.msra.mxu0 %v2247
    %2251 = vmatprep.subr.bf16.mxu0 0
    %2252 = vmatpush1.bf16.msra.mxu0 0
    %2253 = vmatprep.subr.bf16.mxu0 0
    %2254 = vmatpush1.bf16.msra.mxu0 0
    %2255 = vmatprep.subr.bf16.mxu0 0
    %2256 = vmatpush1.bf16.msra.mxu0 0
    %2257 = vmatprep.subr.bf16.mxu0 0
    %2258 = vmatpush1.bf16.msra.mxu0 0
    %2259 = vmatprep.subr.bf16.mxu0 0
    %2260 = vmatpush1.bf16.msra.mxu0 0
    %2261 = vmatprep.subr.bf16.mxu0 0
    %2262 = vmatpush1.bf16.msra.mxu0 0
    %2263 = vmatprep.subr.bf16.mxu0 0
    %2264 = vmatpush1.bf16.msra.mxu0 0
    %2265 = vmatprep.subr.bf16.mxu0 0
    %2266 = vmatpush1.bf16.msra.mxu0 0
    %2267 = vmatprep.subr.bf16.mxu0 0
    %2268 = vmatpush1.bf16.msra.mxu0 0
    %2269 = vmatprep.subr.bf16.mxu0 0
    %2270 = vmatpush1.bf16.msra.mxu0 0
    %2271 = vmatprep.subr.bf16.mxu0 0
    %2272 = vmatpush1.bf16.msra.mxu0 0
    %2273 = vmatprep.subr.bf16.mxu0 0
    %2274 = vmatpush1.bf16.msra.mxu0 0
    %2275 = vmatprep.subr.bf16.mxu0 0
    %2276 = vmatpush1.bf16.msra.mxu0 0
    %2277 = vmatprep.subr.bf16.mxu0 0
    %2278 = vmatpush1.bf16.msra.mxu0 0
    %2279 = vmatprep.subr.bf16.mxu0 0
    %2280 = vmatpush1.bf16.msra.mxu0 0
    %2281 = vmatprep.mubr.bf16.mxu0 0
    %2282 = vmatmul.mubr.bf16.gmra.mrb[0].mxu0 %v2244
    %v2283 = vpop.f32.mrb[0].mxu0
    %v2284 = vadd.f32 0.0, %v2283
    %v2285 = vpop.f32.mrb[0].mxu0
    %v2286 = vpop.f32.mrb[0].mxu0
    %v2287 = vpop.f32.mrb[0].mxu0
    %2288 = vdwg.mxu0
    %2291 = vrot.lane.b32.xlu0 %v1686, 16
    %v2292 = vpop.permute.xlu0 %2291
    %2293 = vrot.lane.b32.xlu0 %v1732, 16
    %v2294 = vpop.permute.xlu0 %2293
    %2299 = vrot.lane.b32.xlu0 %v1778, 32
    %v2300 = vpop.permute.xlu0 %2299
    %2301 = vrot.lane.b32.xlu0 %v1824, 32
    %v2302 = vpop.permute.xlu0 %2301
    %2307 = vrot.lane.b32.xlu0 %v1870, 48
    %v2308 = vpop.permute.xlu0 %2307
    %2309 = vrot.lane.b32.xlu0 %v1916, 48
    %v2310 = vpop.permute.xlu0 %2309
    %2315 = vrot.lane.b32.xlu0 %v1962, 64
    %v2316 = vpop.permute.xlu0 %2315
    %2317 = vrot.lane.b32.xlu0 %v2008, 64
    %v2318 = vpop.permute.xlu0 %2317
    %2323 = vrot.lane.b32.xlu0 %v2054, 80
    %v2324 = vpop.permute.xlu0 %2323
    %2325 = vrot.lane.b32.xlu0 %v2100, 80
    %v2326 = vpop.permute.xlu0 %2325
    %2331 = vrot.lane.b32.xlu0 %v2146, 96
    %v2332 = vpop.permute.xlu0 %2331
    %2333 = vrot.lane.b32.xlu0 %v2192, 96
    %v2334 = vpop.permute.xlu0 %2333
    %2339 = vrot.lane.b32.xlu0 %v2238, 112
    %v2340 = vpop.permute.xlu0 %2339
    %2341 = vrot.lane.b32.xlu0 %v2284, 112
    %v2342 = vpop.permute.xlu0 %2341
    %v2345 = vsel %vm590, %v1594, %v2292
    %v2346 = vsel %vm590, %v1640, %v2294
    %vm2347 = vcmask 261120
    %v2348 = vsel %vm2347, %v2345, %v2300
    %v2349 = vsel %vm2347, %v2346, %v2302
    %vm2350 = vcmask 392192
    %v2351 = vsel %vm2350, %v2348, %v2308
    %v2352 = vsel %vm2350, %v2349, %v2310
    %vm2353 = vcmask 523264
    %v2354 = vsel %vm2353, %v2351, %v2316
    %v2355 = vsel %vm2353, %v2352, %v2318
    %vm2356 = vcmask 654336
    %v2357 = vsel %vm2356, %v2354, %v2324
    %v2358 = vsel %vm2356, %v2355, %v2326
    %vm2359 = vcmask 785408
    %v2360 = vsel %vm2359, %v2357, %v2332
    %v2361 = vsel %vm2359, %v2358, %v2334
    %vm2362 = vcmask 916480
    %v2363 = vsel %vm2362, %v2360, %v2340
    %v2364 = vsel %vm2362, %v2361, %v2342
    %v2365 = vpack.c.bf16 %v2364, %v2363
    %v2366 = vlaneseq
    %v2367 = vshrl.u32 %v2366, 7
    %v2368 = vsub.s32 0, %v2367
    %v2369 = vrot.slane %v214, %v2368
    %v2386 = vunpack.c.l.b16 %v478
    %v2387 = vunpack.c.l.b16 %v479
    %v2388 = vunpack.c.l.b16 %v480
    %v2389 = vunpack.c.l.b16 %v481
    %v2390 = vunpack.c.l.b16 %v482
    %v2391 = vunpack.c.l.b16 %v483
    %v2392 = vunpack.c.l.b16 %v484
    %v2393 = vunpack.c.l.b16 %v485
    %v2394 = vunpack.c.l.b16 %v486
    %v2395 = vunpack.c.l.b16 %v487
    %v2396 = vunpack.c.l.b16 %v488
    %v2397 = vunpack.c.l.b16 %v489
    %v2398 = vunpack.c.l.b16 %v490
    %v2399 = vunpack.c.l.b16 %v491
    %v2400 = vunpack.c.l.b16 %v492
    %v2401 = vunpack.c.l.b16 %v493
    %v2402 = vpack.c.b16 %v2387, %v2386
    %v2403 = vpack.c.b16 %v2389, %v2388
    %v2404 = vpack.c.b16 %v2391, %v2390
    %v2405 = vpack.c.b16 %v2393, %v2392
    %v2406 = vpack.c.b16 %v2395, %v2394
    %v2407 = vpack.c.b16 %v2397, %v2396
    %v2408 = vpack.c.b16 %v2399, %v2398
    %v2409 = vpack.c.b16 %v2401, %v2400
    %2418 = vmatprep.subr.bf16.mxu0 0
    %2419 = vmatpush1.bf16.msra.mxu0 %v2402
    %2420 = vmatprep.subr.bf16.mxu0 0
    %2421 = vmatpush1.bf16.msra.mxu0 %v2403
    %2422 = vmatprep.subr.bf16.mxu0 0
    %2423 = vmatpush1.bf16.msra.mxu0 %v2404
    %2424 = vmatprep.subr.bf16.mxu0 0
    %2425 = vmatpush1.bf16.msra.mxu0 %v2405
    %2426 = vmatprep.subr.bf16.mxu0 0
    %2427 = vmatpush1.bf16.msra.mxu0 %v2406
    %2428 = vmatprep.subr.bf16.mxu0 0
    %2429 = vmatpush1.bf16.msra.mxu0 %v2407
    %2430 = vmatprep.subr.bf16.mxu0 0
    %2431 = vmatpush1.bf16.msra.mxu0 %v2408
    %2432 = vmatprep.subr.bf16.mxu0 0
    %2433 = vmatpush1.bf16.msra.mxu0 %v2409
    %2434 = vmatprep.subr.bf16.mxu0 0
    %2435 = vmatpush1.bf16.msra.mxu0 0
    %2436 = vmatprep.subr.bf16.mxu0 0
    %2437 = vmatpush1.bf16.msra.mxu0 0
    %2438 = vmatprep.subr.bf16.mxu0 0
    %2439 = vmatpush1.bf16.msra.mxu0 0
    %2440 = vmatprep.subr.bf16.mxu0 0
    %2441 = vmatpush1.bf16.msra.mxu0 0
    %2442 = vmatprep.subr.bf16.mxu0 0
    %2443 = vmatpush1.bf16.msra.mxu0 0
    %2444 = vmatprep.subr.bf16.mxu0 0
    %2445 = vmatpush1.bf16.msra.mxu0 0
    %2446 = vmatprep.subr.bf16.mxu0 0
    %2447 = vmatpush1.bf16.msra.mxu0 0
    %2448 = vmatprep.subr.bf16.mxu0 0
    %2449 = vmatpush1.bf16.msra.mxu0 0
    %2450 = vmatprep.mubr.bf16.mxu0 0
    %2451 = vmatmul.mubr.bf16.gmra.mrb[0].mxu0 %v2365
    %v2452 = vpop.f32.mrb[0].mxu0
    %v2453 = vadd.f32 %v2369, %v2452
    %v2454 = vpop.f32.mrb[0].mxu0
    %v2455 = vpop.f32.mrb[0].mxu0
    %v2456 = vadd.f32 %v2369, %v2455
    %v2457 = vpop.f32.mrb[0].mxu0
    %2458 = vdwg.mxu0
    %v2459 = vadd.f32 %v2453, %v192
    %v2460 = vadd.f32 %v2456, %v193
    %2461 = vadd.xlane.f32.xlu0 %v2459
    %v2462 = vpop.xlane.xlu0 %2461
    %2463 = vadd.xlane.f32.xlu0 %v2460
    %v2464 = vpop.xlane.xlu0 %2463
    %v2465 = vrcp.pop 128.0
    %v2466 = vmul.f32 %v2462, %v2465
    %v2467 = vmul.f32 %v2464, %v2465
    %v2468 = vsub.f32 %v2459, %v2466
    %v2469 = vsub.f32 %v2460, %v2467
    %v2470 = vmul.f32 %v2468, %v2468
    %v2471 = vmul.f32 %v2469, %v2469
    %2472 = vadd.xlane.f32.xlu0 %v2470
    %v2473 = vpop.xlane.xlu0 %2472
    %2474 = vadd.xlane.f32.xlu0 %v2471
    %v2475 = vpop.xlane.xlu0 %2474
    %v2476 = vmul.f32 %v2473, %v2465
    %v2477 = vmul.f32 %v2475, %v2465
    %v2478 = vadd.f32 %v2476, 1e-05
    %v2479 = vadd.f32 %v2477, 1e-05
    %v2480 = vrsqrt.pop %v2478
    %v2481 = vrsqrt.pop %v2479
    %v2482 = vmul.f32 %v2468, %v2480
    %v2483 = vmul.f32 %v2469, %v2481
    %v2484 = vlaneseq
    %v2485 = vshrl.u32 %v2484, 7
    %v2486 = vsub.s32 1, %v2485
    %v2487 = vrot.slane %v214, %v2486
    %v2488 = vmul.f32 %v2482, %v2487
    %v2489 = vmul.f32 %v2483, %v2487
    %v2490 = vlaneseq
    %v2491 = vshrl.u32 %v2490, 7
    %v2492 = vsub.s32 2, %v2491
    %v2493 = vrot.slane %v214, %v2492
    %v2494 = vadd.f32 %v2488, %v2493
    %v2495 = vadd.f32 %v2489, %v2493
    %v2496 = vpack.c.bf16 %v2495, %v2494
    %v2497 = vld [vmem:[#allocation11] sm:$0xf]
    %v2498 = vld [vmem:[#allocation11 + $0x4] sm:$0xf]
    %v2499 = vld [vmem:[#allocation11 + $0x8] sm:$0xf]
    %v2500 = vld [vmem:[#allocation11 + $0xc] sm:$0xf]
    %v2501 = vld [vmem:[#allocation11 + $0x10] sm:$0xf]
    %v2502 = vld [vmem:[#allocation11 + $0x14] sm:$0xf]
    %v2503 = vld [vmem:[#allocation11 + $0x18] sm:$0xf]
    %v2504 = vld [vmem:[#allocation11 + $0x1c] sm:$0xf]
    %v2505 = vld [vmem:[#allocation11 + $0x20] sm:$0xf]
    %v2506 = vld [vmem:[#allocation11 + $0x24] sm:$0xf]
    %v2507 = vld [vmem:[#allocation11 + $0x28] sm:$0xf]
    %v2508 = vld [vmem:[#allocation11 + $0x2c] sm:$0xf]
    %v2509 = vld [vmem:[#allocation11 + $0x30] sm:$0xf]
    %v2510 = vld [vmem:[#allocation11 + $0x34] sm:$0xf]
    %v2511 = vld [vmem:[#allocation11 + $0x38] sm:$0xf]
    %v2512 = vld [vmem:[#allocation11 + $0x3c] sm:$0xf]
    %v2513 = vlaneseq
    %v2514 = vshrl.u32 %v2513, 7
    %v2515 = vsub.s32 3, %v2514
    %v2516 = vrot.slane %v214, %v2515
    %v2533 = vunpack.c.l.b16 %v2497
    %v2534 = vunpack.c.l.b16 %v2498
    %v2535 = vunpack.c.l.b16 %v2499
    %v2536 = vunpack.c.l.b16 %v2500
    %v2537 = vunpack.c.l.b16 %v2501
    %v2538 = vunpack.c.l.b16 %v2502
    %v2539 = vunpack.c.l.b16 %v2503
    %v2540 = vunpack.c.l.b16 %v2504
    %v2541 = vunpack.c.l.b16 %v2505
    %v2542 = vunpack.c.l.b16 %v2506
    %v2543 = vunpack.c.l.b16 %v2507
    %v2544 = vunpack.c.l.b16 %v2508
    %v2545 = vunpack.c.l.b16 %v2509
    %v2546 = vunpack.c.l.b16 %v2510
    %v2547 = vunpack.c.l.b16 %v2511
    %v2548 = vunpack.c.l.b16 %v2512
    %v2549 = vpack.c.b16 %v2534, %v2533
    %v2550 = vpack.c.b16 %v2536, %v2535
    %v2551 = vpack.c.b16 %v2538, %v2537
    %v2552 = vpack.c.b16 %v2540, %v2539
    %v2553 = vpack.c.b16 %v2542, %v2541
    %v2554 = vpack.c.b16 %v2544, %v2543
    %v2555 = vpack.c.b16 %v2546, %v2545
    %v2556 = vpack.c.b16 %v2548, %v2547
    %2565 = vmatprep.subr.bf16.mxu0 0
    %2566 = vmatpush1.bf16.msra.mxu0 %v2549
    %2567 = vmatprep.subr.bf16.mxu0 0
    %2568 = vmatpush1.bf16.msra.mxu0 %v2550
    %2569 = vmatprep.subr.bf16.mxu0 0
    %2570 = vmatpush1.bf16.msra.mxu0 %v2551
    %2571 = vmatprep.subr.bf16.mxu0 0
    %2572 = vmatpush1.bf16.msra.mxu0 %v2552
    %2573 = vmatprep.subr.bf16.mxu0 0
    %2574 = vmatpush1.bf16.msra.mxu0 %v2553
    %2575 = vmatprep.subr.bf16.mxu0 0
    %2576 = vmatpush1.bf16.msra.mxu0 %v2554
    %2577 = vmatprep.subr.bf16.mxu0 0
    %2578 = vmatpush1.bf16.msra.mxu0 %v2555
    %2579 = vmatprep.subr.bf16.mxu0 0
    %2580 = vmatpush1.bf16.msra.mxu0 %v2556
    %2581 = vmatprep.subr.bf16.mxu0 0
    %2582 = vmatpush1.bf16.msra.mxu0 0
    %2583 = vmatprep.subr.bf16.mxu0 0
    %2584 = vmatpush1.bf16.msra.mxu0 0
    %2585 = vmatprep.subr.bf16.mxu0 0
    %2586 = vmatpush1.bf16.msra.mxu0 0
    %2587 = vmatprep.subr.bf16.mxu0 0
    %2588 = vmatpush1.bf16.msra.mxu0 0
    %2589 = vmatprep.subr.bf16.mxu0 0
    %2590 = vmatpush1.bf16.msra.mxu0 0
    %2591 = vmatprep.subr.bf16.mxu0 0
    %2592 = vmatpush1.bf16.msra.mxu0 0
    %2593 = vmatprep.subr.bf16.mxu0 0
    %2594 = vmatpush1.bf16.msra.mxu0 0
    %2595 = vmatprep.subr.bf16.mxu0 0
    %2596 = vmatpush1.bf16.msra.mxu0 0
    %2597 = vmatprep.mubr.bf16.mxu0 0
    %2598 = vmatmul.mubr.bf16.gmra.mrb[0].mxu0 %v2496
    %v2599 = vpop.f32.mrb[0].mxu0
    %v2600 = vadd.f32 %v2516, %v2599
    %v2601 = vpop.f32.mrb[0].mxu0
    %v2602 = vpop.f32.mrb[0].mxu0
    %v2603 = vadd.f32 %v2516, %v2602
    %v2604 = vpop.f32.mrb[0].mxu0
    %2605 = vdwg.mxu0
    %v2606 = vpack.c.bf16 %v195, %v194
    %v2607 = vpack.c.bf16 %v197, %v196
    %v2608 = vld [vmem:[#allocation13] sm:$0xff]
    %v2609 = vld [vmem:[#allocation13 + $0x8] sm:$0xff]
    %v2610 = vld [vmem:[#allocation13 + $0x10] sm:$0xff]
    %v2611 = vld [vmem:[#allocation13 + $0x18] sm:$0xff]
    %v2612 = vld [vmem:[#allocation13 + $0x20] sm:$0xff]
    %v2613 = vld [vmem:[#allocation13 + $0x28] sm:$0xff]
    %v2614 = vld [vmem:[#allocation13 + $0x30] sm:$0xff]
    %v2615 = vld [vmem:[#allocation13 + $0x38] sm:$0xff]
    %v2616 = vld [vmem:[#allocation13 + $0x40] sm:$0xff]
    %v2617 = vld [vmem:[#allocation13 + $0x48] sm:$0xff]
    %v2618 = vld [vmem:[#allocation13 + $0x50] sm:$0xff]
    %v2619 = vld [vmem:[#allocation13 + $0x58] sm:$0xff]
    %v2620 = vld [vmem:[#allocation13 + $0x60] sm:$0xff]
    %v2621 = vld [vmem:[#allocation13 + $0x68] sm:$0xff]
    %v2622 = vld [vmem:[#allocation13 + $0x70] sm:$0xff]
    %v2623 = vld [vmem:[#allocation13 + $0x78] sm:$0xff]
    %v2624 = vld [vmem:[%s12] sm:$0x3]
    %v2626 = vlaneseq
    %v2627 = vshrl.u32 %v2626, 7
    %v2628 = vsub.s32 0, %v2627
    %v2629 = vrot.slane %v2624, %v2628
    %v2630 = vlaneseq
    %v2631 = vshrl.u32 %v2630, 7
    %v2632 = vsub.s32 1, %v2631
    %v2633 = vrot.slane %v2624, %v2632
    %v2652 = vunpack.c.l.b16 %v2608
    %v2653 = vunpack.c.h.b16 %v2608
    %v2654 = vunpack.c.l.b16 %v2609
    %v2655 = vunpack.c.h.b16 %v2609
    %v2656 = vunpack.c.l.b16 %v2610
    %v2657 = vunpack.c.h.b16 %v2610
    %v2658 = vunpack.c.l.b16 %v2611
    %v2659 = vunpack.c.h.b16 %v2611
    %v2660 = vunpack.c.l.b16 %v2612
    %v2661 = vunpack.c.h.b16 %v2612
    %v2662 = vunpack.c.l.b16 %v2613
    %v2663 = vunpack.c.h.b16 %v2613
    %v2664 = vunpack.c.l.b16 %v2614
    %v2665 = vunpack.c.h.b16 %v2614
    %v2666 = vunpack.c.l.b16 %v2615
    %v2667 = vunpack.c.h.b16 %v2615
    %v2668 = vunpack.c.l.b16 %v2616
    %v2669 = vunpack.c.h.b16 %v2616
    %v2670 = vunpack.c.l.b16 %v2617
    %v2671 = vunpack.c.h.b16 %v2617
    %v2672 = vunpack.c.l.b16 %v2618
    %v2673 = vunpack.c.h.b16 %v2618
    %v2674 = vunpack.c.l.b16 %v2619
    %v2675 = vunpack.c.h.b16 %v2619
    %v2676 = vunpack.c.l.b16 %v2620
    %v2677 = vunpack.c.h.b16 %v2620
    %v2678 = vunpack.c.l.b16 %v2621
    %v2679 = vunpack.c.h.b16 %v2621
    %v2680 = vunpack.c.l.b16 %v2622
    %v2681 = vunpack.c.h.b16 %v2622
    %v2682 = vunpack.c.l.b16 %v2623
    %v2683 = vunpack.c.h.b16 %v2623
    %v2684 = vpack.c.b16 %v2654, %v2652
    %v2685 = vpack.c.b16 %v2655, %v2653
    %v2686 = vpack.c.b16 %v2658, %v2656
    %v2687 = vpack.c.b16 %v2659, %v2657
    %v2688 = vpack.c.b16 %v2662, %v2660
    %v2689 = vpack.c.b16 %v2663, %v2661
    %v2690 = vpack.c.b16 %v2666, %v2664
    %v2691 = vpack.c.b16 %v2667, %v2665
    %v2692 = vpack.c.b16 %v2670, %v2668
    %v2693 = vpack.c.b16 %v2671, %v2669
    %v2694 = vpack.c.b16 %v2674, %v2672
    %v2695 = vpack.c.b16 %v2675, %v2673
    %v2696 = vpack.c.b16 %v2678, %v2676
    %v2697 = vpack.c.b16 %v2679, %v2677
    %v2698 = vpack.c.b16 %v2682, %v2680
    %v2699 = vpack.c.b16 %v2683, %v2681
    %2716 = vmatprep.subr.bf16.mxu0 %v2685
    %2717 = vmatpush1.bf16.msra.mxu0 %v2684
    %2718 = vmatprep.subr.bf16.mxu0 %v2687
    %2719 = vmatpush1.bf16.msra.mxu0 %v2686
    %2720 = vmatprep.subr.bf16.mxu0 %v2689
    %2721 = vmatpush1.bf16.msra.mxu0 %v2688
    %2722 = vmatprep.subr.bf16.mxu0 %v2691
    %2723 = vmatpush1.bf16.msra.mxu0 %v2690
    %2724 = vmatprep.subr.bf16.mxu0 %v2693
    %2725 = vmatpush1.bf16.msra.mxu0 %v2692
    %2726 = vmatprep.subr.bf16.mxu0 %v2695
    %2727 = vmatpush1.bf16.msra.mxu0 %v2694
    %2728 = vmatprep.subr.bf16.mxu0 %v2697
    %2729 = vmatpush1.bf16.msra.mxu0 %v2696
    %2730 = vmatprep.subr.bf16.mxu0 %v2699
    %2731 = vmatpush1.bf16.msra.mxu0 %v2698
    %2732 = vmatprep.subr.bf16.mxu0 0
    %2733 = vmatpush1.bf16.msra.mxu0 0
    %2734 = vmatprep.subr.bf16.mxu0 0
    %2735 = vmatpush1.bf16.msra.mxu0 0
    %2736 = vmatprep.subr.bf16.mxu0 0
    %2737 = vmatpush1.bf16.msra.mxu0 0
    %2738 = vmatprep.subr.bf16.mxu0 0
    %2739 = vmatpush1.bf16.msra.mxu0 0
    %2740 = vmatprep.subr.bf16.mxu0 0
    %2741 = vmatpush1.bf16.msra.mxu0 0
    %2742 = vmatprep.subr.bf16.mxu0 0
    %2743 = vmatpush1.bf16.msra.mxu0 0
    %2744 = vmatprep.subr.bf16.mxu0 0
    %2745 = vmatpush1.bf16.msra.mxu0 0
    %2746 = vmatprep.subr.bf16.mxu0 0
    %2747 = vmatpush1.bf16.msra.mxu0 0
    %2748 = vmatprep.mubr.bf16.mxu0 0
    %2749 = vmatmul.mubr.bf16.gmra.mrb[0].mxu0 %v2606
    %v2750 = vpop.f32.mrb[0].mxu0
    %v2751 = vadd.f32 %v2629, %v2750
    %v2752 = vpop.f32.mrb[0].mxu0
    %v2753 = vadd.f32 %v2633, %v2752
    %v2754 = vpop.f32.mrb[0].mxu0
    %v2755 = vadd.f32 %v2629, %v2754
    %v2756 = vpop.f32.mrb[0].mxu0
    %v2757 = vadd.f32 %v2633, %v2756
    %2758 = vmatprep.mubr.bf16.mxu0 0
    %2759 = vmatmul.mubr.bf16.gmra.mrb[0].mxu0 %v2607
    %v2760 = vpop.f32.mrb[0].mxu0
    %v2761 = vadd.f32 %v2629, %v2760
    %v2762 = vpop.f32.mrb[0].mxu0
    %v2763 = vadd.f32 %v2633, %v2762
    %v2764 = vpop.f32.mrb[0].mxu0
    %v2765 = vadd.f32 %v2629, %v2764
    %v2766 = vpop.f32.mrb[0].mxu0
    %v2767 = vadd.f32 %v2633, %v2766
    %2768 = vdwg.mxu0
    %v2769 = vld [vmem:[#allocation14] sm:$0xf]
    %v2770 = vld [vmem:[#allocation14 + $0x4] sm:$0xf]
    %v2771 = vld [vmem:[#allocation14 + $0x8] sm:$0xf]
    %v2772 = vld [vmem:[#allocation14 + $0xc] sm:$0xf]
    %v2773 = vld [vmem:[#allocation14 + $0x10] sm:$0xf]
    %v2774 = vld [vmem:[#allocation14 + $0x14] sm:$0xf]
    %v2775 = vld [vmem:[#allocation14 + $0x18] sm:$0xf]
    %v2776 = vld [vmem:[#allocation14 + $0x1c] sm:$0xf]
    %v2777 = vld [vmem:[#allocation14 + $0x20] sm:$0xf]
    %v2778 = vld [vmem:[#allocation14 + $0x24] sm:$0xf]
    %v2779 = vld [vmem:[#allocation14 + $0x28] sm:$0xf]
    %v2780 = vld [vmem:[#allocation14 + $0x2c] sm:$0xf]
    %v2781 = vld [vmem:[#allocation14 + $0x30] sm:$0xf]
    %v2782 = vld [vmem:[#allocation14 + $0x34] sm:$0xf]
    %v2783 = vld [vmem:[#allocation14 + $0x38] sm:$0xf]
    %v2784 = vld [vmem:[#allocation14 + $0x3c] sm:$0xf]
    %v2785 = vpack.c.bf16 %v2600, %v2600
    %v2786 = vpack.c.bf16 %v2603, %v2603
    %2789 = vrot.lane.b32.xlu0 %v2785, 112
    %v2790 = vpop.permute.xlu0 %2789
    %2791 = vrot.lane.b32.xlu0 %v2786, 112
    %v2792 = vpop.permute.xlu0 %2791
    %2793 = vrot.lane.b32.xlu0 %v2785, 96
    %v2794 = vpop.permute.xlu0 %2793
    %2795 = vrot.lane.b32.xlu0 %v2786, 96
    %v2796 = vpop.permute.xlu0 %2795
    %2797 = vrot.lane.b32.xlu0 %v2785, 80
    %v2798 = vpop.permute.xlu0 %2797
    %2799 = vrot.lane.b32.xlu0 %v2786, 80
    %v2800 = vpop.permute.xlu0 %2799
    %2801 = vrot.lane.b32.xlu0 %v2785, 64
    %v2802 = vpop.permute.xlu0 %2801
    %2803 = vrot.lane.b32.xlu0 %v2786, 64
    %v2804 = vpop.permute.xlu0 %2803
    %2805 = vrot.lane.b32.xlu0 %v2785, 48
    %v2806 = vpop.permute.xlu0 %2805
    %2807 = vrot.lane.b32.xlu0 %v2786, 48
    %v2808 = vpop.permute.xlu0 %2807
    %2809 = vrot.lane.b32.xlu0 %v2785, 32
    %v2810 = vpop.permute.xlu0 %2809
    %2811 = vrot.lane.b32.xlu0 %v2786, 32
    %v2812 = vpop.permute.xlu0 %2811
    %2813 = vrot.lane.b32.xlu0 %v2785, 16
    %v2814 = vpop.permute.xlu0 %2813
    %2815 = vrot.lane.b32.xlu0 %v2786, 16
    %v2816 = vpop.permute.xlu0 %2815
    %v2817 = vpack.c.bf16 %v2755, %v2751
    %v2818 = vpack.c.bf16 %v2765, %v2761
    %2821 = vrot.lane.b32.xlu0 %v2817, 112
    %v2822 = vpop.permute.xlu0 %2821
    %2823 = vrot.lane.b32.xlu0 %v2818, 112
    %v2824 = vpop.permute.xlu0 %2823
    %2825 = vrot.lane.b32.xlu0 %v2817, 96
    %v2826 = vpop.permute.xlu0 %2825
    %2827 = vrot.lane.b32.xlu0 %v2818, 96
    %v2828 = vpop.permute.xlu0 %2827
    %2829 = vrot.lane.b32.xlu0 %v2817, 80
    %v2830 = vpop.permute.xlu0 %2829
    %2831 = vrot.lane.b32.xlu0 %v2818, 80
    %v2832 = vpop.permute.xlu0 %2831
    %2833 = vrot.lane.b32.xlu0 %v2817, 64
    %v2834 = vpop.permute.xlu0 %2833
    %2835 = vrot.lane.b32.xlu0 %v2818, 64
    %v2836 = vpop.permute.xlu0 %2835
    %2837 = vrot.lane.b32.xlu0 %v2817, 48
    %v2838 = vpop.permute.xlu0 %2837
    %2839 = vrot.lane.b32.xlu0 %v2818, 48
    %v2840 = vpop.permute.xlu0 %2839
    %2841 = vrot.lane.b32.xlu0 %v2817, 32
    %v2842 = vpop.permute.xlu0 %2841
    %2843 = vrot.lane.b32.xlu0 %v2818, 32
    %v2844 = vpop.permute.xlu0 %2843
    %2845 = vrot.lane.b32.xlu0 %v2817, 16
    %v2846 = vpop.permute.xlu0 %2845
    %2847 = vrot.lane.b32.xlu0 %v2818, 16
    %v2848 = vpop.permute.xlu0 %2847
    %v2849 = vpack.c.bf16 %v2757, %v2753
    %v2850 = vpack.c.bf16 %v2767, %v2763
    %2853 = vrot.lane.b32.xlu0 %v2849, 112
    %v2854 = vpop.permute.xlu0 %2853
    %2855 = vrot.lane.b32.xlu0 %v2850, 112
    %v2856 = vpop.permute.xlu0 %2855
    %2859 = vrot.lane.b32.xlu0 %v2849, 96
    %v2860 = vpop.permute.xlu0 %2859
    %2861 = vrot.lane.b32.xlu0 %v2850, 96
    %v2862 = vpop.permute.xlu0 %2861
    %2865 = vrot.lane.b32.xlu0 %v2849, 80
    %v2866 = vpop.permute.xlu0 %2865
    %2867 = vrot.lane.b32.xlu0 %v2850, 80
    %v2868 = vpop.permute.xlu0 %2867
    %2871 = vrot.lane.b32.xlu0 %v2849, 64
    %v2872 = vpop.permute.xlu0 %2871
    %2873 = vrot.lane.b32.xlu0 %v2850, 64
    %v2874 = vpop.permute.xlu0 %2873
    %2877 = vrot.lane.b32.xlu0 %v2849, 48
    %v2878 = vpop.permute.xlu0 %2877
    %2879 = vrot.lane.b32.xlu0 %v2850, 48
    %v2880 = vpop.permute.xlu0 %2879
    %2883 = vrot.lane.b32.xlu0 %v2849, 32
    %v2884 = vpop.permute.xlu0 %2883
    %2885 = vrot.lane.b32.xlu0 %v2850, 32
    %v2886 = vpop.permute.xlu0 %2885
    %2889 = vrot.lane.b32.xlu0 %v2849, 16
    %v2890 = vpop.permute.xlu0 %2889
    %2891 = vrot.lane.b32.xlu0 %v2850, 16
    %v2892 = vpop.permute.xlu0 %2891
    %v2896 = vsel %vm590, %v2785, 0
    %v2899 = vsel %vm590, %v2817, 0
    %2901 = vmatprep.subr.bf16.mxu0 0
    %2902 = vmatpush1.bf16.xpose.msra.mxu0 %v2899
    %2903 = vmatprep.subr.bf16.mxu0 0
    %2904 = vmatpush1.bf16.xpose.msra.mxu0 0
    %2905 = vmatprep.subr.bf16.mxu0 0
    %2906 = vmatpush1.bf16.xpose.msra.mxu0 0
    %2907 = vmatprep.subr.bf16.mxu0 0
    %2908 = vmatpush1.bf16.xpose.msra.mxu0 0
    %2909 = vmatprep.subr.bf16.mxu0 0
    %2910 = vmatpush1.bf16.xpose.msra.mxu0 0
    %2911 = vmatprep.subr.bf16.mxu0 0
    %2912 = vmatpush1.bf16.xpose.msra.mxu0 0
    %2913 = vmatprep.subr.bf16.mxu0 0
    %2914 = vmatpush1.bf16.xpose.msra.mxu0 0
    %2915 = vmatprep.subr.bf16.mxu0 0
    %2916 = vmatpush1.bf16.xpose.msra.mxu0 0
    %2917 = vmatprep.subr.bf16.mxu0 0
    %2918 = vmatpush1.bf16.xpose.msra.mxu0 0
    %2919 = vmatprep.subr.bf16.mxu0 0
    %2920 = vmatpush1.bf16.xpose.msra.mxu0 0
    %2921 = vmatprep.subr.bf16.mxu0 0
    %2922 = vmatpush1.bf16.xpose.msra.mxu0 0
    %2923 = vmatprep.subr.bf16.mxu0 0
    %2924 = vmatpush1.bf16.xpose.msra.mxu0 0
    %2925 = vmatprep.subr.bf16.mxu0 0
    %2926 = vmatpush1.bf16.xpose.msra.mxu0 0
    %2927 = vmatprep.subr.bf16.mxu0 0
    %2928 = vmatpush1.bf16.xpose.msra.mxu0 0
    %2929 = vmatprep.subr.bf16.mxu0 0
    %2930 = vmatpush1.bf16.xpose.msra.mxu0 0
    %2931 = vmatprep.subr.bf16.mxu0 0
    %2932 = vmatpush1.bf16.xpose.msra.mxu0 0
    %2933 = vmatprep.mubr.bf16.mxu0 0
    %2934 = vmatmul.mubr.bf16.gmra.mrb[0].mxu0 %v2896
    %v2935 = vpop.f32.mrb[0].mxu0
    %v2936 = vadd.f32 0.0, %v2935
    %v2937 = vpop.f32.mrb[0].mxu0
    %v2938 = vpop.f32.mrb[0].mxu0
    %v2939 = vpop.f32.mrb[0].mxu0
    %2940 = vdwg.mxu0
    %v2942 = vsel %vm590, %v2786, 0
    %v2945 = vsel %vm590, %v2818, 0
    %2947 = vmatprep.subr.bf16.mxu0 0
    %2948 = vmatpush1.bf16.xpose.msra.mxu0 %v2945
    %2949 = vmatprep.subr.bf16.mxu0 0
    %2950 = vmatpush1.bf16.xpose.msra.mxu0 0
    %2951 = vmatprep.subr.bf16.mxu0 0
    %2952 = vmatpush1.bf16.xpose.msra.mxu0 0
    %2953 = vmatprep.subr.bf16.mxu0 0
    %2954 = vmatpush1.bf16.xpose.msra.mxu0 0
    %2955 = vmatprep.subr.bf16.mxu0 0
    %2956 = vmatpush1.bf16.xpose.msra.mxu0 0
    %2957 = vmatprep.subr.bf16.mxu0 0
    %2958 = vmatpush1.bf16.xpose.msra.mxu0 0
    %2959 = vmatprep.subr.bf16.mxu0 0
    %2960 = vmatpush1.bf16.xpose.msra.mxu0 0
    %2961 = vmatprep.subr.bf16.mxu0 0
    %2962 = vmatpush1.bf16.xpose.msra.mxu0 0
    %2963 = vmatprep.subr.bf16.mxu0 0
    %2964 = vmatpush1.bf16.xpose.msra.mxu0 0
    %2965 = vmatprep.subr.bf16.mxu0 0
    %2966 = vmatpush1.bf16.xpose.msra.mxu0 0
    %2967 = vmatprep.subr.bf16.mxu0 0
    %2968 = vmatpush1.bf16.xpose.msra.mxu0 0
    %2969 = vmatprep.subr.bf16.mxu0 0
    %2970 = vmatpush1.bf16.xpose.msra.mxu0 0
    %2971 = vmatprep.subr.bf16.mxu0 0
    %2972 = vmatpush1.bf16.xpose.msra.mxu0 0
    %2973 = vmatprep.subr.bf16.mxu0 0
    %2974 = vmatpush1.bf16.xpose.msra.mxu0 0
    %2975 = vmatprep.subr.bf16.mxu0 0
    %2976 = vmatpush1.bf16.xpose.msra.mxu0 0
    %2977 = vmatprep.subr.bf16.mxu0 0
    %2978 = vmatpush1.bf16.xpose.msra.mxu0 0
    %2979 = vmatprep.mubr.bf16.mxu0 0
    %2980 = vmatmul.mubr.bf16.gmra.mrb[0].mxu0 %v2942
    %v2981 = vpop.f32.mrb[0].mxu0
    %v2982 = vadd.f32 0.0, %v2981
    %v2983 = vpop.f32.mrb[0].mxu0
    %v2984 = vpop.f32.mrb[0].mxu0
    %v2985 = vpop.f32.mrb[0].mxu0
    %2986 = vdwg.mxu0
    %v2988 = vsel %vm590, %v2790, 0
    %v2991 = vsel %vm590, %v2822, 0
    %2993 = vmatprep.subr.bf16.mxu0 0
    %2994 = vmatpush1.bf16.xpose.msra.mxu0 %v2991
    %2995 = vmatprep.subr.bf16.mxu0 0
    %2996 = vmatpush1.bf16.xpose.msra.mxu0 0
    %2997 = vmatprep.subr.bf16.mxu0 0
    %2998 = vmatpush1.bf16.xpose.msra.mxu0 0
    %2999 = vmatprep.subr.bf16.mxu0 0
    %3000 = vmatpush1.bf16.xpose.msra.mxu0 0
    %3001 = vmatprep.subr.bf16.mxu0 0
    %3002 = vmatpush1.bf16.xpose.msra.mxu0 0
    %3003 = vmatprep.subr.bf16.mxu0 0
    %3004 = vmatpush1.bf16.xpose.msra.mxu0 0
    %3005 = vmatprep.subr.bf16.mxu0 0
    %3006 = vmatpush1.bf16.xpose.msra.mxu0 0
    %3007 = vmatprep.subr.bf16.mxu0 0
    %3008 = vmatpush1.bf16.xpose.msra.mxu0 0
    %3009 = vmatprep.subr.bf16.mxu0 0
    %3010 = vmatpush1.bf16.xpose.msra.mxu0 0
    %3011 = vmatprep.subr.bf16.mxu0 0
    %3012 = vmatpush1.bf16.xpose.msra.mxu0 0
    %3013 = vmatprep.subr.bf16.mxu0 0
    %3014 = vmatpush1.bf16.xpose.msra.mxu0 0
    %3015 = vmatprep.subr.bf16.mxu0 0
    %3016 = vmatpush1.bf16.xpose.msra.mxu0 0
    %3017 = vmatprep.subr.bf16.mxu0 0
    %3018 = vmatpush1.bf16.xpose.msra.mxu0 0
    %3019 = vmatprep.subr.bf16.mxu0 0
    %3020 = vmatpush1.bf16.xpose.msra.mxu0 0
    %3021 = vmatprep.subr.bf16.mxu0 0
    %3022 = vmatpush1.bf16.xpose.msra.mxu0 0
    %3023 = vmatprep.subr.bf16.mxu0 0
    %3024 = vmatpush1.bf16.xpose.msra.mxu0 0
    %3025 = vmatprep.mubr.bf16.mxu0 0
    %3026 = vmatmul.mubr.bf16.gmra.mrb[0].mxu0 %v2988
    %v3027 = vpop.f32.mrb[0].mxu0
    %v3028 = vadd.f32 0.0, %v3027
    %v3029 = vpop.f32.mrb[0].mxu0
    %v3030 = vpop.f32.mrb[0].mxu0
    %v3031 = vpop.f32.mrb[0].mxu0
    %3032 = vdwg.mxu0
    %v3034 = vsel %vm590, %v2792, 0
    %v3037 = vsel %vm590, %v2824, 0
    %3039 = vmatprep.subr.bf16.mxu0 0
    %3040 = vmatpush1.bf16.xpose.msra.mxu0 %v3037
    %3041 = vmatprep.subr.bf16.mxu0 0
    %3042 = vmatpush1.bf16.xpose.msra.mxu0 0
    %3043 = vmatprep.subr.bf16.mxu0 0
    %3044 = vmatpush1.bf16.xpose.msra.mxu0 0
    %3045 = vmatprep.subr.bf16.mxu0 0
    %3046 = vmatpush1.bf16.xpose.msra.mxu0 0
    %3047 = vmatprep.subr.bf16.mxu0 0
    %3048 = vmatpush1.bf16.xpose.msra.mxu0 0
    %3049 = vmatprep.subr.bf16.mxu0 0
    %3050 = vmatpush1.bf16.xpose.msra.mxu0 0
    %3051 = vmatprep.subr.bf16.mxu0 0
    %3052 = vmatpush1.bf16.xpose.msra.mxu0 0
    %3053 = vmatprep.subr.bf16.mxu0 0
    %3054 = vmatpush1.bf16.xpose.msra.mxu0 0
    %3055 = vmatprep.subr.bf16.mxu0 0
    %3056 = vmatpush1.bf16.xpose.msra.mxu0 0
    %3057 = vmatprep.subr.bf16.mxu0 0
    %3058 = vmatpush1.bf16.xpose.msra.mxu0 0
    %3059 = vmatprep.subr.bf16.mxu0 0
    %3060 = vmatpush1.bf16.xpose.msra.mxu0 0
    %3061 = vmatprep.subr.bf16.mxu0 0
    %3062 = vmatpush1.bf16.xpose.msra.mxu0 0
    %3063 = vmatprep.subr.bf16.mxu0 0
    %3064 = vmatpush1.bf16.xpose.msra.mxu0 0
    %3065 = vmatprep.subr.bf16.mxu0 0
    %3066 = vmatpush1.bf16.xpose.msra.mxu0 0
    %3067 = vmatprep.subr.bf16.mxu0 0
    %3068 = vmatpush1.bf16.xpose.msra.mxu0 0
    %3069 = vmatprep.subr.bf16.mxu0 0
    %3070 = vmatpush1.bf16.xpose.msra.mxu0 0
    %3071 = vmatprep.mubr.bf16.mxu0 0
    %3072 = vmatmul.mubr.bf16.gmra.mrb[0].mxu0 %v3034
    %v3073 = vpop.f32.mrb[0].mxu0
    %v3074 = vadd.f32 0.0, %v3073
    %v3075 = vpop.f32.mrb[0].mxu0
    %v3076 = vpop.f32.mrb[0].mxu0
    %v3077 = vpop.f32.mrb[0].mxu0
    %3078 = vdwg.mxu0
    %v3080 = vsel %vm590, %v2794, 0
    %v3083 = vsel %vm590, %v2826, 0
    %3085 = vmatprep.subr.bf16.mxu0 0
    %3086 = vmatpush1.bf16.xpose.msra.mxu0 %v3083
    %3087 = vmatprep.subr.bf16.mxu0 0
    %3088 = vmatpush1.bf16.xpose.msra.mxu0 0
    %3089 = vmatprep.subr.bf16.mxu0 0
    %3090 = vmatpush1.bf16.xpose.msra.mxu0 0
    %3091 = vmatprep.subr.bf16.mxu0 0
    %3092 = vmatpush1.bf16.xpose.msra.mxu0 0
    %3093 = vmatprep.subr.bf16.mxu0 0
    %3094 = vmatpush1.bf16.xpose.msra.mxu0 0
    %3095 = vmatprep.subr.bf16.mxu0 0
    %3096 = vmatpush1.bf16.xpose.msra.mxu0 0
    %3097 = vmatprep.subr.bf16.mxu0 0
    %3098 = vmatpush1.bf16.xpose.msra.mxu0 0
    %3099 = vmatprep.subr.bf16.mxu0 0
    %3100 = vmatpush1.bf16.xpose.msra.mxu0 0
    %3101 = vmatprep.subr.bf16.mxu0 0
    %3102 = vmatpush1.bf16.xpose.msra.mxu0 0
    %3103 = vmatprep.subr.bf16.mxu0 0
    %3104 = vmatpush1.bf16.xpose.msra.mxu0 0
    %3105 = vmatprep.subr.bf16.mxu0 0
    %3106 = vmatpush1.bf16.xpose.msra.mxu0 0
    %3107 = vmatprep.subr.bf16.mxu0 0
    %3108 = vmatpush1.bf16.xpose.msra.mxu0 0
    %3109 = vmatprep.subr.bf16.mxu0 0
    %3110 = vmatpush1.bf16.xpose.msra.mxu0 0
    %3111 = vmatprep.subr.bf16.mxu0 0
    %3112 = vmatpush1.bf16.xpose.msra.mxu0 0
    %3113 = vmatprep.subr.bf16.mxu0 0
    %3114 = vmatpush1.bf16.xpose.msra.mxu0 0
    %3115 = vmatprep.subr.bf16.mxu0 0
    %3116 = vmatpush1.bf16.xpose.msra.mxu0 0
    %3117 = vmatprep.mubr.bf16.mxu0 0
    %3118 = vmatmul.mubr.bf16.gmra.mrb[0].mxu0 %v3080
    %v3119 = vpop.f32.mrb[0].mxu0
    %v3120 = vadd.f32 0.0, %v3119
    %v3121 = vpop.f32.mrb[0].mxu0
    %v3122 = vpop.f32.mrb[0].mxu0
    %v3123 = vpop.f32.mrb[0].mxu0
    %3124 = vdwg.mxu0
    %v3126 = vsel %vm590, %v2796, 0
    %v3129 = vsel %vm590, %v2828, 0
    %3131 = vmatprep.subr.bf16.mxu0 0
    %3132 = vmatpush1.bf16.xpose.msra.mxu0 %v3129
    %3133 = vmatprep.subr.bf16.mxu0 0
    %3134 = vmatpush1.bf16.xpose.msra.mxu0 0
    %3135 = vmatprep.subr.bf16.mxu0 0
    %3136 = vmatpush1.bf16.xpose.msra.mxu0 0
    %3137 = vmatprep.subr.bf16.mxu0 0
    %3138 = vmatpush1.bf16.xpose.msra.mxu0 0
    %3139 = vmatprep.subr.bf16.mxu0 0
    %3140 = vmatpush1.bf16.xpose.msra.mxu0 0
    %3141 = vmatprep.subr.bf16.mxu0 0
    %3142 = vmatpush1.bf16.xpose.msra.mxu0 0
    %3143 = vmatprep.subr.bf16.mxu0 0
    %3144 = vmatpush1.bf16.xpose.msra.mxu0 0
    %3145 = vmatprep.subr.bf16.mxu0 0
    %3146 = vmatpush1.bf16.xpose.msra.mxu0 0
    %3147 = vmatprep.subr.bf16.mxu0 0
    %3148 = vmatpush1.bf16.xpose.msra.mxu0 0
    %3149 = vmatprep.subr.bf16.mxu0 0
    %3150 = vmatpush1.bf16.xpose.msra.mxu0 0
    %3151 = vmatprep.subr.bf16.mxu0 0
    %3152 = vmatpush1.bf16.xpose.msra.mxu0 0
    %3153 = vmatprep.subr.bf16.mxu0 0
    %3154 = vmatpush1.bf16.xpose.msra.mxu0 0
    %3155 = vmatprep.subr.bf16.mxu0 0
    %3156 = vmatpush1.bf16.xpose.msra.mxu0 0
    %3157 = vmatprep.subr.bf16.mxu0 0
    %3158 = vmatpush1.bf16.xpose.msra.mxu0 0
    %3159 = vmatprep.subr.bf16.mxu0 0
    %3160 = vmatpush1.bf16.xpose.msra.mxu0 0
    %3161 = vmatprep.subr.bf16.mxu0 0
    %3162 = vmatpush1.bf16.xpose.msra.mxu0 0
    %3163 = vmatprep.mubr.bf16.mxu0 0
    %3164 = vmatmul.mubr.bf16.gmra.mrb[0].mxu0 %v3126
    %v3165 = vpop.f32.mrb[0].mxu0
    %v3166 = vadd.f32 0.0, %v3165
    %v3167 = vpop.f32.mrb[0].mxu0
    %v3168 = vpop.f32.mrb[0].mxu0
    %v3169 = vpop.f32.mrb[0].mxu0
    %3170 = vdwg.mxu0
    %v3172 = vsel %vm590, %v2798, 0
    %v3175 = vsel %vm590, %v2830, 0
    %3177 = vmatprep.subr.bf16.mxu0 0
    %3178 = vmatpush1.bf16.xpose.msra.mxu0 %v3175
    %3179 = vmatprep.subr.bf16.mxu0 0
    %3180 = vmatpush1.bf16.xpose.msra.mxu0 0
    %3181 = vmatprep.subr.bf16.mxu0 0
    %3182 = vmatpush1.bf16.xpose.msra.mxu0 0
    %3183 = vmatprep.subr.bf16.mxu0 0
    %3184 = vmatpush1.bf16.xpose.msra.mxu0 0
    %3185 = vmatprep.subr.bf16.mxu0 0
    %3186 = vmatpush1.bf16.xpose.msra.mxu0 0
    %3187 = vmatprep.subr.bf16.mxu0 0
    %3188 = vmatpush1.bf16.xpose.msra.mxu0 0
    %3189 = vmatprep.subr.bf16.mxu0 0
    %3190 = vmatpush1.bf16.xpose.msra.mxu0 0
    %3191 = vmatprep.subr.bf16.mxu0 0
    %3192 = vmatpush1.bf16.xpose.msra.mxu0 0
    %3193 = vmatprep.subr.bf16.mxu0 0
    %3194 = vmatpush1.bf16.xpose.msra.mxu0 0
    %3195 = vmatprep.subr.bf16.mxu0 0
    %3196 = vmatpush1.bf16.xpose.msra.mxu0 0
    %3197 = vmatprep.subr.bf16.mxu0 0
    %3198 = vmatpush1.bf16.xpose.msra.mxu0 0
    %3199 = vmatprep.subr.bf16.mxu0 0
    %3200 = vmatpush1.bf16.xpose.msra.mxu0 0
    %3201 = vmatprep.subr.bf16.mxu0 0
    %3202 = vmatpush1.bf16.xpose.msra.mxu0 0
    %3203 = vmatprep.subr.bf16.mxu0 0
    %3204 = vmatpush1.bf16.xpose.msra.mxu0 0
    %3205 = vmatprep.subr.bf16.mxu0 0
    %3206 = vmatpush1.bf16.xpose.msra.mxu0 0
    %3207 = vmatprep.subr.bf16.mxu0 0
    %3208 = vmatpush1.bf16.xpose.msra.mxu0 0
    %3209 = vmatprep.mubr.bf16.mxu0 0
    %3210 = vmatmul.mubr.bf16.gmra.mrb[0].mxu0 %v3172
    %v3211 = vpop.f32.mrb[0].mxu0
    %v3212 = vadd.f32 0.0, %v3211
    %v3213 = vpop.f32.mrb[0].mxu0
    %v3214 = vpop.f32.mrb[0].mxu0
    %v3215 = vpop.f32.mrb[0].mxu0
    %3216 = vdwg.mxu0
    %v3218 = vsel %vm590, %v2800, 0
    %v3221 = vsel %vm590, %v2832, 0
    %3223 = vmatprep.subr.bf16.mxu0 0
    %3224 = vmatpush1.bf16.xpose.msra.mxu0 %v3221
    %3225 = vmatprep.subr.bf16.mxu0 0
    %3226 = vmatpush1.bf16.xpose.msra.mxu0 0
    %3227 = vmatprep.subr.bf16.mxu0 0
    %3228 = vmatpush1.bf16.xpose.msra.mxu0 0
    %3229 = vmatprep.subr.bf16.mxu0 0
    %3230 = vmatpush1.bf16.xpose.msra.mxu0 0
    %3231 = vmatprep.subr.bf16.mxu0 0
    %3232 = vmatpush1.bf16.xpose.msra.mxu0 0
    %3233 = vmatprep.subr.bf16.mxu0 0
    %3234 = vmatpush1.bf16.xpose.msra.mxu0 0
    %3235 = vmatprep.subr.bf16.mxu0 0
    %3236 = vmatpush1.bf16.xpose.msra.mxu0 0
    %3237 = vmatprep.subr.bf16.mxu0 0
    %3238 = vmatpush1.bf16.xpose.msra.mxu0 0
    %3239 = vmatprep.subr.bf16.mxu0 0
    %3240 = vmatpush1.bf16.xpose.msra.mxu0 0
    %3241 = vmatprep.subr.bf16.mxu0 0
    %3242 = vmatpush1.bf16.xpose.msra.mxu0 0
    %3243 = vmatprep.subr.bf16.mxu0 0
    %3244 = vmatpush1.bf16.xpose.msra.mxu0 0
    %3245 = vmatprep.subr.bf16.mxu0 0
    %3246 = vmatpush1.bf16.xpose.msra.mxu0 0
    %3247 = vmatprep.subr.bf16.mxu0 0
    %3248 = vmatpush1.bf16.xpose.msra.mxu0 0
    %3249 = vmatprep.subr.bf16.mxu0 0
    %3250 = vmatpush1.bf16.xpose.msra.mxu0 0
    %3251 = vmatprep.subr.bf16.mxu0 0
    %3252 = vmatpush1.bf16.xpose.msra.mxu0 0
    %3253 = vmatprep.subr.bf16.mxu0 0
    %3254 = vmatpush1.bf16.xpose.msra.mxu0 0
    %3255 = vmatprep.mubr.bf16.mxu0 0
    %3256 = vmatmul.mubr.bf16.gmra.mrb[0].mxu0 %v3218
    %v3257 = vpop.f32.mrb[0].mxu0
    %v3258 = vadd.f32 0.0, %v3257
    %v3259 = vpop.f32.mrb[0].mxu0
    %v3260 = vpop.f32.mrb[0].mxu0
    %v3261 = vpop.f32.mrb[0].mxu0
    %3262 = vdwg.mxu0
    %v3264 = vsel %vm590, %v2802, 0
    %v3267 = vsel %vm590, %v2834, 0
    %3269 = vmatprep.subr.bf16.mxu0 0
    %3270 = vmatpush1.bf16.xpose.msra.mxu0 %v3267
    %3271 = vmatprep.subr.bf16.mxu0 0
    %3272 = vmatpush1.bf16.xpose.msra.mxu0 0
    %3273 = vmatprep.subr.bf16.mxu0 0
    %3274 = vmatpush1.bf16.xpose.msra.mxu0 0
    %3275 = vmatprep.subr.bf16.mxu0 0
    %3276 = vmatpush1.bf16.xpose.msra.mxu0 0
    %3277 = vmatprep.subr.bf16.mxu0 0
    %3278 = vmatpush1.bf16.xpose.msra.mxu0 0
    %3279 = vmatprep.subr.bf16.mxu0 0
    %3280 = vmatpush1.bf16.xpose.msra.mxu0 0
    %3281 = vmatprep.subr.bf16.mxu0 0
    %3282 = vmatpush1.bf16.xpose.msra.mxu0 0
    %3283 = vmatprep.subr.bf16.mxu0 0
    %3284 = vmatpush1.bf16.xpose.msra.mxu0 0
    %3285 = vmatprep.subr.bf16.mxu0 0
    %3286 = vmatpush1.bf16.xpose.msra.mxu0 0
    %3287 = vmatprep.subr.bf16.mxu0 0
    %3288 = vmatpush1.bf16.xpose.msra.mxu0 0
    %3289 = vmatprep.subr.bf16.mxu0 0
    %3290 = vmatpush1.bf16.xpose.msra.mxu0 0
    %3291 = vmatprep.subr.bf16.mxu0 0
    %3292 = vmatpush1.bf16.xpose.msra.mxu0 0
    %3293 = vmatprep.subr.bf16.mxu0 0
    %3294 = vmatpush1.bf16.xpose.msra.mxu0 0
    %3295 = vmatprep.subr.bf16.mxu0 0
    %3296 = vmatpush1.bf16.xpose.msra.mxu0 0
    %3297 = vmatprep.subr.bf16.mxu0 0
    %3298 = vmatpush1.bf16.xpose.msra.mxu0 0
    %3299 = vmatprep.subr.bf16.mxu0 0
    %3300 = vmatpush1.bf16.xpose.msra.mxu0 0
    %3301 = vmatprep.mubr.bf16.mxu0 0
    %3302 = vmatmul.mubr.bf16.gmra.mrb[0].mxu0 %v3264
    %v3303 = vpop.f32.mrb[0].mxu0
    %v3304 = vadd.f32 0.0, %v3303
    %v3305 = vpop.f32.mrb[0].mxu0
    %v3306 = vpop.f32.mrb[0].mxu0
    %v3307 = vpop.f32.mrb[0].mxu0
    %3308 = vdwg.mxu0
    %v3310 = vsel %vm590, %v2804, 0
    %v3313 = vsel %vm590, %v2836, 0
    %3315 = vmatprep.subr.bf16.mxu0 0
    %3316 = vmatpush1.bf16.xpose.msra.mxu0 %v3313
    %3317 = vmatprep.subr.bf16.mxu0 0
    %3318 = vmatpush1.bf16.xpose.msra.mxu0 0
    %3319 = vmatprep.subr.bf16.mxu0 0
    %3320 = vmatpush1.bf16.xpose.msra.mxu0 0
    %3321 = vmatprep.subr.bf16.mxu0 0
    %3322 = vmatpush1.bf16.xpose.msra.mxu0 0
    %3323 = vmatprep.subr.bf16.mxu0 0
    %3324 = vmatpush1.bf16.xpose.msra.mxu0 0
    %3325 = vmatprep.subr.bf16.mxu0 0
    %3326 = vmatpush1.bf16.xpose.msra.mxu0 0
    %3327 = vmatprep.subr.bf16.mxu0 0
    %3328 = vmatpush1.bf16.xpose.msra.mxu0 0
    %3329 = vmatprep.subr.bf16.mxu0 0
    %3330 = vmatpush1.bf16.xpose.msra.mxu0 0
    %3331 = vmatprep.subr.bf16.mxu0 0
    %3332 = vmatpush1.bf16.xpose.msra.mxu0 0
    %3333 = vmatprep.subr.bf16.mxu0 0
    %3334 = vmatpush1.bf16.xpose.msra.mxu0 0
    %3335 = vmatprep.subr.bf16.mxu0 0
    %3336 = vmatpush1.bf16.xpose.msra.mxu0 0
    %3337 = vmatprep.subr.bf16.mxu0 0
    %3338 = vmatpush1.bf16.xpose.msra.mxu0 0
    %3339 = vmatprep.subr.bf16.mxu0 0
    %3340 = vmatpush1.bf16.xpose.msra.mxu0 0
    %3341 = vmatprep.subr.bf16.mxu0 0
    %3342 = vmatpush1.bf16.xpose.msra.mxu0 0
    %3343 = vmatprep.subr.bf16.mxu0 0
    %3344 = vmatpush1.bf16.xpose.msra.mxu0 0
    %3345 = vmatprep.subr.bf16.mxu0 0
    %3346 = vmatpush1.bf16.xpose.msra.mxu0 0
    %3347 = vmatprep.mubr.bf16.mxu0 0
    %3348 = vmatmul.mubr.bf16.gmra.mrb[0].mxu0 %v3310
    %v3349 = vpop.f32.mrb[0].mxu0
    %v3350 = vadd.f32 0.0, %v3349
    %v3351 = vpop.f32.mrb[0].mxu0
    %v3352 = vpop.f32.mrb[0].mxu0
    %v3353 = vpop.f32.mrb[0].mxu0
    %3354 = vdwg.mxu0
    %v3356 = vsel %vm590, %v2806, 0
    %v3359 = vsel %vm590, %v2838, 0
    %3361 = vmatprep.subr.bf16.mxu0 0
    %3362 = vmatpush1.bf16.xpose.msra.mxu0 %v3359
    %3363 = vmatprep.subr.bf16.mxu0 0
    %3364 = vmatpush1.bf16.xpose.msra.mxu0 0
    %3365 = vmatprep.subr.bf16.mxu0 0
    %3366 = vmatpush1.bf16.xpose.msra.mxu0 0
    %3367 = vmatprep.subr.bf16.mxu0 0
    %3368 = vmatpush1.bf16.xpose.msra.mxu0 0
    %3369 = vmatprep.subr.bf16.mxu0 0
    %3370 = vmatpush1.bf16.xpose.msra.mxu0 0
    %3371 = vmatprep.subr.bf16.mxu0 0
    %3372 = vmatpush1.bf16.xpose.msra.mxu0 0
    %3373 = vmatprep.subr.bf16.mxu0 0
    %3374 = vmatpush1.bf16.xpose.msra.mxu0 0
    %3375 = vmatprep.subr.bf16.mxu0 0
    %3376 = vmatpush1.bf16.xpose.msra.mxu0 0
    %3377 = vmatprep.subr.bf16.mxu0 0
    %3378 = vmatpush1.bf16.xpose.msra.mxu0 0
    %3379 = vmatprep.subr.bf16.mxu0 0
    %3380 = vmatpush1.bf16.xpose.msra.mxu0 0
    %3381 = vmatprep.subr.bf16.mxu0 0
    %3382 = vmatpush1.bf16.xpose.msra.mxu0 0
    %3383 = vmatprep.subr.bf16.mxu0 0
    %3384 = vmatpush1.bf16.xpose.msra.mxu0 0
    %3385 = vmatprep.subr.bf16.mxu0 0
    %3386 = vmatpush1.bf16.xpose.msra.mxu0 0
    %3387 = vmatprep.subr.bf16.mxu0 0
    %3388 = vmatpush1.bf16.xpose.msra.mxu0 0
    %3389 = vmatprep.subr.bf16.mxu0 0
    %3390 = vmatpush1.bf16.xpose.msra.mxu0 0
    %3391 = vmatprep.subr.bf16.mxu0 0
    %3392 = vmatpush1.bf16.xpose.msra.mxu0 0
    %3393 = vmatprep.mubr.bf16.mxu0 0
    %3394 = vmatmul.mubr.bf16.gmra.mrb[0].mxu0 %v3356
    %v3395 = vpop.f32.mrb[0].mxu0
    %v3396 = vadd.f32 0.0, %v3395
    %v3397 = vpop.f32.mrb[0].mxu0
    %v3398 = vpop.f32.mrb[0].mxu0
    %v3399 = vpop.f32.mrb[0].mxu0
    %3400 = vdwg.mxu0
    %v3402 = vsel %vm590, %v2808, 0
    %v3405 = vsel %vm590, %v2840, 0
    %3407 = vmatprep.subr.bf16.mxu0 0
    %3408 = vmatpush1.bf16.xpose.msra.mxu0 %v3405
    %3409 = vmatprep.subr.bf16.mxu0 0
    %3410 = vmatpush1.bf16.xpose.msra.mxu0 0
    %3411 = vmatprep.subr.bf16.mxu0 0
    %3412 = vmatpush1.bf16.xpose.msra.mxu0 0
    %3413 = vmatprep.subr.bf16.mxu0 0
    %3414 = vmatpush1.bf16.xpose.msra.mxu0 0
    %3415 = vmatprep.subr.bf16.mxu0 0
    %3416 = vmatpush1.bf16.xpose.msra.mxu0 0
    %3417 = vmatprep.subr.bf16.mxu0 0
    %3418 = vmatpush1.bf16.xpose.msra.mxu0 0
    %3419 = vmatprep.subr.bf16.mxu0 0
    %3420 = vmatpush1.bf16.xpose.msra.mxu0 0
    %3421 = vmatprep.subr.bf16.mxu0 0
    %3422 = vmatpush1.bf16.xpose.msra.mxu0 0
    %3423 = vmatprep.subr.bf16.mxu0 0
    %3424 = vmatpush1.bf16.xpose.msra.mxu0 0
    %3425 = vmatprep.subr.bf16.mxu0 0
    %3426 = vmatpush1.bf16.xpose.msra.mxu0 0
    %3427 = vmatprep.subr.bf16.mxu0 0
    %3428 = vmatpush1.bf16.xpose.msra.mxu0 0
    %3429 = vmatprep.subr.bf16.mxu0 0
    %3430 = vmatpush1.bf16.xpose.msra.mxu0 0
    %3431 = vmatprep.subr.bf16.mxu0 0
    %3432 = vmatpush1.bf16.xpose.msra.mxu0 0
    %3433 = vmatprep.subr.bf16.mxu0 0
    %3434 = vmatpush1.bf16.xpose.msra.mxu0 0
    %3435 = vmatprep.subr.bf16.mxu0 0
    %3436 = vmatpush1.bf16.xpose.msra.mxu0 0
    %3437 = vmatprep.subr.bf16.mxu0 0
    %3438 = vmatpush1.bf16.xpose.msra.mxu0 0
    %3439 = vmatprep.mubr.bf16.mxu0 0
    %3440 = vmatmul.mubr.bf16.gmra.mrb[0].mxu0 %v3402
    %v3441 = vpop.f32.mrb[0].mxu0
    %v3442 = vadd.f32 0.0, %v3441
    %v3443 = vpop.f32.mrb[0].mxu0
    %v3444 = vpop.f32.mrb[0].mxu0
    %v3445 = vpop.f32.mrb[0].mxu0
    %3446 = vdwg.mxu0
    %v3448 = vsel %vm590, %v2810, 0
    %v3451 = vsel %vm590, %v2842, 0
    %3453 = vmatprep.subr.bf16.mxu0 0
    %3454 = vmatpush1.bf16.xpose.msra.mxu0 %v3451
    %3455 = vmatprep.subr.bf16.mxu0 0
    %3456 = vmatpush1.bf16.xpose.msra.mxu0 0
    %3457 = vmatprep.subr.bf16.mxu0 0
    %3458 = vmatpush1.bf16.xpose.msra.mxu0 0
    %3459 = vmatprep.subr.bf16.mxu0 0
    %3460 = vmatpush1.bf16.xpose.msra.mxu0 0
    %3461 = vmatprep.subr.bf16.mxu0 0
    %3462 = vmatpush1.bf16.xpose.msra.mxu0 0
    %3463 = vmatprep.subr.bf16.mxu0 0
    %3464 = vmatpush1.bf16.xpose.msra.mxu0 0
    %3465 = vmatprep.subr.bf16.mxu0 0
    %3466 = vmatpush1.bf16.xpose.msra.mxu0 0
    %3467 = vmatprep.subr.bf16.mxu0 0
    %3468 = vmatpush1.bf16.xpose.msra.mxu0 0
    %3469 = vmatprep.subr.bf16.mxu0 0
    %3470 = vmatpush1.bf16.xpose.msra.mxu0 0
    %3471 = vmatprep.subr.bf16.mxu0 0
    %3472 = vmatpush1.bf16.xpose.msra.mxu0 0
    %3473 = vmatprep.subr.bf16.mxu0 0
    %3474 = vmatpush1.bf16.xpose.msra.mxu0 0
    %3475 = vmatprep.subr.bf16.mxu0 0
    %3476 = vmatpush1.bf16.xpose.msra.mxu0 0
    %3477 = vmatprep.subr.bf16.mxu0 0
    %3478 = vmatpush1.bf16.xpose.msra.mxu0 0
    %3479 = vmatprep.subr.bf16.mxu0 0
    %3480 = vmatpush1.bf16.xpose.msra.mxu0 0
    %3481 = vmatprep.subr.bf16.mxu0 0
    %3482 = vmatpush1.bf16.xpose.msra.mxu0 0
    %3483 = vmatprep.subr.bf16.mxu0 0
    %3484 = vmatpush1.bf16.xpose.msra.mxu0 0
    %3485 = vmatprep.mubr.bf16.mxu0 0
    %3486 = vmatmul.mubr.bf16.gmra.mrb[0].mxu0 %v3448
    %v3487 = vpop.f32.mrb[0].mxu0
    %v3488 = vadd.f32 0.0, %v3487
    %v3489 = vpop.f32.mrb[0].mxu0
    %v3490 = vpop.f32.mrb[0].mxu0
    %v3491 = vpop.f32.mrb[0].mxu0
    %3492 = vdwg.mxu0
    %v3494 = vsel %vm590, %v2812, 0
    %v3497 = vsel %vm590, %v2844, 0
    %3499 = vmatprep.subr.bf16.mxu0 0
    %3500 = vmatpush1.bf16.xpose.msra.mxu0 %v3497
    %3501 = vmatprep.subr.bf16.mxu0 0
    %3502 = vmatpush1.bf16.xpose.msra.mxu0 0
    %3503 = vmatprep.subr.bf16.mxu0 0
    %3504 = vmatpush1.bf16.xpose.msra.mxu0 0
    %3505 = vmatprep.subr.bf16.mxu0 0
    %3506 = vmatpush1.bf16.xpose.msra.mxu0 0
    %3507 = vmatprep.subr.bf16.mxu0 0
    %3508 = vmatpush1.bf16.xpose.msra.mxu0 0
    %3509 = vmatprep.subr.bf16.mxu0 0
    %3510 = vmatpush1.bf16.xpose.msra.mxu0 0
    %3511 = vmatprep.subr.bf16.mxu0 0
    %3512 = vmatpush1.bf16.xpose.msra.mxu0 0
    %3513 = vmatprep.subr.bf16.mxu0 0
    %3514 = vmatpush1.bf16.xpose.msra.mxu0 0
    %3515 = vmatprep.subr.bf16.mxu0 0
    %3516 = vmatpush1.bf16.xpose.msra.mxu0 0
    %3517 = vmatprep.subr.bf16.mxu0 0
    %3518 = vmatpush1.bf16.xpose.msra.mxu0 0
    %3519 = vmatprep.subr.bf16.mxu0 0
    %3520 = vmatpush1.bf16.xpose.msra.mxu0 0
    %3521 = vmatprep.subr.bf16.mxu0 0
    %3522 = vmatpush1.bf16.xpose.msra.mxu0 0
    %3523 = vmatprep.subr.bf16.mxu0 0
    %3524 = vmatpush1.bf16.xpose.msra.mxu0 0
    %3525 = vmatprep.subr.bf16.mxu0 0
    %3526 = vmatpush1.bf16.xpose.msra.mxu0 0
    %3527 = vmatprep.subr.bf16.mxu0 0
    %3528 = vmatpush1.bf16.xpose.msra.mxu0 0
    %3529 = vmatprep.subr.bf16.mxu0 0
    %3530 = vmatpush1.bf16.xpose.msra.mxu0 0
    %3531 = vmatprep.mubr.bf16.mxu0 0
    %3532 = vmatmul.mubr.bf16.gmra.mrb[0].mxu0 %v3494
    %v3533 = vpop.f32.mrb[0].mxu0
    %v3534 = vadd.f32 0.0, %v3533
    %v3535 = vpop.f32.mrb[0].mxu0
    %v3536 = vpop.f32.mrb[0].mxu0
    %v3537 = vpop.f32.mrb[0].mxu0
    %3538 = vdwg.mxu0
    %v3540 = vsel %vm590, %v2814, 0
    %v3543 = vsel %vm590, %v2846, 0
    %3545 = vmatprep.subr.bf16.mxu0 0
    %3546 = vmatpush1.bf16.xpose.msra.mxu0 %v3543
    %3547 = vmatprep.subr.bf16.mxu0 0
    %3548 = vmatpush1.bf16.xpose.msra.mxu0 0
    %3549 = vmatprep.subr.bf16.mxu0 0
    %3550 = vmatpush1.bf16.xpose.msra.mxu0 0
    %3551 = vmatprep.subr.bf16.mxu0 0
    %3552 = vmatpush1.bf16.xpose.msra.mxu0 0
    %3553 = vmatprep.subr.bf16.mxu0 0
    %3554 = vmatpush1.bf16.xpose.msra.mxu0 0
    %3555 = vmatprep.subr.bf16.mxu0 0
    %3556 = vmatpush1.bf16.xpose.msra.mxu0 0
    %3557 = vmatprep.subr.bf16.mxu0 0
    %3558 = vmatpush1.bf16.xpose.msra.mxu0 0
    %3559 = vmatprep.subr.bf16.mxu0 0
    %3560 = vmatpush1.bf16.xpose.msra.mxu0 0
    %3561 = vmatprep.subr.bf16.mxu0 0
    %3562 = vmatpush1.bf16.xpose.msra.mxu0 0
    %3563 = vmatprep.subr.bf16.mxu0 0
    %3564 = vmatpush1.bf16.xpose.msra.mxu0 0
    %3565 = vmatprep.subr.bf16.mxu0 0
    %3566 = vmatpush1.bf16.xpose.msra.mxu0 0
    %3567 = vmatprep.subr.bf16.mxu0 0
    %3568 = vmatpush1.bf16.xpose.msra.mxu0 0
    %3569 = vmatprep.subr.bf16.mxu0 0
    %3570 = vmatpush1.bf16.xpose.msra.mxu0 0
    %3571 = vmatprep.subr.bf16.mxu0 0
    %3572 = vmatpush1.bf16.xpose.msra.mxu0 0
    %3573 = vmatprep.subr.bf16.mxu0 0
    %3574 = vmatpush1.bf16.xpose.msra.mxu0 0
    %3575 = vmatprep.subr.bf16.mxu0 0
    %3576 = vmatpush1.bf16.xpose.msra.mxu0 0
    %3577 = vmatprep.mubr.bf16.mxu0 0
    %3578 = vmatmul.mubr.bf16.gmra.mrb[0].mxu0 %v3540
    %v3579 = vpop.f32.mrb[0].mxu0
    %v3580 = vadd.f32 0.0, %v3579
    %v3581 = vpop.f32.mrb[0].mxu0
    %v3582 = vpop.f32.mrb[0].mxu0
    %v3583 = vpop.f32.mrb[0].mxu0
    %3584 = vdwg.mxu0
    %v3586 = vsel %vm590, %v2816, 0
    %v3589 = vsel %vm590, %v2848, 0
    %3591 = vmatprep.subr.bf16.mxu0 0
    %3592 = vmatpush1.bf16.xpose.msra.mxu0 %v3589
    %3593 = vmatprep.subr.bf16.mxu0 0
    %3594 = vmatpush1.bf16.xpose.msra.mxu0 0
    %3595 = vmatprep.subr.bf16.mxu0 0
    %3596 = vmatpush1.bf16.xpose.msra.mxu0 0
    %3597 = vmatprep.subr.bf16.mxu0 0
    %3598 = vmatpush1.bf16.xpose.msra.mxu0 0
    %3599 = vmatprep.subr.bf16.mxu0 0
    %3600 = vmatpush1.bf16.xpose.msra.mxu0 0
    %3601 = vmatprep.subr.bf16.mxu0 0
    %3602 = vmatpush1.bf16.xpose.msra.mxu0 0
    %3603 = vmatprep.subr.bf16.mxu0 0
    %3604 = vmatpush1.bf16.xpose.msra.mxu0 0
    %3605 = vmatprep.subr.bf16.mxu0 0
    %3606 = vmatpush1.bf16.xpose.msra.mxu0 0
    %3607 = vmatprep.subr.bf16.mxu0 0
    %3608 = vmatpush1.bf16.xpose.msra.mxu0 0
    %3609 = vmatprep.subr.bf16.mxu0 0
    %3610 = vmatpush1.bf16.xpose.msra.mxu0 0
    %3611 = vmatprep.subr.bf16.mxu0 0
    %3612 = vmatpush1.bf16.xpose.msra.mxu0 0
    %3613 = vmatprep.subr.bf16.mxu0 0
    %3614 = vmatpush1.bf16.xpose.msra.mxu0 0
    %3615 = vmatprep.subr.bf16.mxu0 0
    %3616 = vmatpush1.bf16.xpose.msra.mxu0 0
    %3617 = vmatprep.subr.bf16.mxu0 0
    %3618 = vmatpush1.bf16.xpose.msra.mxu0 0
    %3619 = vmatprep.subr.bf16.mxu0 0
    %3620 = vmatpush1.bf16.xpose.msra.mxu0 0
    %3621 = vmatprep.subr.bf16.mxu0 0
    %3622 = vmatpush1.bf16.xpose.msra.mxu0 0
    %3623 = vmatprep.mubr.bf16.mxu0 0
    %3624 = vmatmul.mubr.bf16.gmra.mrb[0].mxu0 %v3586
    %v3625 = vpop.f32.mrb[0].mxu0
    %v3626 = vadd.f32 0.0, %v3625
    %v3627 = vpop.f32.mrb[0].mxu0
    %v3628 = vpop.f32.mrb[0].mxu0
    %v3629 = vpop.f32.mrb[0].mxu0
    %3630 = vdwg.mxu0
    %v3631 = vmul.f32 %v2936, 0.25
    %v3632 = vmul.f32 %v2982, 0.25
    %v3633 = vmul.f32 %v3028, 0.25
    %v3634 = vmul.f32 %v3074, 0.25
    %v3635 = vmul.f32 %v3120, 0.25
    %v3636 = vmul.f32 %v3166, 0.25
    %v3637 = vmul.f32 %v3212, 0.25
    %v3638 = vmul.f32 %v3258, 0.25
    %v3639 = vmul.f32 %v3304, 0.25
    %v3640 = vmul.f32 %v3350, 0.25
    %v3641 = vmul.f32 %v3396, 0.25
    %v3642 = vmul.f32 %v3442, 0.25
    %v3643 = vmul.f32 %v3488, 0.25
    %v3644 = vmul.f32 %v3534, 0.25
    %v3645 = vmul.f32 %v3580, 0.25
    %v3646 = vmul.f32 %v3626, 0.25
    %v3647 = vadd.f32 %v3631, %v212
    %v3648 = vadd.f32 %v3632, %v213
    %v3649 = vadd.f32 %v3633, %v212
    %v3650 = vadd.f32 %v3634, %v213
    %v3651 = vadd.f32 %v3635, %v212
    %v3652 = vadd.f32 %v3636, %v213
    %v3653 = vadd.f32 %v3637, %v212
    %v3654 = vadd.f32 %v3638, %v213
    %v3655 = vadd.f32 %v3639, %v212
    %v3656 = vadd.f32 %v3640, %v213
    %v3657 = vadd.f32 %v3641, %v212
    %v3658 = vadd.f32 %v3642, %v213
    %v3659 = vadd.f32 %v3643, %v212
    %v3660 = vadd.f32 %v3644, %v213
    %v3661 = vadd.f32 %v3645, %v212
    %v3662 = vadd.f32 %v3646, %v213
    %v3663 = vsel %vm590, %v3647, -inf
    %3664 = vmax.xlane.f32.xlu0 %v3663
    %v3665 = vpop.xlane.xlu0 %3664
    %v3666 = vsel %vm590, %v3648, -inf
    %3667 = vmax.xlane.f32.xlu0 %v3666
    %v3668 = vpop.xlane.xlu0 %3667
    %v3669 = vsel %vm590, %v3649, -inf
    %3670 = vmax.xlane.f32.xlu0 %v3669
    %v3671 = vpop.xlane.xlu0 %3670
    %v3672 = vsel %vm590, %v3650, -inf
    %3673 = vmax.xlane.f32.xlu0 %v3672
    %v3674 = vpop.xlane.xlu0 %3673
    %v3675 = vsel %vm590, %v3651, -inf
    %3676 = vmax.xlane.f32.xlu0 %v3675
    %v3677 = vpop.xlane.xlu0 %3676
    %v3678 = vsel %vm590, %v3652, -inf
    %3679 = vmax.xlane.f32.xlu0 %v3678
    %v3680 = vpop.xlane.xlu0 %3679
    %v3681 = vsel %vm590, %v3653, -inf
    %3682 = vmax.xlane.f32.xlu0 %v3681
    %v3683 = vpop.xlane.xlu0 %3682
    %v3684 = vsel %vm590, %v3654, -inf
    %3685 = vmax.xlane.f32.xlu0 %v3684
    %v3686 = vpop.xlane.xlu0 %3685
    %v3687 = vsel %vm590, %v3655, -inf
    %3688 = vmax.xlane.f32.xlu0 %v3687
    %v3689 = vpop.xlane.xlu0 %3688
    %v3690 = vsel %vm590, %v3656, -inf
    %3691 = vmax.xlane.f32.xlu0 %v3690
    %v3692 = vpop.xlane.xlu0 %3691
    %v3693 = vsel %vm590, %v3657, -inf
    %3694 = vmax.xlane.f32.xlu0 %v3693
    %v3695 = vpop.xlane.xlu0 %3694
    %v3696 = vsel %vm590, %v3658, -inf
    %3697 = vmax.xlane.f32.xlu0 %v3696
    %v3698 = vpop.xlane.xlu0 %3697
    %v3699 = vsel %vm590, %v3659, -inf
    %3700 = vmax.xlane.f32.xlu0 %v3699
    %v3701 = vpop.xlane.xlu0 %3700
    %v3702 = vsel %vm590, %v3660, -inf
    %3703 = vmax.xlane.f32.xlu0 %v3702
    %v3704 = vpop.xlane.xlu0 %3703
    %v3705 = vsel %vm590, %v3661, -inf
    %3706 = vmax.xlane.f32.xlu0 %v3705
    %v3707 = vpop.xlane.xlu0 %3706
    %v3708 = vsel %vm590, %v3662, -inf
    %3709 = vmax.xlane.f32.xlu0 %v3708
    %v3710 = vpop.xlane.xlu0 %3709
    %v3711 = vsub.f32 %v3647, %v3665
    %v3712 = vsub.f32 %v3648, %v3668
    %v3713 = vsub.f32 %v3649, %v3671
    %v3714 = vsub.f32 %v3650, %v3674
    %v3715 = vsub.f32 %v3651, %v3677
    %v3716 = vsub.f32 %v3652, %v3680
    %v3717 = vsub.f32 %v3653, %v3683
    %v3718 = vsub.f32 %v3654, %v3686
    %v3719 = vsub.f32 %v3655, %v3689
    %v3720 = vsub.f32 %v3656, %v3692
    %v3721 = vsub.f32 %v3657, %v3695
    %v3722 = vsub.f32 %v3658, %v3698
    %v3723 = vsub.f32 %v3659, %v3701
    %v3724 = vsub.f32 %v3660, %v3704
    %v3725 = vsub.f32 %v3661, %v3707
    %v3726 = vsub.f32 %v3662, %v3710
    %v3727 = vmul.f32 %v3711, 1.442695
    %v3728 = vpow.pop %v3727
    %v3729 = vmul.f32 %v3712, 1.442695
    %v3730 = vpow.pop %v3729
    %v3731 = vmul.f32 %v3713, 1.442695
    %v3732 = vpow.pop %v3731
    %v3733 = vmul.f32 %v3714, 1.442695
    %v3734 = vpow.pop %v3733
    %v3735 = vmul.f32 %v3715, 1.442695
    %v3736 = vpow.pop %v3735
    %v3737 = vmul.f32 %v3716, 1.442695
    %v3738 = vpow.pop %v3737
    %v3739 = vmul.f32 %v3717, 1.442695
    %v3740 = vpow.pop %v3739
    %v3741 = vmul.f32 %v3718, 1.442695
    %v3742 = vpow.pop %v3741
    %v3743 = vmul.f32 %v3719, 1.442695
    %v3744 = vpow.pop %v3743
    %v3745 = vmul.f32 %v3720, 1.442695
    %v3746 = vpow.pop %v3745
    %v3747 = vmul.f32 %v3721, 1.442695
    %v3748 = vpow.pop %v3747
    %v3749 = vmul.f32 %v3722, 1.442695
    %v3750 = vpow.pop %v3749
    %v3751 = vmul.f32 %v3723, 1.442695
    %v3752 = vpow.pop %v3751
    %v3753 = vmul.f32 %v3724, 1.442695
    %v3754 = vpow.pop %v3753
    %v3755 = vmul.f32 %v3725, 1.442695
    %v3756 = vpow.pop %v3755
    %v3757 = vmul.f32 %v3726, 1.442695
    %v3758 = vpow.pop %v3757
    %v3759 = vsel %vm590, %v3728, 0.0
    %3760 = vadd.xlane.f32.xlu0 %v3759
    %v3761 = vpop.xlane.xlu0 %3760
    %v3762 = vsel %vm590, %v3730, 0.0
    %3763 = vadd.xlane.f32.xlu0 %v3762
    %v3764 = vpop.xlane.xlu0 %3763
    %v3765 = vsel %vm590, %v3732, 0.0
    %3766 = vadd.xlane.f32.xlu0 %v3765
    %v3767 = vpop.xlane.xlu0 %3766
    %v3768 = vsel %vm590, %v3734, 0.0
    %3769 = vadd.xlane.f32.xlu0 %v3768
    %v3770 = vpop.xlane.xlu0 %3769
    %v3771 = vsel %vm590, %v3736, 0.0
    %3772 = vadd.xlane.f32.xlu0 %v3771
    %v3773 = vpop.xlane.xlu0 %3772
    %v3774 = vsel %vm590, %v3738, 0.0
    %3775 = vadd.xlane.f32.xlu0 %v3774
    %v3776 = vpop.xlane.xlu0 %3775
    %v3777 = vsel %vm590, %v3740, 0.0
    %3778 = vadd.xlane.f32.xlu0 %v3777
    %v3779 = vpop.xlane.xlu0 %3778
    %v3780 = vsel %vm590, %v3742, 0.0
    %3781 = vadd.xlane.f32.xlu0 %v3780
    %v3782 = vpop.xlane.xlu0 %3781
    %v3783 = vsel %vm590, %v3744, 0.0
    %3784 = vadd.xlane.f32.xlu0 %v3783
    %v3785 = vpop.xlane.xlu0 %3784
    %v3786 = vsel %vm590, %v3746, 0.0
    %3787 = vadd.xlane.f32.xlu0 %v3786
    %v3788 = vpop.xlane.xlu0 %3787
    %v3789 = vsel %vm590, %v3748, 0.0
    %3790 = vadd.xlane.f32.xlu0 %v3789
    %v3791 = vpop.xlane.xlu0 %3790
    %v3792 = vsel %vm590, %v3750, 0.0
    %3793 = vadd.xlane.f32.xlu0 %v3792
    %v3794 = vpop.xlane.xlu0 %3793
    %v3795 = vsel %vm590, %v3752, 0.0
    %3796 = vadd.xlane.f32.xlu0 %v3795
    %v3797 = vpop.xlane.xlu0 %3796
    %v3798 = vsel %vm590, %v3754, 0.0
    %3799 = vadd.xlane.f32.xlu0 %v3798
    %v3800 = vpop.xlane.xlu0 %3799
    %v3801 = vsel %vm590, %v3756, 0.0
    %3802 = vadd.xlane.f32.xlu0 %v3801
    %v3803 = vpop.xlane.xlu0 %3802
    %v3804 = vsel %vm590, %v3758, 0.0
    %3805 = vadd.xlane.f32.xlu0 %v3804
    %v3806 = vpop.xlane.xlu0 %3805
    %v3807 = vrcp.pop %v3761
    %v3808 = vmul.f32 %v3728, %v3807
    %v3809 = vrcp.pop %v3764
    %v3810 = vmul.f32 %v3730, %v3809
    %v3811 = vrcp.pop %v3767
    %v3812 = vmul.f32 %v3732, %v3811
    %v3813 = vrcp.pop %v3770
    %v3814 = vmul.f32 %v3734, %v3813
    %v3815 = vrcp.pop %v3773
    %v3816 = vmul.f32 %v3736, %v3815
    %v3817 = vrcp.pop %v3776
    %v3818 = vmul.f32 %v3738, %v3817
    %v3819 = vrcp.pop %v3779
    %v3820 = vmul.f32 %v3740, %v3819
    %v3821 = vrcp.pop %v3782
    %v3822 = vmul.f32 %v3742, %v3821
    %v3823 = vrcp.pop %v3785
    %v3824 = vmul.f32 %v3744, %v3823
    %v3825 = vrcp.pop %v3788
    %v3826 = vmul.f32 %v3746, %v3825
    %v3827 = vrcp.pop %v3791
    %v3828 = vmul.f32 %v3748, %v3827
    %v3829 = vrcp.pop %v3794
    %v3830 = vmul.f32 %v3750, %v3829
    %v3831 = vrcp.pop %v3797
    %v3832 = vmul.f32 %v3752, %v3831
    %v3833 = vrcp.pop %v3800
    %v3834 = vmul.f32 %v3754, %v3833
    %v3835 = vrcp.pop %v3803
    %v3836 = vmul.f32 %v3756, %v3835
    %v3837 = vrcp.pop %v3806
    %v3838 = vmul.f32 %v3758, %v3837
    %v3839 = vpack.c.bf16 %v3808, %v3808
    %v3840 = vpack.c.bf16 %v3810, %v3810
    %v3841 = vpack.c.bf16 %v3812, %v3812
    %v3842 = vpack.c.bf16 %v3814, %v3814
    %v3843 = vpack.c.bf16 %v3816, %v3816
    %v3844 = vpack.c.bf16 %v3818, %v3818
    %v3845 = vpack.c.bf16 %v3820, %v3820
    %v3846 = vpack.c.bf16 %v3822, %v3822
    %v3847 = vpack.c.bf16 %v3824, %v3824
    %v3848 = vpack.c.bf16 %v3826, %v3826
    %v3849 = vpack.c.bf16 %v3828, %v3828
    %v3850 = vpack.c.bf16 %v3830, %v3830
    %v3851 = vpack.c.bf16 %v3832, %v3832
    %v3852 = vpack.c.bf16 %v3834, %v3834
    %v3853 = vpack.c.bf16 %v3836, %v3836
    %v3854 = vpack.c.bf16 %v3838, %v3838
    %v3856 = vsel %vm590, %v3839, 0
    %3858 = vmatprep.subr.bf16.mxu0 0
    %3859 = vmatpush1.bf16.msra.mxu0 %v2849
    %3860 = vmatprep.subr.bf16.mxu0 0
    %3861 = vmatpush1.bf16.msra.mxu0 0
    %3862 = vmatprep.subr.bf16.mxu0 0
    %3863 = vmatpush1.bf16.msra.mxu0 0
    %3864 = vmatprep.subr.bf16.mxu0 0
    %3865 = vmatpush1.bf16.msra.mxu0 0
    %3866 = vmatprep.subr.bf16.mxu0 0
    %3867 = vmatpush1.bf16.msra.mxu0 0
    %3868 = vmatprep.subr.bf16.mxu0 0
    %3869 = vmatpush1.bf16.msra.mxu0 0
    %3870 = vmatprep.subr.bf16.mxu0 0
    %3871 = vmatpush1.bf16.msra.mxu0 0
    %3872 = vmatprep.subr.bf16.mxu0 0
    %3873 = vmatpush1.bf16.msra.mxu0 0
    %3874 = vmatprep.subr.bf16.mxu0 0
    %3875 = vmatpush1.bf16.msra.mxu0 0
    %3876 = vmatprep.subr.bf16.mxu0 0
    %3877 = vmatpush1.bf16.msra.mxu0 0
    %3878 = vmatprep.subr.bf16.mxu0 0
    %3879 = vmatpush1.bf16.msra.mxu0 0
    %3880 = vmatprep.subr.bf16.mxu0 0
    %3881 = vmatpush1.bf16.msra.mxu0 0
    %3882 = vmatprep.subr.bf16.mxu0 0
    %3883 = vmatpush1.bf16.msra.mxu0 0
    %3884 = vmatprep.subr.bf16.mxu0 0
    %3885 = vmatpush1.bf16.msra.mxu0 0
    %3886 = vmatprep.subr.bf16.mxu0 0
    %3887 = vmatpush1.bf16.msra.mxu0 0
    %3888 = vmatprep.subr.bf16.mxu0 0
    %3889 = vmatpush1.bf16.msra.mxu0 0
    %3890 = vmatprep.mubr.bf16.mxu0 0
    %3891 = vmatmul.mubr.bf16.gmra.mrb[0].mxu0 %v3856
    %v3892 = vpop.f32.mrb[0].mxu0
    %v3893 = vadd.f32 0.0, %v3892
    %v3894 = vpop.f32.mrb[0].mxu0
    %v3895 = vpop.f32.mrb[0].mxu0
    %v3896 = vpop.f32.mrb[0].mxu0
    %3897 = vdwg.mxu0
    %v3899 = vsel %vm590, %v3840, 0
    %3901 = vmatprep.subr.bf16.mxu0 0
    %3902 = vmatpush1.bf16.msra.mxu0 %v2850
    %3903 = vmatprep.subr.bf16.mxu0 0
    %3904 = vmatpush1.bf16.msra.mxu0 0
    %3905 = vmatprep.subr.bf16.mxu0 0
    %3906 = vmatpush1.bf16.msra.mxu0 0
    %3907 = vmatprep.subr.bf16.mxu0 0
    %3908 = vmatpush1.bf16.msra.mxu0 0
    %3909 = vmatprep.subr.bf16.mxu0 0
    %3910 = vmatpush1.bf16.msra.mxu0 0
    %3911 = vmatprep.subr.bf16.mxu0 0
    %3912 = vmatpush1.bf16.msra.mxu0 0
    %3913 = vmatprep.subr.bf16.mxu0 0
    %3914 = vmatpush1.bf16.msra.mxu0 0
    %3915 = vmatprep.subr.bf16.mxu0 0
    %3916 = vmatpush1.bf16.msra.mxu0 0
    %3917 = vmatprep.subr.bf16.mxu0 0
    %3918 = vmatpush1.bf16.msra.mxu0 0
    %3919 = vmatprep.subr.bf16.mxu0 0
    %3920 = vmatpush1.bf16.msra.mxu0 0
    %3921 = vmatprep.subr.bf16.mxu0 0
    %3922 = vmatpush1.bf16.msra.mxu0 0
    %3923 = vmatprep.subr.bf16.mxu0 0
    %3924 = vmatpush1.bf16.msra.mxu0 0
    %3925 = vmatprep.subr.bf16.mxu0 0
    %3926 = vmatpush1.bf16.msra.mxu0 0
    %3927 = vmatprep.subr.bf16.mxu0 0
    %3928 = vmatpush1.bf16.msra.mxu0 0
    %3929 = vmatprep.subr.bf16.mxu0 0
    %3930 = vmatpush1.bf16.msra.mxu0 0
    %3931 = vmatprep.subr.bf16.mxu0 0
    %3932 = vmatpush1.bf16.msra.mxu0 0
    %3933 = vmatprep.mubr.bf16.mxu0 0
    %3934 = vmatmul.mubr.bf16.gmra.mrb[0].mxu0 %v3899
    %v3935 = vpop.f32.mrb[0].mxu0
    %v3936 = vadd.f32 0.0, %v3935
    %v3937 = vpop.f32.mrb[0].mxu0
    %v3938 = vpop.f32.mrb[0].mxu0
    %v3939 = vpop.f32.mrb[0].mxu0
    %3940 = vdwg.mxu0
    %v3942 = vsel %vm590, %v3841, 0
    %3944 = vmatprep.subr.bf16.mxu0 0
    %3945 = vmatpush1.bf16.msra.mxu0 %v2854
    %3946 = vmatprep.subr.bf16.mxu0 0
    %3947 = vmatpush1.bf16.msra.mxu0 0
    %3948 = vmatprep.subr.bf16.mxu0 0
    %3949 = vmatpush1.bf16.msra.mxu0 0
    %3950 = vmatprep.subr.bf16.mxu0 0
    %3951 = vmatpush1.bf16.msra.mxu0 0
    %3952 = vmatprep.subr.bf16.mxu0 0
    %3953 = vmatpush1.bf16.msra.mxu0 0
    %3954 = vmatprep.subr.bf16.mxu0 0
    %3955 = vmatpush1.bf16.msra.mxu0 0
    %3956 = vmatprep.subr.bf16.mxu0 0
    %3957 = vmatpush1.bf16.msra.mxu0 0
    %3958 = vmatprep.subr.bf16.mxu0 0
    %3959 = vmatpush1.bf16.msra.mxu0 0
    %3960 = vmatprep.subr.bf16.mxu0 0
    %3961 = vmatpush1.bf16.msra.mxu0 0
    %3962 = vmatprep.subr.bf16.mxu0 0
    %3963 = vmatpush1.bf16.msra.mxu0 0
    %3964 = vmatprep.subr.bf16.mxu0 0
    %3965 = vmatpush1.bf16.msra.mxu0 0
    %3966 = vmatprep.subr.bf16.mxu0 0
    %3967 = vmatpush1.bf16.msra.mxu0 0
    %3968 = vmatprep.subr.bf16.mxu0 0
    %3969 = vmatpush1.bf16.msra.mxu0 0
    %3970 = vmatprep.subr.bf16.mxu0 0
    %3971 = vmatpush1.bf16.msra.mxu0 0
    %3972 = vmatprep.subr.bf16.mxu0 0
    %3973 = vmatpush1.bf16.msra.mxu0 0
    %3974 = vmatprep.subr.bf16.mxu0 0
    %3975 = vmatpush1.bf16.msra.mxu0 0
    %3976 = vmatprep.mubr.bf16.mxu0 0
    %3977 = vmatmul.mubr.bf16.gmra.mrb[0].mxu0 %v3942
    %v3978 = vpop.f32.mrb[0].mxu0
    %v3979 = vadd.f32 0.0, %v3978
    %v3980 = vpop.f32.mrb[0].mxu0
    %v3981 = vpop.f32.mrb[0].mxu0
    %v3982 = vpop.f32.mrb[0].mxu0
    %3983 = vdwg.mxu0
    %v3985 = vsel %vm590, %v3842, 0
    %3987 = vmatprep.subr.bf16.mxu0 0
    %3988 = vmatpush1.bf16.msra.mxu0 %v2856
    %3989 = vmatprep.subr.bf16.mxu0 0
    %3990 = vmatpush1.bf16.msra.mxu0 0
    %3991 = vmatprep.subr.bf16.mxu0 0
    %3992 = vmatpush1.bf16.msra.mxu0 0
    %3993 = vmatprep.subr.bf16.mxu0 0
    %3994 = vmatpush1.bf16.msra.mxu0 0
    %3995 = vmatprep.subr.bf16.mxu0 0
    %3996 = vmatpush1.bf16.msra.mxu0 0
    %3997 = vmatprep.subr.bf16.mxu0 0
    %3998 = vmatpush1.bf16.msra.mxu0 0
    %3999 = vmatprep.subr.bf16.mxu0 0
    %4000 = vmatpush1.bf16.msra.mxu0 0
    %4001 = vmatprep.subr.bf16.mxu0 0
    %4002 = vmatpush1.bf16.msra.mxu0 0
    %4003 = vmatprep.subr.bf16.mxu0 0
    %4004 = vmatpush1.bf16.msra.mxu0 0
    %4005 = vmatprep.subr.bf16.mxu0 0
    %4006 = vmatpush1.bf16.msra.mxu0 0
    %4007 = vmatprep.subr.bf16.mxu0 0
    %4008 = vmatpush1.bf16.msra.mxu0 0
    %4009 = vmatprep.subr.bf16.mxu0 0
    %4010 = vmatpush1.bf16.msra.mxu0 0
    %4011 = vmatprep.subr.bf16.mxu0 0
    %4012 = vmatpush1.bf16.msra.mxu0 0
    %4013 = vmatprep.subr.bf16.mxu0 0
    %4014 = vmatpush1.bf16.msra.mxu0 0
    %4015 = vmatprep.subr.bf16.mxu0 0
    %4016 = vmatpush1.bf16.msra.mxu0 0
    %4017 = vmatprep.subr.bf16.mxu0 0
    %4018 = vmatpush1.bf16.msra.mxu0 0
    %4019 = vmatprep.mubr.bf16.mxu0 0
    %4020 = vmatmul.mubr.bf16.gmra.mrb[0].mxu0 %v3985
    %v4021 = vpop.f32.mrb[0].mxu0
    %v4022 = vadd.f32 0.0, %v4021
    %v4023 = vpop.f32.mrb[0].mxu0
    %v4024 = vpop.f32.mrb[0].mxu0
    %v4025 = vpop.f32.mrb[0].mxu0
    %4026 = vdwg.mxu0
    %v4028 = vsel %vm590, %v3843, 0
    %4030 = vmatprep.subr.bf16.mxu0 0
    %4031 = vmatpush1.bf16.msra.mxu0 %v2860
    %4032 = vmatprep.subr.bf16.mxu0 0
    %4033 = vmatpush1.bf16.msra.mxu0 0
    %4034 = vmatprep.subr.bf16.mxu0 0
    %4035 = vmatpush1.bf16.msra.mxu0 0
    %4036 = vmatprep.subr.bf16.mxu0 0
    %4037 = vmatpush1.bf16.msra.mxu0 0
    %4038 = vmatprep.subr.bf16.mxu0 0
    %4039 = vmatpush1.bf16.msra.mxu0 0
    %4040 = vmatprep.subr.bf16.mxu0 0
    %4041 = vmatpush1.bf16.msra.mxu0 0
    %4042 = vmatprep.subr.bf16.mxu0 0
    %4043 = vmatpush1.bf16.msra.mxu0 0
    %4044 = vmatprep.subr.bf16.mxu0 0
    %4045 = vmatpush1.bf16.msra.mxu0 0
    %4046 = vmatprep.subr.bf16.mxu0 0
    %4047 = vmatpush1.bf16.msra.mxu0 0
    %4048 = vmatprep.subr.bf16.mxu0 0
    %4049 = vmatpush1.bf16.msra.mxu0 0
    %4050 = vmatprep.subr.bf16.mxu0 0
    %4051 = vmatpush1.bf16.msra.mxu0 0
    %4052 = vmatprep.subr.bf16.mxu0 0
    %4053 = vmatpush1.bf16.msra.mxu0 0
    %4054 = vmatprep.subr.bf16.mxu0 0
    %4055 = vmatpush1.bf16.msra.mxu0 0
    %4056 = vmatprep.subr.bf16.mxu0 0
    %4057 = vmatpush1.bf16.msra.mxu0 0
    %4058 = vmatprep.subr.bf16.mxu0 0
    %4059 = vmatpush1.bf16.msra.mxu0 0
    %4060 = vmatprep.subr.bf16.mxu0 0
    %4061 = vmatpush1.bf16.msra.mxu0 0
    %4062 = vmatprep.mubr.bf16.mxu0 0
    %4063 = vmatmul.mubr.bf16.gmra.mrb[0].mxu0 %v4028
    %v4064 = vpop.f32.mrb[0].mxu0
    %v4065 = vadd.f32 0.0, %v4064
    %v4066 = vpop.f32.mrb[0].mxu0
    %v4067 = vpop.f32.mrb[0].mxu0
    %v4068 = vpop.f32.mrb[0].mxu0
    %4069 = vdwg.mxu0
    %v4071 = vsel %vm590, %v3844, 0
    %4073 = vmatprep.subr.bf16.mxu0 0
    %4074 = vmatpush1.bf16.msra.mxu0 %v2862
    %4075 = vmatprep.subr.bf16.mxu0 0
    %4076 = vmatpush1.bf16.msra.mxu0 0
    %4077 = vmatprep.subr.bf16.mxu0 0
    %4078 = vmatpush1.bf16.msra.mxu0 0
    %4079 = vmatprep.subr.bf16.mxu0 0
    %4080 = vmatpush1.bf16.msra.mxu0 0
    %4081 = vmatprep.subr.bf16.mxu0 0
    %4082 = vmatpush1.bf16.msra.mxu0 0
    %4083 = vmatprep.subr.bf16.mxu0 0
    %4084 = vmatpush1.bf16.msra.mxu0 0
    %4085 = vmatprep.subr.bf16.mxu0 0
    %4086 = vmatpush1.bf16.msra.mxu0 0
    %4087 = vmatprep.subr.bf16.mxu0 0
    %4088 = vmatpush1.bf16.msra.mxu0 0
    %4089 = vmatprep.subr.bf16.mxu0 0
    %4090 = vmatpush1.bf16.msra.mxu0 0
    %4091 = vmatprep.subr.bf16.mxu0 0
    %4092 = vmatpush1.bf16.msra.mxu0 0
    %4093 = vmatprep.subr.bf16.mxu0 0
    %4094 = vmatpush1.bf16.msra.mxu0 0
    %4095 = vmatprep.subr.bf16.mxu0 0
    %4096 = vmatpush1.bf16.msra.mxu0 0
    %4097 = vmatprep.subr.bf16.mxu0 0
    %4098 = vmatpush1.bf16.msra.mxu0 0
    %4099 = vmatprep.subr.bf16.mxu0 0
    %4100 = vmatpush1.bf16.msra.mxu0 0
    %4101 = vmatprep.subr.bf16.mxu0 0
    %4102 = vmatpush1.bf16.msra.mxu0 0
    %4103 = vmatprep.subr.bf16.mxu0 0
    %4104 = vmatpush1.bf16.msra.mxu0 0
    %4105 = vmatprep.mubr.bf16.mxu0 0
    %4106 = vmatmul.mubr.bf16.gmra.mrb[0].mxu0 %v4071
    %v4107 = vpop.f32.mrb[0].mxu0
    %v4108 = vadd.f32 0.0, %v4107
    %v4109 = vpop.f32.mrb[0].mxu0
    %v4110 = vpop.f32.mrb[0].mxu0
    %v4111 = vpop.f32.mrb[0].mxu0
    %4112 = vdwg.mxu0
    %v4114 = vsel %vm590, %v3845, 0
    %4116 = vmatprep.subr.bf16.mxu0 0
    %4117 = vmatpush1.bf16.msra.mxu0 %v2866
    %4118 = vmatprep.subr.bf16.mxu0 0
    %4119 = vmatpush1.bf16.msra.mxu0 0
    %4120 = vmatprep.subr.bf16.mxu0 0
    %4121 = vmatpush1.bf16.msra.mxu0 0
    %4122 = vmatprep.subr.bf16.mxu0 0
    %4123 = vmatpush1.bf16.msra.mxu0 0
    %4124 = vmatprep.subr.bf16.mxu0 0
    %4125 = vmatpush1.bf16.msra.mxu0 0
    %4126 = vmatprep.subr.bf16.mxu0 0
    %4127 = vmatpush1.bf16.msra.mxu0 0
    %4128 = vmatprep.subr.bf16.mxu0 0
    %4129 = vmatpush1.bf16.msra.mxu0 0
    %4130 = vmatprep.subr.bf16.mxu0 0
    %4131 = vmatpush1.bf16.msra.mxu0 0
    %4132 = vmatprep.subr.bf16.mxu0 0
    %4133 = vmatpush1.bf16.msra.mxu0 0
    %4134 = vmatprep.subr.bf16.mxu0 0
    %4135 = vmatpush1.bf16.msra.mxu0 0
    %4136 = vmatprep.subr.bf16.mxu0 0
    %4137 = vmatpush1.bf16.msra.mxu0 0
    %4138 = vmatprep.subr.bf16.mxu0 0
    %4139 = vmatpush1.bf16.msra.mxu0 0
    %4140 = vmatprep.subr.bf16.mxu0 0
    %4141 = vmatpush1.bf16.msra.mxu0 0
    %4142 = vmatprep.subr.bf16.mxu0 0
    %4143 = vmatpush1.bf16.msra.mxu0 0
    %4144 = vmatprep.subr.bf16.mxu0 0
    %4145 = vmatpush1.bf16.msra.mxu0 0
    %4146 = vmatprep.subr.bf16.mxu0 0
    %4147 = vmatpush1.bf16.msra.mxu0 0
    %4148 = vmatprep.mubr.bf16.mxu0 0
    %4149 = vmatmul.mubr.bf16.gmra.mrb[0].mxu0 %v4114
    %v4150 = vpop.f32.mrb[0].mxu0
    %v4151 = vadd.f32 0.0, %v4150
    %v4152 = vpop.f32.mrb[0].mxu0
    %v4153 = vpop.f32.mrb[0].mxu0
    %v4154 = vpop.f32.mrb[0].mxu0
    %4155 = vdwg.mxu0
    %v4157 = vsel %vm590, %v3846, 0
    %4159 = vmatprep.subr.bf16.mxu0 0
    %4160 = vmatpush1.bf16.msra.mxu0 %v2868
    %4161 = vmatprep.subr.bf16.mxu0 0
    %4162 = vmatpush1.bf16.msra.mxu0 0
    %4163 = vmatprep.subr.bf16.mxu0 0
    %4164 = vmatpush1.bf16.msra.mxu0 0
    %4165 = vmatprep.subr.bf16.mxu0 0
    %4166 = vmatpush1.bf16.msra.mxu0 0
    %4167 = vmatprep.subr.bf16.mxu0 0
    %4168 = vmatpush1.bf16.msra.mxu0 0
    %4169 = vmatprep.subr.bf16.mxu0 0
    %4170 = vmatpush1.bf16.msra.mxu0 0
    %4171 = vmatprep.subr.bf16.mxu0 0
    %4172 = vmatpush1.bf16.msra.mxu0 0
    %4173 = vmatprep.subr.bf16.mxu0 0
    %4174 = vmatpush1.bf16.msra.mxu0 0
    %4175 = vmatprep.subr.bf16.mxu0 0
    %4176 = vmatpush1.bf16.msra.mxu0 0
    %4177 = vmatprep.subr.bf16.mxu0 0
    %4178 = vmatpush1.bf16.msra.mxu0 0
    %4179 = vmatprep.subr.bf16.mxu0 0
    %4180 = vmatpush1.bf16.msra.mxu0 0
    %4181 = vmatprep.subr.bf16.mxu0 0
    %4182 = vmatpush1.bf16.msra.mxu0 0
    %4183 = vmatprep.subr.bf16.mxu0 0
    %4184 = vmatpush1.bf16.msra.mxu0 0
    %4185 = vmatprep.subr.bf16.mxu0 0
    %4186 = vmatpush1.bf16.msra.mxu0 0
    %4187 = vmatprep.subr.bf16.mxu0 0
    %4188 = vmatpush1.bf16.msra.mxu0 0
    %4189 = vmatprep.subr.bf16.mxu0 0
    %4190 = vmatpush1.bf16.msra.mxu0 0
    %4191 = vmatprep.mubr.bf16.mxu0 0
    %4192 = vmatmul.mubr.bf16.gmra.mrb[0].mxu0 %v4157
    %v4193 = vpop.f32.mrb[0].mxu0
    %v4194 = vadd.f32 0.0, %v4193
    %v4195 = vpop.f32.mrb[0].mxu0
    %v4196 = vpop.f32.mrb[0].mxu0
    %v4197 = vpop.f32.mrb[0].mxu0
    %4198 = vdwg.mxu0
    %v4200 = vsel %vm590, %v3847, 0
    %4202 = vmatprep.subr.bf16.mxu0 0
    %4203 = vmatpush1.bf16.msra.mxu0 %v2872
    %4204 = vmatprep.subr.bf16.mxu0 0
    %4205 = vmatpush1.bf16.msra.mxu0 0
    %4206 = vmatprep.subr.bf16.mxu0 0
    %4207 = vmatpush1.bf16.msra.mxu0 0
    %4208 = vmatprep.subr.bf16.mxu0 0
    %4209 = vmatpush1.bf16.msra.mxu0 0
    %4210 = vmatprep.subr.bf16.mxu0 0
    %4211 = vmatpush1.bf16.msra.mxu0 0
    %4212 = vmatprep.subr.bf16.mxu0 0
    %4213 = vmatpush1.bf16.msra.mxu0 0
    %4214 = vmatprep.subr.bf16.mxu0 0
    %4215 = vmatpush1.bf16.msra.mxu0 0
    %4216 = vmatprep.subr.bf16.mxu0 0
    %4217 = vmatpush1.bf16.msra.mxu0 0
    %4218 = vmatprep.subr.bf16.mxu0 0
    %4219 = vmatpush1.bf16.msra.mxu0 0
    %4220 = vmatprep.subr.bf16.mxu0 0
    %4221 = vmatpush1.bf16.msra.mxu0 0
    %4222 = vmatprep.subr.bf16.mxu0 0
    %4223 = vmatpush1.bf16.msra.mxu0 0
    %4224 = vmatprep.subr.bf16.mxu0 0
    %4225 = vmatpush1.bf16.msra.mxu0 0
    %4226 = vmatprep.subr.bf16.mxu0 0
    %4227 = vmatpush1.bf16.msra.mxu0 0
    %4228 = vmatprep.subr.bf16.mxu0 0
    %4229 = vmatpush1.bf16.msra.mxu0 0
    %4230 = vmatprep.subr.bf16.mxu0 0
    %4231 = vmatpush1.bf16.msra.mxu0 0
    %4232 = vmatprep.subr.bf16.mxu0 0
    %4233 = vmatpush1.bf16.msra.mxu0 0
    %4234 = vmatprep.mubr.bf16.mxu0 0
    %4235 = vmatmul.mubr.bf16.gmra.mrb[0].mxu0 %v4200
    %v4236 = vpop.f32.mrb[0].mxu0
    %v4237 = vadd.f32 0.0, %v4236
    %v4238 = vpop.f32.mrb[0].mxu0
    %v4239 = vpop.f32.mrb[0].mxu0
    %v4240 = vpop.f32.mrb[0].mxu0
    %4241 = vdwg.mxu0
    %v4243 = vsel %vm590, %v3848, 0
    %4245 = vmatprep.subr.bf16.mxu0 0
    %4246 = vmatpush1.bf16.msra.mxu0 %v2874
    %4247 = vmatprep.subr.bf16.mxu0 0
    %4248 = vmatpush1.bf16.msra.mxu0 0
    %4249 = vmatprep.subr.bf16.mxu0 0
    %4250 = vmatpush1.bf16.msra.mxu0 0
    %4251 = vmatprep.subr.bf16.mxu0 0
    %4252 = vmatpush1.bf16.msra.mxu0 0
    %4253 = vmatprep.subr.bf16.mxu0 0
    %4254 = vmatpush1.bf16.msra.mxu0 0
    %4255 = vmatprep.subr.bf16.mxu0 0
    %4256 = vmatpush1.bf16.msra.mxu0 0
    %4257 = vmatprep.subr.bf16.mxu0 0
    %4258 = vmatpush1.bf16.msra.mxu0 0
    %4259 = vmatprep.subr.bf16.mxu0 0
    %4260 = vmatpush1.bf16.msra.mxu0 0
    %4261 = vmatprep.subr.bf16.mxu0 0
    %4262 = vmatpush1.bf16.msra.mxu0 0
    %4263 = vmatprep.subr.bf16.mxu0 0
    %4264 = vmatpush1.bf16.msra.mxu0 0
    %4265 = vmatprep.subr.bf16.mxu0 0
    %4266 = vmatpush1.bf16.msra.mxu0 0
    %4267 = vmatprep.subr.bf16.mxu0 0
    %4268 = vmatpush1.bf16.msra.mxu0 0
    %4269 = vmatprep.subr.bf16.mxu0 0
    %4270 = vmatpush1.bf16.msra.mxu0 0
    %4271 = vmatprep.subr.bf16.mxu0 0
    %4272 = vmatpush1.bf16.msra.mxu0 0
    %4273 = vmatprep.subr.bf16.mxu0 0
    %4274 = vmatpush1.bf16.msra.mxu0 0
    %4275 = vmatprep.subr.bf16.mxu0 0
    %4276 = vmatpush1.bf16.msra.mxu0 0
    %4277 = vmatprep.mubr.bf16.mxu0 0
    %4278 = vmatmul.mubr.bf16.gmra.mrb[0].mxu0 %v4243
    %v4279 = vpop.f32.mrb[0].mxu0
    %v4280 = vadd.f32 0.0, %v4279
    %v4281 = vpop.f32.mrb[0].mxu0
    %v4282 = vpop.f32.mrb[0].mxu0
    %v4283 = vpop.f32.mrb[0].mxu0
    %4284 = vdwg.mxu0
    %v4286 = vsel %vm590, %v3849, 0
    %4288 = vmatprep.subr.bf16.mxu0 0
    %4289 = vmatpush1.bf16.msra.mxu0 %v2878
    %4290 = vmatprep.subr.bf16.mxu0 0
    %4291 = vmatpush1.bf16.msra.mxu0 0
    %4292 = vmatprep.subr.bf16.mxu0 0
    %4293 = vmatpush1.bf16.msra.mxu0 0
    %4294 = vmatprep.subr.bf16.mxu0 0
    %4295 = vmatpush1.bf16.msra.mxu0 0
    %4296 = vmatprep.subr.bf16.mxu0 0
    %4297 = vmatpush1.bf16.msra.mxu0 0
    %4298 = vmatprep.subr.bf16.mxu0 0
    %4299 = vmatpush1.bf16.msra.mxu0 0
    %4300 = vmatprep.subr.bf16.mxu0 0
    %4301 = vmatpush1.bf16.msra.mxu0 0
    %4302 = vmatprep.subr.bf16.mxu0 0
    %4303 = vmatpush1.bf16.msra.mxu0 0
    %4304 = vmatprep.subr.bf16.mxu0 0
    %4305 = vmatpush1.bf16.msra.mxu0 0
    %4306 = vmatprep.subr.bf16.mxu0 0
    %4307 = vmatpush1.bf16.msra.mxu0 0
    %4308 = vmatprep.subr.bf16.mxu0 0
    %4309 = vmatpush1.bf16.msra.mxu0 0
    %4310 = vmatprep.subr.bf16.mxu0 0
    %4311 = vmatpush1.bf16.msra.mxu0 0
    %4312 = vmatprep.subr.bf16.mxu0 0
    %4313 = vmatpush1.bf16.msra.mxu0 0
    %4314 = vmatprep.subr.bf16.mxu0 0
    %4315 = vmatpush1.bf16.msra.mxu0 0
    %4316 = vmatprep.subr.bf16.mxu0 0
    %4317 = vmatpush1.bf16.msra.mxu0 0
    %4318 = vmatprep.subr.bf16.mxu0 0
    %4319 = vmatpush1.bf16.msra.mxu0 0
    %4320 = vmatprep.mubr.bf16.mxu0 0
    %4321 = vmatmul.mubr.bf16.gmra.mrb[0].mxu0 %v4286
    %v4322 = vpop.f32.mrb[0].mxu0
    %v4323 = vadd.f32 0.0, %v4322
    %v4324 = vpop.f32.mrb[0].mxu0
    %v4325 = vpop.f32.mrb[0].mxu0
    %v4326 = vpop.f32.mrb[0].mxu0
    %4327 = vdwg.mxu0
    %v4329 = vsel %vm590, %v3850, 0
    %4331 = vmatprep.subr.bf16.mxu0 0
    %4332 = vmatpush1.bf16.msra.mxu0 %v2880
    %4333 = vmatprep.subr.bf16.mxu0 0
    %4334 = vmatpush1.bf16.msra.mxu0 0
    %4335 = vmatprep.subr.bf16.mxu0 0
    %4336 = vmatpush1.bf16.msra.mxu0 0
    %4337 = vmatprep.subr.bf16.mxu0 0
    %4338 = vmatpush1.bf16.msra.mxu0 0
    %4339 = vmatprep.subr.bf16.mxu0 0
    %4340 = vmatpush1.bf16.msra.mxu0 0
    %4341 = vmatprep.subr.bf16.mxu0 0
    %4342 = vmatpush1.bf16.msra.mxu0 0
    %4343 = vmatprep.subr.bf16.mxu0 0
    %4344 = vmatpush1.bf16.msra.mxu0 0
    %4345 = vmatprep.subr.bf16.mxu0 0
    %4346 = vmatpush1.bf16.msra.mxu0 0
    %4347 = vmatprep.subr.bf16.mxu0 0
    %4348 = vmatpush1.bf16.msra.mxu0 0
    %4349 = vmatprep.subr.bf16.mxu0 0
    %4350 = vmatpush1.bf16.msra.mxu0 0
    %4351 = vmatprep.subr.bf16.mxu0 0
    %4352 = vmatpush1.bf16.msra.mxu0 0
    %4353 = vmatprep.subr.bf16.mxu0 0
    %4354 = vmatpush1.bf16.msra.mxu0 0
    %4355 = vmatprep.subr.bf16.mxu0 0
    %4356 = vmatpush1.bf16.msra.mxu0 0
    %4357 = vmatprep.subr.bf16.mxu0 0
    %4358 = vmatpush1.bf16.msra.mxu0 0
    %4359 = vmatprep.subr.bf16.mxu0 0
    %4360 = vmatpush1.bf16.msra.mxu0 0
    %4361 = vmatprep.subr.bf16.mxu0 0
    %4362 = vmatpush1.bf16.msra.mxu0 0
    %4363 = vmatprep.mubr.bf16.mxu0 0
    %4364 = vmatmul.mubr.bf16.gmra.mrb[0].mxu0 %v4329
    %v4365 = vpop.f32.mrb[0].mxu0
    %v4366 = vadd.f32 0.0, %v4365
    %v4367 = vpop.f32.mrb[0].mxu0
    %v4368 = vpop.f32.mrb[0].mxu0
    %v4369 = vpop.f32.mrb[0].mxu0
    %4370 = vdwg.mxu0
    %v4372 = vsel %vm590, %v3851, 0
    %4374 = vmatprep.subr.bf16.mxu0 0
    %4375 = vmatpush1.bf16.msra.mxu0 %v2884
    %4376 = vmatprep.subr.bf16.mxu0 0
    %4377 = vmatpush1.bf16.msra.mxu0 0
    %4378 = vmatprep.subr.bf16.mxu0 0
    %4379 = vmatpush1.bf16.msra.mxu0 0
    %4380 = vmatprep.subr.bf16.mxu0 0
    %4381 = vmatpush1.bf16.msra.mxu0 0
    %4382 = vmatprep.subr.bf16.mxu0 0
    %4383 = vmatpush1.bf16.msra.mxu0 0
    %4384 = vmatprep.subr.bf16.mxu0 0
    %4385 = vmatpush1.bf16.msra.mxu0 0
    %4386 = vmatprep.subr.bf16.mxu0 0
    %4387 = vmatpush1.bf16.msra.mxu0 0
    %4388 = vmatprep.subr.bf16.mxu0 0
    %4389 = vmatpush1.bf16.msra.mxu0 0
    %4390 = vmatprep.subr.bf16.mxu0 0
    %4391 = vmatpush1.bf16.msra.mxu0 0
    %4392 = vmatprep.subr.bf16.mxu0 0
    %4393 = vmatpush1.bf16.msra.mxu0 0
    %4394 = vmatprep.subr.bf16.mxu0 0
    %4395 = vmatpush1.bf16.msra.mxu0 0
    %4396 = vmatprep.subr.bf16.mxu0 0
    %4397 = vmatpush1.bf16.msra.mxu0 0
    %4398 = vmatprep.subr.bf16.mxu0 0
    %4399 = vmatpush1.bf16.msra.mxu0 0
    %4400 = vmatprep.subr.bf16.mxu0 0
    %4401 = vmatpush1.bf16.msra.mxu0 0
    %4402 = vmatprep.subr.bf16.mxu0 0
    %4403 = vmatpush1.bf16.msra.mxu0 0
    %4404 = vmatprep.subr.bf16.mxu0 0
    %4405 = vmatpush1.bf16.msra.mxu0 0
    %4406 = vmatprep.mubr.bf16.mxu0 0
    %4407 = vmatmul.mubr.bf16.gmra.mrb[0].mxu0 %v4372
    %v4408 = vpop.f32.mrb[0].mxu0
    %v4409 = vadd.f32 0.0, %v4408
    %v4410 = vpop.f32.mrb[0].mxu0
    %v4411 = vpop.f32.mrb[0].mxu0
    %v4412 = vpop.f32.mrb[0].mxu0
    %4413 = vdwg.mxu0
    %v4415 = vsel %vm590, %v3852, 0
    %4417 = vmatprep.subr.bf16.mxu0 0
    %4418 = vmatpush1.bf16.msra.mxu0 %v2886
    %4419 = vmatprep.subr.bf16.mxu0 0
    %4420 = vmatpush1.bf16.msra.mxu0 0
    %4421 = vmatprep.subr.bf16.mxu0 0
    %4422 = vmatpush1.bf16.msra.mxu0 0
    %4423 = vmatprep.subr.bf16.mxu0 0
    %4424 = vmatpush1.bf16.msra.mxu0 0
    %4425 = vmatprep.subr.bf16.mxu0 0
    %4426 = vmatpush1.bf16.msra.mxu0 0
    %4427 = vmatprep.subr.bf16.mxu0 0
    %4428 = vmatpush1.bf16.msra.mxu0 0
    %4429 = vmatprep.subr.bf16.mxu0 0
    %4430 = vmatpush1.bf16.msra.mxu0 0
    %4431 = vmatprep.subr.bf16.mxu0 0
    %4432 = vmatpush1.bf16.msra.mxu0 0
    %4433 = vmatprep.subr.bf16.mxu0 0
    %4434 = vmatpush1.bf16.msra.mxu0 0
    %4435 = vmatprep.subr.bf16.mxu0 0
    %4436 = vmatpush1.bf16.msra.mxu0 0
    %4437 = vmatprep.subr.bf16.mxu0 0
    %4438 = vmatpush1.bf16.msra.mxu0 0
    %4439 = vmatprep.subr.bf16.mxu0 0
    %4440 = vmatpush1.bf16.msra.mxu0 0
    %4441 = vmatprep.subr.bf16.mxu0 0
    %4442 = vmatpush1.bf16.msra.mxu0 0
    %4443 = vmatprep.subr.bf16.mxu0 0
    %4444 = vmatpush1.bf16.msra.mxu0 0
    %4445 = vmatprep.subr.bf16.mxu0 0
    %4446 = vmatpush1.bf16.msra.mxu0 0
    %4447 = vmatprep.subr.bf16.mxu0 0
    %4448 = vmatpush1.bf16.msra.mxu0 0
    %4449 = vmatprep.mubr.bf16.mxu0 0
    %4450 = vmatmul.mubr.bf16.gmra.mrb[0].mxu0 %v4415
    %v4451 = vpop.f32.mrb[0].mxu0
    %v4452 = vadd.f32 0.0, %v4451
    %v4453 = vpop.f32.mrb[0].mxu0
    %v4454 = vpop.f32.mrb[0].mxu0
    %v4455 = vpop.f32.mrb[0].mxu0
    %4456 = vdwg.mxu0
    %v4458 = vsel %vm590, %v3853, 0
    %4460 = vmatprep.subr.bf16.mxu0 0
    %4461 = vmatpush1.bf16.msra.mxu0 %v2890
    %4462 = vmatprep.subr.bf16.mxu0 0
    %4463 = vmatpush1.bf16.msra.mxu0 0
    %4464 = vmatprep.subr.bf16.mxu0 0
    %4465 = vmatpush1.bf16.msra.mxu0 0
    %4466 = vmatprep.subr.bf16.mxu0 0
    %4467 = vmatpush1.bf16.msra.mxu0 0
    %4468 = vmatprep.subr.bf16.mxu0 0
    %4469 = vmatpush1.bf16.msra.mxu0 0
    %4470 = vmatprep.subr.bf16.mxu0 0
    %4471 = vmatpush1.bf16.msra.mxu0 0
    %4472 = vmatprep.subr.bf16.mxu0 0
    %4473 = vmatpush1.bf16.msra.mxu0 0
    %4474 = vmatprep.subr.bf16.mxu0 0
    %4475 = vmatpush1.bf16.msra.mxu0 0
    %4476 = vmatprep.subr.bf16.mxu0 0
    %4477 = vmatpush1.bf16.msra.mxu0 0
    %4478 = vmatprep.subr.bf16.mxu0 0
    %4479 = vmatpush1.bf16.msra.mxu0 0
    %4480 = vmatprep.subr.bf16.mxu0 0
    %4481 = vmatpush1.bf16.msra.mxu0 0
    %4482 = vmatprep.subr.bf16.mxu0 0
    %4483 = vmatpush1.bf16.msra.mxu0 0
    %4484 = vmatprep.subr.bf16.mxu0 0
    %4485 = vmatpush1.bf16.msra.mxu0 0
    %4486 = vmatprep.subr.bf16.mxu0 0
    %4487 = vmatpush1.bf16.msra.mxu0 0
    %4488 = vmatprep.subr.bf16.mxu0 0
    %4489 = vmatpush1.bf16.msra.mxu0 0
    %4490 = vmatprep.subr.bf16.mxu0 0
    %4491 = vmatpush1.bf16.msra.mxu0 0
    %4492 = vmatprep.mubr.bf16.mxu0 0
    %4493 = vmatmul.mubr.bf16.gmra.mrb[0].mxu0 %v4458
    %v4494 = vpop.f32.mrb[0].mxu0
    %v4495 = vadd.f32 0.0, %v4494
    %v4496 = vpop.f32.mrb[0].mxu0
    %v4497 = vpop.f32.mrb[0].mxu0
    %v4498 = vpop.f32.mrb[0].mxu0
    %4499 = vdwg.mxu0
    %v4501 = vsel %vm590, %v3854, 0
    %4503 = vmatprep.subr.bf16.mxu0 0
    %4504 = vmatpush1.bf16.msra.mxu0 %v2892
    %4505 = vmatprep.subr.bf16.mxu0 0
    %4506 = vmatpush1.bf16.msra.mxu0 0
    %4507 = vmatprep.subr.bf16.mxu0 0
    %4508 = vmatpush1.bf16.msra.mxu0 0
    %4509 = vmatprep.subr.bf16.mxu0 0
    %4510 = vmatpush1.bf16.msra.mxu0 0
    %4511 = vmatprep.subr.bf16.mxu0 0
    %4512 = vmatpush1.bf16.msra.mxu0 0
    %4513 = vmatprep.subr.bf16.mxu0 0
    %4514 = vmatpush1.bf16.msra.mxu0 0
    %4515 = vmatprep.subr.bf16.mxu0 0
    %4516 = vmatpush1.bf16.msra.mxu0 0
    %4517 = vmatprep.subr.bf16.mxu0 0
    %4518 = vmatpush1.bf16.msra.mxu0 0
    %4519 = vmatprep.subr.bf16.mxu0 0
    %4520 = vmatpush1.bf16.msra.mxu0 0
    %4521 = vmatprep.subr.bf16.mxu0 0
    %4522 = vmatpush1.bf16.msra.mxu0 0
    %4523 = vmatprep.subr.bf16.mxu0 0
    %4524 = vmatpush1.bf16.msra.mxu0 0
    %4525 = vmatprep.subr.bf16.mxu0 0
    %4526 = vmatpush1.bf16.msra.mxu0 0
    %4527 = vmatprep.subr.bf16.mxu0 0
    %4528 = vmatpush1.bf16.msra.mxu0 0
    %4529 = vmatprep.subr.bf16.mxu0 0
    %4530 = vmatpush1.bf16.msra.mxu0 0
    %4531 = vmatprep.subr.bf16.mxu0 0
    %4532 = vmatpush1.bf16.msra.mxu0 0
    %4533 = vmatprep.subr.bf16.mxu0 0
    %4534 = vmatpush1.bf16.msra.mxu0 0
    %4535 = vmatprep.mubr.bf16.mxu0 0
    %4536 = vmatmul.mubr.bf16.gmra.mrb[0].mxu0 %v4501
    %v4537 = vpop.f32.mrb[0].mxu0
    %v4538 = vadd.f32 0.0, %v4537
    %v4539 = vpop.f32.mrb[0].mxu0
    %v4540 = vpop.f32.mrb[0].mxu0
    %v4541 = vpop.f32.mrb[0].mxu0
    %4542 = vdwg.mxu0
    %4545 = vrot.lane.b32.xlu0 %v3979, 16
    %v4546 = vpop.permute.xlu0 %4545
    %4547 = vrot.lane.b32.xlu0 %v4022, 16
    %v4548 = vpop.permute.xlu0 %4547
    %4553 = vrot.lane.b32.xlu0 %v4065, 32
    %v4554 = vpop.permute.xlu0 %4553
    %4555 = vrot.lane.b32.xlu0 %v4108, 32
    %v4556 = vpop.permute.xlu0 %4555
    %4561 = vrot.lane.b32.xlu0 %v4151, 48
    %v4562 = vpop.permute.xlu0 %4561
    %4563 = vrot.lane.b32.xlu0 %v4194, 48
    %v4564 = vpop.permute.xlu0 %4563
    %4569 = vrot.lane.b32.xlu0 %v4237, 64
    %v4570 = vpop.permute.xlu0 %4569
    %4571 = vrot.lane.b32.xlu0 %v4280, 64
    %v4572 = vpop.permute.xlu0 %4571
    %4577 = vrot.lane.b32.xlu0 %v4323, 80
    %v4578 = vpop.permute.xlu0 %4577
    %4579 = vrot.lane.b32.xlu0 %v4366, 80
    %v4580 = vpop.permute.xlu0 %4579
    %4585 = vrot.lane.b32.xlu0 %v4409, 96
    %v4586 = vpop.permute.xlu0 %4585
    %4587 = vrot.lane.b32.xlu0 %v4452, 96
    %v4588 = vpop.permute.xlu0 %4587
    %4593 = vrot.lane.b32.xlu0 %v4495, 112
    %v4594 = vpop.permute.xlu0 %4593
    %4595 = vrot.lane.b32.xlu0 %v4538, 112
    %v4596 = vpop.permute.xlu0 %4595
    %v4599 = vsel %vm590, %v3893, %v4546
    %v4600 = vsel %vm590, %v3936, %v4548
    %v4601 = vsel %vm2347, %v4599, %v4554
    %v4602 = vsel %vm2347, %v4600, %v4556
    %v4603 = vsel %vm2350, %v4601, %v4562
    %v4604 = vsel %vm2350, %v4602, %v4564
    %v4605 = vsel %vm2353, %v4603, %v4570
    %v4606 = vsel %vm2353, %v4604, %v4572
    %v4607 = vsel %vm2356, %v4605, %v4578
    %v4608 = vsel %vm2356, %v4606, %v4580
    %v4609 = vsel %vm2359, %v4607, %v4586
    %v4610 = vsel %vm2359, %v4608, %v4588
    %v4611 = vsel %vm2362, %v4609, %v4594
    %v4612 = vsel %vm2362, %v4610, %v4596
    %v4613 = vpack.c.bf16 %v4612, %v4611
    %v4614 = vlaneseq
    %v4615 = vshrl.u32 %v4614, 7
    %v4616 = vsub.s32 4, %v4615
    %v4617 = vrot.slane %v214, %v4616
    %v4634 = vunpack.c.l.b16 %v2769
    %v4635 = vunpack.c.l.b16 %v2770
    %v4636 = vunpack.c.l.b16 %v2771
    %v4637 = vunpack.c.l.b16 %v2772
    %v4638 = vunpack.c.l.b16 %v2773
    %v4639 = vunpack.c.l.b16 %v2774
    %v4640 = vunpack.c.l.b16 %v2775
    %v4641 = vunpack.c.l.b16 %v2776
    %v4642 = vunpack.c.l.b16 %v2777
    %v4643 = vunpack.c.l.b16 %v2778
    %v4644 = vunpack.c.l.b16 %v2779
    %v4645 = vunpack.c.l.b16 %v2780
    %v4646 = vunpack.c.l.b16 %v2781
    %v4647 = vunpack.c.l.b16 %v2782
    %v4648 = vunpack.c.l.b16 %v2783
    %v4649 = vunpack.c.l.b16 %v2784
    %v4650 = vpack.c.b16 %v4635, %v4634
    %v4651 = vpack.c.b16 %v4637, %v4636
    %v4652 = vpack.c.b16 %v4639, %v4638
    %v4653 = vpack.c.b16 %v4641, %v4640
    %v4654 = vpack.c.b16 %v4643, %v4642
    %v4655 = vpack.c.b16 %v4645, %v4644
    %v4656 = vpack.c.b16 %v4647, %v4646
    %v4657 = vpack.c.b16 %v4649, %v4648
    %4666 = vmatprep.subr.bf16.mxu0 0
    %4667 = vmatpush1.bf16.msra.mxu0 %v4650
    %4668 = vmatprep.subr.bf16.mxu0 0
    %4669 = vmatpush1.bf16.msra.mxu0 %v4651
    %4670 = vmatprep.subr.bf16.mxu0 0
    %4671 = vmatpush1.bf16.msra.mxu0 %v4652
    %4672 = vmatprep.subr.bf16.mxu0 0
    %4673 = vmatpush1.bf16.msra.mxu0 %v4653
    %4674 = vmatprep.subr.bf16.mxu0 0
    %4675 = vmatpush1.bf16.msra.mxu0 %v4654
    %4676 = vmatprep.subr.bf16.mxu0 0
    %4677 = vmatpush1.bf16.msra.mxu0 %v4655
    %4678 = vmatprep.subr.bf16.mxu0 0
    %4679 = vmatpush1.bf16.msra.mxu0 %v4656
    %4680 = vmatprep.subr.bf16.mxu0 0
    %4681 = vmatpush1.bf16.msra.mxu0 %v4657
    %4682 = vmatprep.subr.bf16.mxu0 0
    %4683 = vmatpush1.bf16.msra.mxu0 0
    %4684 = vmatprep.subr.bf16.mxu0 0
    %4685 = vmatpush1.bf16.msra.mxu0 0
    %4686 = vmatprep.subr.bf16.mxu0 0
    %4687 = vmatpush1.bf16.msra.mxu0 0
    %4688 = vmatprep.subr.bf16.mxu0 0
    %4689 = vmatpush1.bf16.msra.mxu0 0
    %4690 = vmatprep.subr.bf16.mxu0 0
    %4691 = vmatpush1.bf16.msra.mxu0 0
    %4692 = vmatprep.subr.bf16.mxu0 0
    %4693 = vmatpush1.bf16.msra.mxu0 0
    %4694 = vmatprep.subr.bf16.mxu0 0
    %4695 = vmatpush1.bf16.msra.mxu0 0
    %4696 = vmatprep.subr.bf16.mxu0 0
    %4697 = vmatpush1.bf16.msra.mxu0 0
    %4698 = vmatprep.mubr.bf16.mxu0 0
    %4699 = vmatmul.mubr.bf16.gmra.mrb[0].mxu0 %v4613
    %v4700 = vpop.f32.mrb[0].mxu0
    %v4701 = vadd.f32 %v4617, %v4700
    %v4702 = vpop.f32.mrb[0].mxu0
    %v4703 = vpop.f32.mrb[0].mxu0
    %v4704 = vadd.f32 %v4617, %v4703
    %v4705 = vpop.f32.mrb[0].mxu0
    %4706 = vdwg.mxu0
    %v4707 = vadd.f32 %v4701, %v2494
    %v4708 = vadd.f32 %v4704, %v2495
    %4709 = vadd.xlane.f32.xlu0 %v4707
    %v4710 = vpop.xlane.xlu0 %4709
    %4711 = vadd.xlane.f32.xlu0 %v4708
    %v4712 = vpop.xlane.xlu0 %4711
    %v4713 = vmul.f32 %v4710, %v2465
    %v4714 = vmul.f32 %v4712, %v2465
    %v4715 = vsub.f32 %v4707, %v4713
    %v4716 = vsub.f32 %v4708, %v4714
    %v4717 = vmul.f32 %v4715, %v4715
    %v4718 = vmul.f32 %v4716, %v4716
    %4719 = vadd.xlane.f32.xlu0 %v4717
    %v4720 = vpop.xlane.xlu0 %4719
    %4721 = vadd.xlane.f32.xlu0 %v4718
    %v4722 = vpop.xlane.xlu0 %4721
    %v4723 = vmul.f32 %v4720, %v2465
    %v4724 = vmul.f32 %v4722, %v2465
    %v4725 = vadd.f32 %v4723, 1e-05
    %v4726 = vadd.f32 %v4724, 1e-05
    %v4727 = vrsqrt.pop %v4725
    %v4728 = vrsqrt.pop %v4726
    %v4729 = vmul.f32 %v4715, %v4727
    %v4730 = vmul.f32 %v4716, %v4728
    %v4731 = vlaneseq
    %v4732 = vshrl.u32 %v4731, 7
    %v4733 = vsub.s32 5, %v4732
    %v4734 = vrot.slane %v214, %v4733
    %v4735 = vmul.f32 %v4729, %v4734
    %v4736 = vmul.f32 %v4730, %v4734
    %v4737 = vlaneseq
    %v4738 = vshrl.u32 %v4737, 7
    %v4739 = vsub.s32 6, %v4738
    %v4740 = vrot.slane %v214, %v4739
    %v4741 = vadd.f32 %v4735, %v4740
    %v4742 = vadd.f32 %v4736, %v4740
    %v4743 = vpack.c.bf16 %v4742, %v4741
    %v4744 = vld [vmem:[#allocation16] sm:$0xff]
    %v4745 = vld [vmem:[#allocation16 + $0x8] sm:$0xff]
    %v4746 = vld [vmem:[#allocation16 + $0x10] sm:$0xff]
    %v4747 = vld [vmem:[#allocation16 + $0x18] sm:$0xff]
    %v4748 = vld [vmem:[#allocation16 + $0x20] sm:$0xff]
    %v4749 = vld [vmem:[#allocation16 + $0x28] sm:$0xff]
    %v4750 = vld [vmem:[#allocation16 + $0x30] sm:$0xff]
    %v4751 = vld [vmem:[#allocation16 + $0x38] sm:$0xff]
    %v4752 = vld [vmem:[#allocation16 + $0x40] sm:$0xff]
    %v4753 = vld [vmem:[#allocation16 + $0x48] sm:$0xff]
    %v4754 = vld [vmem:[#allocation16 + $0x50] sm:$0xff]
    %v4755 = vld [vmem:[#allocation16 + $0x58] sm:$0xff]
    %v4756 = vld [vmem:[#allocation16 + $0x60] sm:$0xff]
    %v4757 = vld [vmem:[#allocation16 + $0x68] sm:$0xff]
    %v4758 = vld [vmem:[#allocation16 + $0x70] sm:$0xff]
    %v4759 = vld [vmem:[#allocation16 + $0x78] sm:$0xff]
    %v4760 = vld [vmem:[%s13] sm:$0x3]
    %v4762 = vlaneseq
    %v4763 = vshrl.u32 %v4762, 7
    %v4764 = vsub.s32 0, %v4763
    %v4765 = vrot.slane %v4760, %v4764
    %v4766 = vlaneseq
    %v4767 = vshrl.u32 %v4766, 7
    %v4768 = vsub.s32 1, %v4767
    %v4769 = vrot.slane %v4760, %v4768
    %v4788 = vunpack.c.l.b16 %v4744
    %v4789 = vunpack.c.h.b16 %v4744
    %v4790 = vunpack.c.l.b16 %v4745
    %v4791 = vunpack.c.h.b16 %v4745
    %v4792 = vunpack.c.l.b16 %v4746
    %v4793 = vunpack.c.h.b16 %v4746
    %v4794 = vunpack.c.l.b16 %v4747
    %v4795 = vunpack.c.h.b16 %v4747
    %v4796 = vunpack.c.l.b16 %v4748
    %v4797 = vunpack.c.h.b16 %v4748
    %v4798 = vunpack.c.l.b16 %v4749
    %v4799 = vunpack.c.h.b16 %v4749
    %v4800 = vunpack.c.l.b16 %v4750
    %v4801 = vunpack.c.h.b16 %v4750
    %v4802 = vunpack.c.l.b16 %v4751
    %v4803 = vunpack.c.h.b16 %v4751
    %v4804 = vunpack.c.l.b16 %v4752
    %v4805 = vunpack.c.h.b16 %v4752
    %v4806 = vunpack.c.l.b16 %v4753
    %v4807 = vunpack.c.h.b16 %v4753
    %v4808 = vunpack.c.l.b16 %v4754
    %v4809 = vunpack.c.h.b16 %v4754
    %v4810 = vunpack.c.l.b16 %v4755
    %v4811 = vunpack.c.h.b16 %v4755
    %v4812 = vunpack.c.l.b16 %v4756
    %v4813 = vunpack.c.h.b16 %v4756
    %v4814 = vunpack.c.l.b16 %v4757
    %v4815 = vunpack.c.h.b16 %v4757
    %v4816 = vunpack.c.l.b16 %v4758
    %v4817 = vunpack.c.h.b16 %v4758
    %v4818 = vunpack.c.l.b16 %v4759
    %v4819 = vunpack.c.h.b16 %v4759
    %v4820 = vpack.c.b16 %v4790, %v4788
    %v4821 = vpack.c.b16 %v4791, %v4789
    %v4822 = vpack.c.b16 %v4794, %v4792
    %v4823 = vpack.c.b16 %v4795, %v4793
    %v4824 = vpack.c.b16 %v4798, %v4796
    %v4825 = vpack.c.b16 %v4799, %v4797
    %v4826 = vpack.c.b16 %v4802, %v4800
    %v4827 = vpack.c.b16 %v4803, %v4801
    %v4828 = vpack.c.b16 %v4806, %v4804
    %v4829 = vpack.c.b16 %v4807, %v4805
    %v4830 = vpack.c.b16 %v4810, %v4808
    %v4831 = vpack.c.b16 %v4811, %v4809
    %v4832 = vpack.c.b16 %v4814, %v4812
    %v4833 = vpack.c.b16 %v4815, %v4813
    %v4834 = vpack.c.b16 %v4818, %v4816
    %v4835 = vpack.c.b16 %v4819, %v4817
    %4852 = vmatprep.subr.bf16.mxu0 %v4821
    %4853 = vmatpush1.bf16.msra.mxu0 %v4820
    %4854 = vmatprep.subr.bf16.mxu0 %v4823
    %4855 = vmatpush1.bf16.msra.mxu0 %v4822
    %4856 = vmatprep.subr.bf16.mxu0 %v4825
    %4857 = vmatpush1.bf16.msra.mxu0 %v4824
    %4858 = vmatprep.subr.bf16.mxu0 %v4827
    %4859 = vmatpush1.bf16.msra.mxu0 %v4826
    %4860 = vmatprep.subr.bf16.mxu0 %v4829
    %4861 = vmatpush1.bf16.msra.mxu0 %v4828
    %4862 = vmatprep.subr.bf16.mxu0 %v4831
    %4863 = vmatpush1.bf16.msra.mxu0 %v4830
    %4864 = vmatprep.subr.bf16.mxu0 %v4833
    %4865 = vmatpush1.bf16.msra.mxu0 %v4832
    %4866 = vmatprep.subr.bf16.mxu0 %v4835
    %4867 = vmatpush1.bf16.msra.mxu0 %v4834
    %4868 = vmatprep.subr.bf16.mxu0 0
    %4869 = vmatpush1.bf16.msra.mxu0 0
    %4870 = vmatprep.subr.bf16.mxu0 0
    %4871 = vmatpush1.bf16.msra.mxu0 0
    %4872 = vmatprep.subr.bf16.mxu0 0
    %4873 = vmatpush1.bf16.msra.mxu0 0
    %4874 = vmatprep.subr.bf16.mxu0 0
    %4875 = vmatpush1.bf16.msra.mxu0 0
    %4876 = vmatprep.subr.bf16.mxu0 0
    %4877 = vmatpush1.bf16.msra.mxu0 0
    %4878 = vmatprep.subr.bf16.mxu0 0
    %4879 = vmatpush1.bf16.msra.mxu0 0
    %4880 = vmatprep.subr.bf16.mxu0 0
    %4881 = vmatpush1.bf16.msra.mxu0 0
    %4882 = vmatprep.subr.bf16.mxu0 0
    %4883 = vmatpush1.bf16.msra.mxu0 0
    %4884 = vmatprep.mubr.bf16.mxu0 0
    %4885 = vmatmul.mubr.bf16.gmra.mrb[0].mxu0 %v4743
    %v4886 = vpop.f32.mrb[0].mxu0
    %v4887 = vadd.f32 %v4765, %v4886
    %v4888 = vpop.f32.mrb[0].mxu0
    %v4889 = vadd.f32 %v4769, %v4888
    %v4890 = vpop.f32.mrb[0].mxu0
    %v4891 = vadd.f32 %v4765, %v4890
    %v4892 = vpop.f32.mrb[0].mxu0
    %v4893 = vadd.f32 %v4769, %v4892
    %4894 = vdwg.mxu0
    %v4895 = vmax.f32 %v4887, 0.0
    %v4896 = vmax.f32 %v4889, 0.0
    %v4897 = vmax.f32 %v4891, 0.0
    %v4898 = vmax.f32 %v4893, 0.0
    %v4899 = vpack.c.bf16 %v4897, %v4895
    %v4900 = vpack.c.bf16 %v4898, %v4896
    %v4901 = vld [vmem:[#allocation17] sm:$0xf]
    %v4902 = vld [vmem:[#allocation17 + $0x4] sm:$0xf]
    %v4903 = vld [vmem:[#allocation17 + $0x8] sm:$0xf]
    %v4904 = vld [vmem:[#allocation17 + $0xc] sm:$0xf]
    %v4905 = vld [vmem:[#allocation17 + $0x10] sm:$0xf]
    %v4906 = vld [vmem:[#allocation17 + $0x14] sm:$0xf]
    %v4907 = vld [vmem:[#allocation17 + $0x18] sm:$0xf]
    %v4908 = vld [vmem:[#allocation17 + $0x1c] sm:$0xf]
    %v4909 = vld [vmem:[#allocation17 + $0x20] sm:$0xf]
    %v4910 = vld [vmem:[#allocation17 + $0x24] sm:$0xf]
    %v4911 = vld [vmem:[#allocation17 + $0x28] sm:$0xf]
    %v4912 = vld [vmem:[#allocation17 + $0x2c] sm:$0xf]
    %v4913 = vld [vmem:[#allocation17 + $0x30] sm:$0xf]
    %v4914 = vld [vmem:[#allocation17 + $0x34] sm:$0xf]
    %v4915 = vld [vmem:[#allocation17 + $0x38] sm:$0xf]
    %v4916 = vld [vmem:[#allocation17 + $0x3c] sm:$0xf]
    %v4917 = vld [vmem:[#allocation17 + $0x40] sm:$0xf]
    %v4918 = vld [vmem:[#allocation17 + $0x44] sm:$0xf]
    %v4919 = vld [vmem:[#allocation17 + $0x48] sm:$0xf]
    %v4920 = vld [vmem:[#allocation17 + $0x4c] sm:$0xf]
    %v4921 = vld [vmem:[#allocation17 + $0x50] sm:$0xf]
    %v4922 = vld [vmem:[#allocation17 + $0x54] sm:$0xf]
    %v4923 = vld [vmem:[#allocation17 + $0x58] sm:$0xf]
    %v4924 = vld [vmem:[#allocation17 + $0x5c] sm:$0xf]
    %v4925 = vld [vmem:[#allocation17 + $0x60] sm:$0xf]
    %v4926 = vld [vmem:[#allocation17 + $0x64] sm:$0xf]
    %v4927 = vld [vmem:[#allocation17 + $0x68] sm:$0xf]
    %v4928 = vld [vmem:[#allocation17 + $0x6c] sm:$0xf]
    %v4929 = vld [vmem:[#allocation17 + $0x70] sm:$0xf]
    %v4930 = vld [vmem:[#allocation17 + $0x74] sm:$0xf]
    %v4931 = vld [vmem:[#allocation17 + $0x78] sm:$0xf]
    %v4932 = vld [vmem:[#allocation17 + $0x7c] sm:$0xf]
    %v4933 = vlaneseq
    %v4934 = vshrl.u32 %v4933, 7
    %v4935 = vsub.s32 7, %v4934
    %v4936 = vrot.slane %v214, %v4935
    %v4969 = vunpack.c.l.b16 %v4901
    %v4970 = vunpack.c.l.b16 %v4902
    %v4971 = vunpack.c.l.b16 %v4903
    %v4972 = vunpack.c.l.b16 %v4904
    %v4973 = vunpack.c.l.b16 %v4905
    %v4974 = vunpack.c.l.b16 %v4906
    %v4975 = vunpack.c.l.b16 %v4907
    %v4976 = vunpack.c.l.b16 %v4908
    %v4977 = vunpack.c.l.b16 %v4909
    %v4978 = vunpack.c.l.b16 %v4910
    %v4979 = vunpack.c.l.b16 %v4911
    %v4980 = vunpack.c.l.b16 %v4912
    %v4981 = vunpack.c.l.b16 %v4913
    %v4982 = vunpack.c.l.b16 %v4914
    %v4983 = vunpack.c.l.b16 %v4915
    %v4984 = vunpack.c.l.b16 %v4916
    %v4985 = vunpack.c.l.b16 %v4917
    %v4986 = vunpack.c.l.b16 %v4918
    %v4987 = vunpack.c.l.b16 %v4919
    %v4988 = vunpack.c.l.b16 %v4920
    %v4989 = vunpack.c.l.b16 %v4921
    %v4990 = vunpack.c.l.b16 %v4922
    %v4991 = vunpack.c.l.b16 %v4923
    %v4992 = vunpack.c.l.b16 %v4924
    %v4993 = vunpack.c.l.b16 %v4925
    %v4994 = vunpack.c.l.b16 %v4926
    %v4995 = vunpack.c.l.b16 %v4927
    %v4996 = vunpack.c.l.b16 %v4928
    %v4997 = vunpack.c.l.b16 %v4929
    %v4998 = vunpack.c.l.b16 %v4930
    %v4999 = vunpack.c.l.b16 %v4931
    %v5000 = vunpack.c.l.b16 %v4932
    %v5001 = vpack.c.b16 %v4970, %v4969
    %v5002 = vpack.c.b16 %v4972, %v4971
    %v5003 = vpack.c.b16 %v4974, %v4973
    %v5004 = vpack.c.b16 %v4976, %v4975
    %v5005 = vpack.c.b16 %v4978, %v4977
    %v5006 = vpack.c.b16 %v4980, %v4979
    %v5007 = vpack.c.b16 %v4982, %v4981
    %v5008 = vpack.c.b16 %v4984, %v4983
    %v5009 = vpack.c.b16 %v4986, %v4985
    %v5010 = vpack.c.b16 %v4988, %v4987
    %v5011 = vpack.c.b16 %v4990, %v4989
    %v5012 = vpack.c.b16 %v4992, %v4991
    %v5013 = vpack.c.b16 %v4994, %v4993
    %v5014 = vpack.c.b16 %v4996, %v4995
    %v5015 = vpack.c.b16 %v4998, %v4997
    %v5016 = vpack.c.b16 %v5000, %v4999
    %5033 = vmatprep.subr.bf16.mxu0 0
    %5034 = vmatpush1.bf16.msra.mxu0 %v5001
    %5035 = vmatprep.subr.bf16.mxu0 0
    %5036 = vmatpush1.bf16.msra.mxu0 %v5002
    %5037 = vmatprep.subr.bf16.mxu0 0
    %5038 = vmatpush1.bf16.msra.mxu0 %v5003
    %5039 = vmatprep.subr.bf16.mxu0 0
    %5040 = vmatpush1.bf16.msra.mxu0 %v5004
    %5041 = vmatprep.subr.bf16.mxu0 0
    %5042 = vmatpush1.bf16.msra.mxu0 %v5005
    %5043 = vmatprep.subr.bf16.mxu0 0
    %5044 = vmatpush1.bf16.msra.mxu0 %v5006
    %5045 = vmatprep.subr.bf16.mxu0 0
    %5046 = vmatpush1.bf16.msra.mxu0 %v5007
    %5047 = vmatprep.subr.bf16.mxu0 0
    %5048 = vmatpush1.bf16.msra.mxu0 %v5008
    %5049 = vmatprep.subr.bf16.mxu0 0
    %5050 = vmatpush1.bf16.msra.mxu0 %v5009
    %5051 = vmatprep.subr.bf16.mxu0 0
    %5052 = vmatpush1.bf16.msra.mxu0 %v5010
    %5053 = vmatprep.subr.bf16.mxu0 0
    %5054 = vmatpush1.bf16.msra.mxu0 %v5011
    %5055 = vmatprep.subr.bf16.mxu0 0
    %5056 = vmatpush1.bf16.msra.mxu0 %v5012
    %5057 = vmatprep.subr.bf16.mxu0 0
    %5058 = vmatpush1.bf16.msra.mxu0 %v5013
    %5059 = vmatprep.subr.bf16.mxu0 0
    %5060 = vmatpush1.bf16.msra.mxu0 %v5014
    %5061 = vmatprep.subr.bf16.mxu0 0
    %5062 = vmatpush1.bf16.msra.mxu0 %v5015
    %5063 = vmatprep.subr.bf16.mxu0 0
    %5064 = vmatpush1.bf16.msra.mxu0 %v5016
    %5065 = vmatprep.mubr.bf16.mxu0 %v4900
    %5066 = vmatmul.mubr.bf16.gmra.mrb[0].mxu0 %v4899
    %v5067 = vpop.f32.mrb[0].mxu0
    %v5068 = vadd.f32 %v4936, %v5067
    %v5069 = vpop.f32.mrb[0].mxu0
    %v5070 = vpop.f32.mrb[0].mxu0
    %v5071 = vadd.f32 %v4936, %v5070
    %v5072 = vpop.f32.mrb[0].mxu0
    %5073 = vdwg.mxu0
    %v5074 = vadd.f32 %v5068, %v4741
    %v5075 = vadd.f32 %v5071, %v4742
    %5076 = vadd.xlane.f32.xlu0 %v5074
    %v5077 = vpop.xlane.xlu0 %5076
    %5078 = vadd.xlane.f32.xlu0 %v5075
    %v5079 = vpop.xlane.xlu0 %5078
    %v5080 = vmul.f32 %v5077, %v2465
    %v5081 = vmul.f32 %v5079, %v2465
    %v5082 = vsub.f32 %v5074, %v5080
    %v5083 = vsub.f32 %v5075, %v5081
    %v5084 = vmul.f32 %v5082, %v5082
    %v5085 = vmul.f32 %v5083, %v5083
    %5086 = vadd.xlane.f32.xlu0 %v5084
    %v5087 = vpop.xlane.xlu0 %5086
    %5088 = vadd.xlane.f32.xlu0 %v5085
    %v5089 = vpop.xlane.xlu0 %5088
    %v5090 = vmul.f32 %v5087, %v2465
    %v5091 = vmul.f32 %v5089, %v2465
    %v5092 = vadd.f32 %v5090, 1e-05
    %v5093 = vadd.f32 %v5091, 1e-05
    %v5094 = vrsqrt.pop %v5092
    %v5095 = vrsqrt.pop %v5093
    %v5096 = vmul.f32 %v5082, %v5094
    %v5097 = vmul.f32 %v5083, %v5095
    %v5098 = vlaneseq
    %v5099 = vshrl.u32 %v5098, 7
    %v5100 = vsub.s32 0, %v5099
    %v5101 = vrot.slane %v215, %v5100
    %v5102 = vmul.f32 %v5096, %v5101
    %v5103 = vmul.f32 %v5097, %v5101
    %v5104 = vlaneseq
    %v5105 = vshrl.u32 %v5104, 7
    %v5106 = vsub.s32 1, %v5105
    %v5107 = vrot.slane %v215, %v5106
    %v5108 = vadd.f32 %v5102, %v5107
    %v5109 = vadd.f32 %v5103, %v5107
    %5110 = vst [vmem:[#allocation19] sm:$0xff] %v5108
    %5111 = vst [vmem:[#allocation19 + $0x8] sm:$0xff] %v5109
    %5112 = vst.msk [vmem:[#allocation20] sm:$0xff] %vm1359, %v1505
    %5113 = vst.msk [vmem:[#allocation20 + $0x8] sm:$0xff] %vm1359, %v1509
    %5114 = vst.msk [vmem:[#allocation20 + $0x10] sm:$0xff] %vm1359, %v1513
    %5115 = vst.msk [vmem:[#allocation20 + $0x18] sm:$0xff] %vm1359, %v1517
    %5116 = vst.msk [vmem:[#allocation20 + $0x20] sm:$0xff] %vm1359, %v1521
    %5117 = vst.msk [vmem:[#allocation20 + $0x28] sm:$0xff] %vm1359, %v1525
    %5118 = vst.msk [vmem:[#allocation20 + $0x30] sm:$0xff] %vm1359, %v1529
    %5119 = vst.msk [vmem:[#allocation20 + $0x38] sm:$0xff] %vm1359, %v1533
    %5120 = vst.msk [vmem:[#allocation20 + $0x40] sm:$0xff] %vm1359, %v1507
    %5121 = vst.msk [vmem:[#allocation20 + $0x48] sm:$0xff] %vm1359, %v1511
    %5122 = vst.msk [vmem:[#allocation20 + $0x50] sm:$0xff] %vm1359, %v1515
    %5123 = vst.msk [vmem:[#allocation20 + $0x58] sm:$0xff] %vm1359, %v1519
    %5124 = vst.msk [vmem:[#allocation20 + $0x60] sm:$0xff] %vm1359, %v1523
    %5125 = vst.msk [vmem:[#allocation20 + $0x68] sm:$0xff] %vm1359, %v1527
    %5126 = vst.msk [vmem:[#allocation20 + $0x70] sm:$0xff] %vm1359, %v1531
    %5127 = vst.msk [vmem:[#allocation20 + $0x78] sm:$0xff] %vm1359, %v1535
    %5128 = vst.msk [vmem:[#allocation22] sm:$0xff] %vm590, %v3808
    %5129 = vst.msk [vmem:[#allocation22 + $0x8] sm:$0xff] %vm590, %v3812
    %5130 = vst.msk [vmem:[#allocation22 + $0x10] sm:$0xff] %vm590, %v3816
    %5131 = vst.msk [vmem:[#allocation22 + $0x18] sm:$0xff] %vm590, %v3820
    %5132 = vst.msk [vmem:[#allocation22 + $0x20] sm:$0xff] %vm590, %v3824
    %5133 = vst.msk [vmem:[#allocation22 + $0x28] sm:$0xff] %vm590, %v3828
    %5134 = vst.msk [vmem:[#allocation22 + $0x30] sm:$0xff] %vm590, %v3832
    %5135 = vst.msk [vmem:[#allocation22 + $0x38] sm:$0xff] %vm590, %v3836
    %5136 = vst.msk [vmem:[#allocation22 + $0x40] sm:$0xff] %vm590, %v3810
    %5137 = vst.msk [vmem:[#allocation22 + $0x48] sm:$0xff] %vm590, %v3814
    %5138 = vst.msk [vmem:[#allocation22 + $0x50] sm:$0xff] %vm590, %v3818
    %5139 = vst.msk [vmem:[#allocation22 + $0x58] sm:$0xff] %vm590, %v3822
    %5140 = vst.msk [vmem:[#allocation22 + $0x60] sm:$0xff] %vm590, %v3826
    %5141 = vst.msk [vmem:[#allocation22 + $0x68] sm:$0xff] %vm590, %v3830
    %5142 = vst.msk [vmem:[#allocation22 + $0x70] sm:$0xff] %vm590, %v3834
    %5143 = vst.msk [vmem:[#allocation22 + $0x78] sm:$0xff] %vm590, %v3838
    // Predicated region
    $region102: #{tpu_custom_call.1} parent=1 // pred_check
      _
    $region103: #{tpu_custom_call.1} parent=1 // pred_check_branch
      %5145 = sbr.rel (0) target = $region105
    $region104: #{tpu_custom_call.1} parent=1 // pred_region
      %s5147 = ssub.s32 256, 256
      %5148 = vsyncadd [#allocation4], %s5147
      %s5149 = sshll.u32 [#allocation19], 4
      %s5150 = int_to_ptr.vmem [resolvable:$true] %s5149
      %5155 = dma.vmem_to_hbm [thread:$0]  %s5150, 256, %s15, [#allocation4], 128, 128, 8
    $region105: #{tpu_custom_call.1} parent=1 // pred_fallthru
      _
    // Predicated region
    $region106: #{tpu_custom_call.1} parent=1 // pred_check
      _
    $region107: #{tpu_custom_call.1} parent=1 // pred_check_branch
      %5157 = sbr.rel (0) target = $region109
    $region108: #{tpu_custom_call.1} parent=1 // pred_region
      %s5159 = ssub.s32 2048, 2048
      %5160 = vsyncadd [#allocation21], %s5159
      %s5161 = sshll.u32 [#allocation20], 4
      %s5162 = int_to_ptr.vmem [resolvable:$true] %s5161
      %5167 = dma.vmem_to_hbm [thread:$0]  %s5162, 2048, %s16, [#allocation21], 128, 128, 8
    $region109: #{tpu_custom_call.1} parent=1 // pred_fallthru
      _
    // Predicated region
    $region110: #{tpu_custom_call.1} parent=1 // pred_check
      _
    $region111: #{tpu_custom_call.1} parent=1 // pred_check_branch
      %5169 = sbr.rel (0) target = $region113
    $region112: #{tpu_custom_call.1} parent=1 // pred_region
      %s5171 = ssub.s32 2048, 2048
      %5172 = vsyncadd [#allocation21], %s5171
      %s5173 = sshll.u32 [#allocation22], 4
      %s5174 = int_to_ptr.vmem [resolvable:$true] %s5173
      %5179 = dma.vmem_to_hbm [thread:$0]  %s5174, 2048, %s17, [#allocation21], 128, 128, 8
    $region113: #{tpu_custom_call.1} parent=1 // pred_fallthru
      _
    // Predicated region
    $region114: #{tpu_custom_call.1} parent=1 // pred_check
      _
    $region115: #{tpu_custom_call.1} parent=1 // pred_check_branch
      %5181 = sbr.rel (0) target = $region117
    $region116: #{tpu_custom_call.1} parent=1 // pred_region
      %5182 = dma.done [#allocation4], 256
    $region117: #{tpu_custom_call.1} parent=1 // pred_fallthru
      _
    // Predicated region
    $region118: #{tpu_custom_call.1} parent=1 // pred_check
      _
    $region119: #{tpu_custom_call.1} parent=1 // pred_check_branch
      %5184 = sbr.rel (0) target = $region121
    $region120: #{tpu_custom_call.1} parent=1 // pred_region
      %5185 = dma.done [#allocation21], 2048
    $region121: #{tpu_custom_call.1} parent=1 // pred_fallthru
      _
    // Predicated region
    $region122: #{tpu_custom_call.1} parent=1 // pred_check
      _
    $region123: #{tpu_custom_call.1} parent=1 // pred_check_branch
      %5187 = sbr.rel (0) target = $region125
    $region124: #{tpu_custom_call.1} parent=1 // pred_region
      %5188 = dma.done [#allocation21], 2048
    $region125: #{tpu_custom_call.1} parent=1 // pred_fallthru
      _
    %5189 = vsyncpa [#allocation3], 1
    %5190 = vsyncpa [#allocation6], 1
    %5191 = vsyncpa [#allocation9], 1
    %5192 = vsyncpa [#allocation12], 1
    %5193 = vsyncpa [#allocation15], 1
    %5194 = vsyncpa [#allocation18], 1
    %5195 = vsyncpa [#allocation4], 1
    %5196 = vsyncpa [#allocation21], 1

</llo_original>
